<compile_context>
chip_gen: v6e
topology: v6e:2x2x1
jax: 0.10.0
libtpu: 0.0.40
codegen_flags: <defaults>
</compile_context>

<pallas_src>
import jax
import jax.numpy as jnp
from jax import lax
from jax.experimental import pallas as pl
from jax.experimental.pallas import tpu as pltpu


# ---------------------------------------------------------------------------
# Pallas kernels
# ---------------------------------------------------------------------------
def conv1_pool_kernel(p_ref, w_ref, b_ref, o_ref):
    """conv1 + bias + ReLU + maxpool(2,2) with batch folded into M.

    p_ref : (4, TM, 25)   4 pool-window positions x TM pooled pixels x 25-d patches
    w_ref : (25, 10), b_ref : (1, 10), o_ref : (TM, 10)
    """
    tm = p_ref.shape[1]
    # single MXU call over all 4 pool positions, then reduce-max over them.
    # max commutes with the (monotone) ReLU and the (constant) bias add.
    p = p_ref[...].reshape(4 * tm, 25)
    y = jnp.dot(p, w_ref[...], preferred_element_type=jnp.float32)
    y = y.reshape(4, tm, 10).max(axis=0)
    o_ref[...] = jnp.maximum(y + b_ref[...], 0.0)


def conv2_relu_kernel(p_ref, w_ref, b_ref, o_ref):
    """conv2 + bias + ReLU, batch folded into M.

    p_ref : (TM, 90), w_ref : (90, 20), b_ref : (1, 20), o_ref : (TM, 20)
    """
    y = jnp.dot(p_ref[...], w_ref[...], preferred_element_type=jnp.float32) + b_ref[...]
    o_ref[...] = jnp.maximum(y, 0.0)


def fc_head_kernel(x_ref, w1_ref, b1_ref, w2_ref, b2_ref, o_ref):
    """Fused fc1 + ReLU + fc2 + log_softmax.  Intermediates stay in VMEM/vregs.

    x_ref : (BT, 2000), w1_ref : (2000, 500), b1_ref : (1, 500)
    w2_ref : (500, 10),  b2_ref : (1, 10),   o_ref : (BT, 10)
    """
    h = jnp.dot(x_ref[...], w1_ref[...], preferred_element_type=jnp.float32) + b1_ref[...]
    h = jnp.maximum(h, 0.0)
    logits = jnp.dot(h, w2_ref[...], preferred_element_type=jnp.float32) + b2_ref[...]
    m = jnp.max(logits, axis=1, keepdims=True)
    lse = m + jnp.log(jnp.sum(jnp.exp(logits - m), axis=1, keepdims=True))
    o_ref[...] = logits - lse


# ---------------------------------------------------------------------------
# One-time weight prepacking (module-init analogue; removes per-call transposes)
# ---------------------------------------------------------------------------
def prepare_params(params):
    w1, b1, w2, b2, fw1, fb1, fw2, fb2 = params
    # conv1: (10,1,5,5) -> (25,10), row order kh*5 + kw
    w1m = jnp.transpose(w1[:, 0], (1, 2, 0)).reshape(25, 10)
    # conv2: (20,10,3,3) -> (90,20), row order kh*30 + kw*10 + cin
    w2m = jnp.transpose(w2, (2, 3, 1, 0)).reshape(90, 20)
    # fc1: PyTorch flattens NCHW (B,20,10,10) channel-major (c*100 + p).  Our
    # conv2 output is position-major (p*20 + c), so bake the permutation into
    # the weight rows: fw1m[p*20 + c, :] = fw1[:, c*100 + p].
    fw1m = jnp.transpose(fw1.reshape(500, 20, 100), (2, 1, 0)).reshape(2000, 500)
    fw2m = fw2.T                                   # (500, 10)
    return (w1m, b1.reshape(1, 10), w2m, b2.reshape(1, 20),
            fw1m, fb1.reshape(1, 500), fw2m, fb2.reshape(1, 10))


# ---------------------------------------------------------------------------
# Forward pass
# ---------------------------------------------------------------------------
@jax.jit
def digit_forward(x, prep):
    """x: (B, 1, 28, 28) float32 NCHW; prep: prepare_params(...) output."""
    w1m, b1r, w2m, b2r, fw1m, fb1r, fw2m, fb2r = prep
    f32 = jnp.float32
    B = x.shape[0]
    BT = min(B, 8)                       # batch elements per grid step
    Bp = ((B + BT - 1) // BT) * BT       # padded batch
    G = Bp // BT                         # grid size (parallel over batch tiles)

    xp = x.astype(f32)
    if Bp != B:
        xp = jnp.pad(xp, ((0, Bp - B), (0, 0), (0, 0), (0, 0)))

    # ---- conv1 im2col: single identity-kernel conv (exact), pool-grouped ----
    x_nhwc = jnp.transpose(xp, (0, 2, 3, 1))                     # (Bp,28,28,1)
    eye1 = jnp.eye(25, dtype=f32).reshape(5, 5, 1, 25)           # feature = kh*5+kw
    p1 = lax.conv_general_dilated(
        x_nhwc, eye1, (1, 1), "VALID",
        dimension_numbers=("NHWC", "HWIO", "NHWC"),
        precision=lax.Precision.HIGHEST)                         # (Bp,24,24,25)
    # group into 2x2 pool windows: (di, dj, b, i, j, f)
    p1 = p1.reshape(Bp, 12, 2, 12, 2, 25).transpose(2, 4, 0, 1, 3, 5)
    patches1 = p1.reshape(4, Bp * 144, 25)

    TM1 = BT * 144
    h1 = pl.pallas_call(
        conv1_pool_kernel,
        out_shape=jax.ShapeDtypeStruct((Bp * 144, 10), f32),
        grid=(G,),
        in_specs=[
            pl.BlockSpec((4, TM1, 25), lambda i: (0, i, 0)),
            pl.BlockSpec((25, 10), lambda i: (0, 0)),
            pl.BlockSpec((1, 10), lambda i: (0, 0)),
        ],
        out_specs=pl.BlockSpec((TM1, 10), lambda i: (i, 0)),
        compiler_params=pltpu.CompilerParams(dimension_semantics=("parallel",)),
    )(patches1, w1m, b1r)

    # ---- conv2 im2col: identity-kernel conv on the (tiny) pooled activations --
    h1_nhwc = h1.reshape(Bp, 12, 12, 10)
    eye2 = jnp.eye(90, dtype=f32).reshape(3, 3, 10, 90)          # feature = kh*30+kw*10+cin
    p2 = lax.conv_general_dilated(
        h1_nhwc, eye2, (1, 1), "VALID",
        dimension_numbers=("NHWC", "HWIO", "NHWC"),
        precision=lax.Precision.HIGHEST)                         # (Bp,10,10,90)
    patches2 = p2.reshape(Bp * 100, 90)

    TM2 = BT * 100
    h2 = pl.pallas_call(
        conv2_relu_kernel,
        out_shape=jax.ShapeDtypeStruct((Bp * 100, 20), f32),
        grid=(G,),
        in_specs=[
            pl.BlockSpec((TM2, 90), lambda i: (i, 0)),
            pl.BlockSpec((90, 20), lambda i: (0, 0)),
            pl.BlockSpec((1, 20), lambda i: (0, 0)),
        ],
        out_specs=pl.BlockSpec((TM2, 20), lambda i: (i, 0)),
        compiler_params=pltpu.CompilerParams(dimension_semantics=("parallel",)),
    )(patches2, w2m, b2r)

    # Position-major flatten (permutation is baked into fw1m), pure reshape.
    # TODO(synk): fusing this (BT,100,20)->(BT,2000) relayout into the conv2 or
    # fc kernel needs a general in-kernel reshape Mosaic does not cleanly
    # support, so it stays as a cheap XLA reshape between kernels.
    flat = h2.reshape(Bp, 2000)

    # ---- fused fc1 + ReLU + fc2 + log_softmax ------------------------------
    out = pl.pallas_call(
        fc_head_kernel,
        out_shape=jax.ShapeDtypeStruct((Bp, 10), f32),
        grid=(G,),
        in_specs=[
            pl.BlockSpec((BT, 2000), lambda i: (i, 0)),
            pl.BlockSpec((2000, 500), lambda i: (0, 0)),   # resident fc1 weight
            pl.BlockSpec((1, 500), lambda i: (0, 0)),
            pl.BlockSpec((500, 10), lambda i: (0, 0)),
            pl.BlockSpec((1, 10), lambda i: (0, 0)),
        ],
        out_specs=pl.BlockSpec((BT, 10), lambda i: (i, 0)),
        compiler_params=pltpu.CompilerParams(
            dimension_semantics=("parallel",),
            vmem_limit_bytes=32 * 1024 * 1024,
        ),
    )(flat, fw1m, fb1r, fw2m, fb2r)

    return out[:B]


# ---------------------------------------------------------------------------
# Pure-JAX reference (for correctness check)
# ---------------------------------------------------------------------------
def digit_reference(x, params):
    w1, b1, w2, b2, fw1, fb1, fw2, fb2 = params
    dn = ("NCHW", "OIHW", "NCHW")
    y = lax.conv_general_dilated(x, w1, (1, 1), "VALID", dimension_numbers=dn)
    y = jnp.maximum(y + b1.reshape(1, -1, 1, 1), 0.0)
    y = lax.reduce_window(y, -jnp.inf, lax.max, (1, 1, 2, 2), (1, 1, 2, 2), "VALID")
    y = lax.conv_general_dilated(y, w2, (1, 1), "VALID", dimension_numbers=dn)
    y = jnp.maximum(y + b2.reshape(1, -1, 1, 1), 0.0)
    y = y.reshape(x.shape[0], -1)
    y = jnp.maximum(y @ fw1.T + fb1, 0.0)
    y = y @ fw2.T + fb2
    return jax.nn.log_softmax(y, axis=1)


# ---------------------------------------------------------------------------
def init_params(key):
    """Deterministic parameter init (shapes from Digit.__init__, PyTorch layout)."""
    ks = jax.random.split(key, 8)

    def u(k, shape, fan_in):
        bound = 1.0 / jnp.sqrt(fan_in)
        return jax.random.uniform(k, shape, jnp.float32, -bound, bound)

    w1 = u(ks[0], (10, 1, 5, 5), 1 * 5 * 5)     # conv1.weight
    b1 = u(ks[1], (10,), 1 * 5 * 5)             # conv1.bias
    w2 = u(ks[2], (20, 10, 3, 3), 10 * 3 * 3)   # conv2.weight
    b2 = u(ks[3], (20,), 10 * 3 * 3)            # conv2.bias
    fw1 = u(ks[4], (500, 2000), 2000)           # fc1.weight
    fb1 = u(ks[5], (500,), 2000)                # fc1.bias
    fw2 = u(ks[6], (10, 500), 500)              # fc2.weight
    fb2 = u(ks[7], (10,), 500)                  # fc2.bias
    return (w1, b1, w2, b2, fw1, fb1, fw2, fb2)


if __name__ == "__main__":
    key = jax.random.PRNGKey(0)
    k_param, k_x = jax.random.split(key)
    params = init_params(k_param)
    prep = jax.tree_util.tree_map(jnp.asarray, prepare_params(params))  # one-time prepack

    B = 2
    # Input spatial size is fixed at 28x28 by fc1's 20*10*10 input dimension.
    x = jax.random.normal(k_x, (B, 1, 28, 28), jnp.float32)

    out = digit_forward(x, prep)
    out = jax.block_until_ready(out)

    ref = digit_reference(x, params)
    assert out.shape == (B, 10)
    assert jnp.allclose(out, ref, atol=1e-3, rtol=1e-3), (
        f"mismatch: max abs err {jnp.max(jnp.abs(out - ref))}"
    )
    # log_softmax sanity: rows sum to 1 in prob space
    assert jnp.allclose(jnp.sum(jnp.exp(out), axis=1), 1.0, atol=1e-4)

    print("KERNEL_OK")
</pallas_src>

<mosaic_0001>
module attributes {stable_mosaic.version = 11 : i64} {
  func.func @conv2_relu_kernel(%arg0: i32, %arg1: memref<200x90xf32, #tpu.memory_space<vmem>>, %arg2: memref<90x20xf32, #tpu.memory_space<vmem>>, %arg3: memref<1x20xf32, #tpu.memory_space<vmem>>, %arg4: memref<200x20xf32, #tpu.memory_space<vmem>>) attributes {dimension_semantics = [#tpu.dimension_semantics<parallel>], iteration_bounds = array<i64: 1>, scalar_prefetch = 0 : i64, scratch_operands = 0 : i64, tpu.core_type = #tpu.core_type<tc>, window_params = [{transform_indices = @transform_0, window_bounds = array<i64: 200, 90>}, {pipeline_mode = #tpu.pipeline_mode<synchronous>, transform_indices = @transform_1, window_bounds = array<i64: 90, 20>}, {pipeline_mode = #tpu.pipeline_mode<synchronous>, transform_indices = @transform_2, window_bounds = array<i64: 1, 20>}, {transform_indices = @transform_3, window_bounds = array<i64: 200, 20>}]} {
    %c0 = arith.constant 0 : index
    %c0_0 = arith.constant 0 : index
    %0 = vector.load %arg1[%c0, %c0_0] : memref<200x90xf32, #tpu.memory_space<vmem>>, vector<200x90xf32>
    %c0_1 = arith.constant 0 : index
    %c0_2 = arith.constant 0 : index
    %1 = vector.load %arg2[%c0_1, %c0_2] : memref<90x20xf32, #tpu.memory_space<vmem>>, vector<90x20xf32>
    %cst = arith.constant dense<0.000000e+00> : vector<200x20xf32>
    %2 = tpu.matmul %0, %1, %cst {dimension_numbers = #tpu.dot_dimension_numbers<[1], [0], [0], [1], [0, 0, 1, 1], [], []>} : vector<200x90xf32>, vector<90x20xf32>, vector<200x20xf32> -> vector<200x20xf32>
    %c0_3 = arith.constant 0 : index
    %c0_4 = arith.constant 0 : index
    %3 = vector.load %arg3[%c0_3, %c0_4] : memref<1x20xf32, #tpu.memory_space<vmem>>, vector<1x20xf32>
    %4 = vector.broadcast %3 : vector<1x20xf32> to vector<200x20xf32>
    %5 = arith.addf %2, %4 : vector<200x20xf32>
    %cst_5 = arith.constant 0.000000e+00 : f32
    %6 = vector.broadcast %cst_5 : f32 to vector<200x20xf32>
    %7 = arith.maximumf %5, %6 : vector<200x20xf32>
    %c0_6 = arith.constant 0 : index
    %c0_7 = arith.constant 0 : index
    %8 = vector.load %arg4[%c0_6, %c0_7] : memref<200x20xf32, #tpu.memory_space<vmem>>, vector<200x20xf32>
    tpu.vector_store %arg4[%c0_6, %c0_7], %7 {strides = array<i32>} : memref<200x20xf32, #tpu.memory_space<vmem>>, vector<200x20xf32>,
    return
  }
  func.func @transform_0(%arg0: i32) -> (i32, i32) {
    %c0_i32 = arith.constant 0 : i32
    %c0_i32_0 = arith.constant 0 : i32
    return %arg0, %c0_i32 : i32, i32
  }
  func.func @transform_1(%arg0: i32) -> (i32, i32) {
    %c0_i32 = arith.constant 0 : i32
    %c0_i32_0 = arith.constant 0 : i32
    %c0_i32_1 = arith.constant 0 : i32
    return %c0_i32, %c0_i32_0 : i32, i32
  }
  func.func @transform_2(%arg0: i32) -> (i32, i32) {
    %c0_i32 = arith.constant 0 : i32
    %c0_i32_0 = arith.constant 0 : i32
    %c0_i32_1 = arith.constant 0 : i32
    return %c0_i32, %c0_i32_0 : i32, i32
  }
  func.func @transform_3(%arg0: i32) -> (i32, i32) {
    %c0_i32 = arith.constant 0 : i32
    %c0_i32_0 = arith.constant 0 : i32
    return %arg0, %c0_i32 : i32, i32
  }
}

module attributes {stable_mosaic.version = 11 : i64} {
  func.func @conv1_pool_kernel(%arg0: i32, %arg1: memref<4x288x25xf32, #tpu.memory_space<vmem>>, %arg2: memref<25x10xf32, #tpu.memory_space<vmem>>, %arg3: memref<1x10xf32, #tpu.memory_space<vmem>>, %arg4: memref<288x10xf32, #tpu.memory_space<vmem>>) attributes {dimension_semantics = [#tpu.dimension_semantics<parallel>], iteration_bounds = array<i64: 1>, scalar_prefetch = 0 : i64, scratch_operands = 0 : i64, tpu.core_type = #tpu.core_type<tc>, window_params = [{transform_indices = @transform_0, window_bounds = array<i64: 4, 288, 25>}, {pipeline_mode = #tpu.pipeline_mode<synchronous>, transform_indices = @transform_1, window_bounds = array<i64: 25, 10>}, {pipeline_mode = #tpu.pipeline_mode<synchronous>, transform_indices = @transform_2, window_bounds = array<i64: 1, 10>}, {transform_indices = @transform_3, window_bounds = array<i64: 288, 10>}]} {
    %c0 = arith.constant 0 : index
    %c0_0 = arith.constant 0 : index
    %c0_1 = arith.constant 0 : index
    %0 = vector.load %arg1[%c0, %c0_0, %c0_1] : memref<4x288x25xf32, #tpu.memory_space<vmem>>, vector<4x288x25xf32>
    %1 = vector.shape_cast %0 : vector<4x288x25xf32> to vector<1152x25xf32>
    %c0_2 = arith.constant 0 : index
    %c0_3 = arith.constant 0 : index
    %2 = vector.load %arg2[%c0_2, %c0_3] : memref<25x10xf32, #tpu.memory_space<vmem>>, vector<25x10xf32>
    %cst = arith.constant dense<0.000000e+00> : vector<1152x10xf32>
    %3 = tpu.matmul %1, %2, %cst {dimension_numbers = #tpu.dot_dimension_numbers<[1], [0], [0], [1], [0, 0, 1, 1], [], []>} : vector<1152x25xf32>, vector<25x10xf32>, vector<1152x10xf32> -> vector<1152x10xf32>
    %4 = vector.shape_cast %3 : vector<1152x10xf32> to vector<4x288x10xf32>
    %cst_4 = arith.constant dense<0xFF800000> : vector<288x10xf32>
    %5 = vector.multi_reduction <maximumf>, %4, %cst_4 [0] : vector<4x288x10xf32> to vector<288x10xf32>
    %c0_5 = arith.constant 0 : index
    %c0_6 = arith.constant 0 : index
    %6 = vector.load %arg3[%c0_5, %c0_6] : memref<1x10xf32, #tpu.memory_space<vmem>>, vector<1x10xf32>
    %7 = vector.broadcast %6 : vector<1x10xf32> to vector<288x10xf32>
    %8 = arith.addf %5, %7 : vector<288x10xf32>
    %cst_7 = arith.constant 0.000000e+00 : f32
    %9 = vector.broadcast %cst_7 : f32 to vector<288x10xf32>
    %10 = arith.maximumf %8, %9 : vector<288x10xf32>
    %c0_8 = arith.constant 0 : index
    %c0_9 = arith.constant 0 : index
    %11 = vector.load %arg4[%c0_8, %c0_9] : memref<288x10xf32, #tpu.memory_space<vmem>>, vector<288x10xf32>
    tpu.vector_store %arg4[%c0_8, %c0_9], %10 {strides = array<i32>} : memref<288x10xf32, #tpu.memory_space<vmem>>, vector<288x10xf32>,
    return
  }
  func.func @transform_0(%arg0: i32) -> (i32, i32, i32) {
    %c0_i32 = arith.constant 0 : i32
    %c0_i32_0 = arith.constant 0 : i32
    %c0_i32_1 = arith.constant 0 : i32
    return %c0_i32, %arg0, %c0_i32_0 : i32, i32, i32
  }
  func.func @transform_1(%arg0: i32) -> (i32, i32) {
    %c0_i32 = arith.constant 0 : i32
    %c0_i32_0 = arith.constant 0 : i32
    %c0_i32_1 = arith.constant 0 : i32
    return %c0_i32, %c0_i32_0 : i32, i32
  }
  func.func @transform_2(%arg0: i32) -> (i32, i32) {
    %c0_i32 = arith.constant 0 : i32
    %c0_i32_0 = arith.constant 0 : i32
    %c0_i32_1 = arith.constant 0 : i32
    return %c0_i32, %c0_i32_0 : i32, i32
  }
  func.func @transform_3(%arg0: i32) -> (i32, i32) {
    %c0_i32 = arith.constant 0 : i32
    %c0_i32_0 = arith.constant 0 : i32
    return %arg0, %c0_i32 : i32, i32
  }
}

module attributes {stable_mosaic.version = 11 : i64} {
  func.func @fc_head_kernel(%arg0: i32, %arg1: memref<2x2000xf32, #tpu.memory_space<vmem>>, %arg2: memref<2000x500xf32, #tpu.memory_space<vmem>>, %arg3: memref<1x500xf32, #tpu.memory_space<vmem>>, %arg4: memref<500x10xf32, #tpu.memory_space<vmem>>, %arg5: memref<1x10xf32, #tpu.memory_space<vmem>>, %arg6: memref<2x10xf32, #tpu.memory_space<vmem>>) attributes {dimension_semantics = [#tpu.dimension_semantics<parallel>], iteration_bounds = array<i64: 1>, scalar_prefetch = 0 : i64, scratch_operands = 0 : i64, tpu.core_type = #tpu.core_type<tc>, window_params = [{transform_indices = @transform_0, window_bounds = array<i64: 2, 2000>}, {pipeline_mode = #tpu.pipeline_mode<synchronous>, transform_indices = @transform_1, window_bounds = array<i64: 2000, 500>}, {pipeline_mode = #tpu.pipeline_mode<synchronous>, transform_indices = @transform_2, window_bounds = array<i64: 1, 500>}, {pipeline_mode = #tpu.pipeline_mode<synchronous>, transform_indices = @transform_3, window_bounds = array<i64: 500, 10>}, {pipeline_mode = #tpu.pipeline_mode<synchronous>, transform_indices = @transform_4, window_bounds = array<i64: 1, 10>}, {transform_indices = @transform_5, window_bounds = array<i64: 2, 10>}]} {
    %c0 = arith.constant 0 : index
    %c0_0 = arith.constant 0 : index
    %0 = vector.load %arg1[%c0, %c0_0] : memref<2x2000xf32, #tpu.memory_space<vmem>>, vector<2x2000xf32>
    %c0_1 = arith.constant 0 : index
    %c0_2 = arith.constant 0 : index
    %1 = vector.load %arg2[%c0_1, %c0_2] : memref<2000x500xf32, #tpu.memory_space<vmem>>, vector<2000x500xf32>
    %cst = arith.constant dense<0.000000e+00> : vector<2x500xf32>
    %2 = tpu.matmul %0, %1, %cst {dimension_numbers = #tpu.dot_dimension_numbers<[1], [0], [0], [1], [0, 0, 1, 1], [], []>} : vector<2x2000xf32>, vector<2000x500xf32>, vector<2x500xf32> -> vector<2x500xf32>
    %c0_3 = arith.constant 0 : index
    %c0_4 = arith.constant 0 : index
    %3 = vector.load %arg3[%c0_3, %c0_4] : memref<1x500xf32, #tpu.memory_space<vmem>>, vector<1x500xf32>
    %4 = vector.broadcast %3 : vector<1x500xf32> to vector<2x500xf32>
    %5 = arith.addf %2, %4 : vector<2x500xf32>
    %cst_5 = arith.constant 0.000000e+00 : f32
    %6 = vector.broadcast %cst_5 : f32 to vector<2x500xf32>
    %7 = arith.maximumf %5, %6 : vector<2x500xf32>
    %c0_6 = arith.constant 0 : index
    %c0_7 = arith.constant 0 : index
    %8 = vector.load %arg4[%c0_6, %c0_7] : memref<500x10xf32, #tpu.memory_space<vmem>>, vector<500x10xf32>
    %cst_8 = arith.constant dense<0.000000e+00> : vector<2x10xf32>
    %9 = tpu.matmul %7, %8, %cst_8 {dimension_numbers = #tpu.dot_dimension_numbers<[1], [0], [0], [1], [0, 0, 1, 1], [], []>} : vector<2x500xf32>, vector<500x10xf32>, vector<2x10xf32> -> vector<2x10xf32>
    %c0_9 = arith.constant 0 : index
    %c0_10 = arith.constant 0 : index
    %10 = vector.load %arg5[%c0_9, %c0_10] : memref<1x10xf32, #tpu.memory_space<vmem>>, vector<1x10xf32>
    %11 = vector.broadcast %10 : vector<1x10xf32> to vector<2x10xf32>
    %12 = arith.addf %9, %11 : vector<2x10xf32>
    %cst_11 = arith.constant dense<0xFF800000> : vector<2xf32>
    %13 = vector.multi_reduction <maximumf>, %12, %cst_11 [1] : vector<2x10xf32> to vector<2xf32>
    %14 = vector.shape_cast %13 : vector<2xf32> to vector<2x1xf32>
    %15 = vector.broadcast %14 : vector<2x1xf32> to vector<2x10xf32>
    %16 = arith.subf %12, %15 : vector<2x10xf32>
    %17 = math.exp %16 : vector<2x10xf32>
    %cst_12 = arith.constant dense<0.000000e+00> : vector<2xf32>
    %18 = vector.multi_reduction <add>, %17, %cst_12 [1] : vector<2x10xf32> to vector<2xf32>
    %19 = vector.shape_cast %18 : vector<2xf32> to vector<2x1xf32>
    %20 = math.log %19 : vector<2x1xf32>
    %21 = arith.addf %14, %20 : vector<2x1xf32>
    %22 = vector.broadcast %21 : vector<2x1xf32> to vector<2x10xf32>
    %23 = arith.subf %12, %22 : vector<2x10xf32>
    %c0_13 = arith.constant 0 : index
    %c0_14 = arith.constant 0 : index
    %24 = vector.load %arg6[%c0_13, %c0_14] : memref<2x10xf32, #tpu.memory_space<vmem>>, vector<2x10xf32>
    tpu.vector_store %arg6[%c0_13, %c0_14], %23 {strides = array<i32>} : memref<2x10xf32, #tpu.memory_space<vmem>>, vector<2x10xf32>,
    return
  }
  func.func @transform_0(%arg0: i32) -> (i32, i32) {
    %c0_i32 = arith.constant 0 : i32
    %c0_i32_0 = arith.constant 0 : i32
    return %arg0, %c0_i32 : i32, i32
  }
  func.func @transform_1(%arg0: i32) -> (i32, i32) {
    %c0_i32 = arith.constant 0 : i32
    %c0_i32_0 = arith.constant 0 : i32
    %c0_i32_1 = arith.constant 0 : i32
    return %c0_i32, %c0_i32_0 : i32, i32
  }
  func.func @transform_2(%arg0: i32) -> (i32, i32) {
    %c0_i32 = arith.constant 0 : i32
    %c0_i32_0 = arith.constant 0 : i32
    %c0_i32_1 = arith.constant 0 : i32
    return %c0_i32, %c0_i32_0 : i32, i32
  }
  func.func @transform_3(%arg0: i32) -> (i32, i32) {
    %c0_i32 = arith.constant 0 : i32
    %c0_i32_0 = arith.constant 0 : i32
    %c0_i32_1 = arith.constant 0 : i32
    return %c0_i32, %c0_i32_0 : i32, i32
  }
  func.func @transform_4(%arg0: i32) -> (i32, i32) {
    %c0_i32 = arith.constant 0 : i32
    %c0_i32_0 = arith.constant 0 : i32
    %c0_i32_1 = arith.constant 0 : i32
    return %c0_i32, %c0_i32_0 : i32, i32
  }
  func.func @transform_5(%arg0: i32) -> (i32, i32) {
    %c0_i32 = arith.constant 0 : i32
    %c0_i32_0 = arith.constant 0 : i32
    return %arg0, %c0_i32 : i32, i32
  }
}

</mosaic_0001>

<llo_original>
// kernel: digit_forward.4
$region0: #{digit_forward.4}
  #allocation0 [shape = 'u32[]', space=smem, size = 0x4, offset = 0x4, fixed_abs, tag = 'smem constant byte address 0x4 - core index']
  #allocation1 [shape = 'u32[144,128]{1,0:T(1,128)}', space=vmem, size = 0x12000, scoped, tag = 'internal scratch']
  %s0 = inlined_call_operand.vmem [shape: f32[200,90], index: 0, kind: input, shape index: {}]
  %s1 = inlined_call_operand.vmem [shape: f32[90,20], index: 1, kind: input, shape index: {}]
  %s2 = inlined_call_operand.vmem [shape: f32[1,20], index: 2, kind: input, shape index: {}]
  %s3 = inlined_call_operand.vmem [shape: f32[200,20], index: 3, kind: output, shape index: {}]
  %s4 = sld [smem:[#allocation0]]
  $region22: #{digit_forward.4} parent=0
    _
  %s6 = ssub.s32 1, %s4
  %s7 = scalar_select 0, %s6, %s4
  // Predicated region
  $region2: #{digit_forward.4} parent=0 // pred_check
    _
  $region3: #{digit_forward.4} parent=0 // pred_check_branch
    %9 = sbr.rel (0) target = $region5
  $region4: #{digit_forward.4} parent=0 // pred_region
    _
  $region5: #{digit_forward.4} parent=0 // pred_fallthru
    _
  // Predicated region
  $region6: #{digit_forward.4} parent=0 // pred_check
    _
  $region7: #{digit_forward.4} parent=0 // pred_check_branch
    %11 = sbr.rel (0) target = $region9
  $region8: #{digit_forward.4} parent=0 // pred_region
    _
  $region9: #{digit_forward.4} parent=0 // pred_fallthru
    _
  // Predicated region
  $region10: #{digit_forward.4} parent=0 // pred_check
    _
  $region11: #{digit_forward.4} parent=0 // pred_check_branch
    %13 = sbr.rel (0) target = $region13
  $region12: #{digit_forward.4} parent=0 // pred_region
    _
  $region13: #{digit_forward.4} parent=0 // pred_fallthru
    _
  %v14 = vld [vmem:[%s0] sm:$0xff]
  %v15 = vld [vmem:[%s0 + $0x8] sm:$0xff]
  %v16 = vld [vmem:[%s0 + $0x10] sm:$0xff]
  %v17 = vld [vmem:[%s0 + $0x18] sm:$0xff]
  %v18 = vld [vmem:[%s0 + $0x20] sm:$0xff]
  %v19 = vld [vmem:[%s0 + $0x28] sm:$0xff]
  %v20 = vld [vmem:[%s0 + $0x30] sm:$0xff]
  %v21 = vld [vmem:[%s0 + $0x38] sm:$0xff]
  %v22 = vld [vmem:[%s0 + $0x40] sm:$0xff]
  %v23 = vld [vmem:[%s0 + $0x48] sm:$0xff]
  %v24 = vld [vmem:[%s0 + $0x50] sm:$0xff]
  %v25 = vld [vmem:[%s0 + $0x58] sm:$0xff]
  %v26 = vld [vmem:[%s0 + $0x60] sm:$0xff]
  %v27 = vld [vmem:[%s0 + $0x68] sm:$0xff]
  %v28 = vld [vmem:[%s0 + $0x70] sm:$0xff]
  %v29 = vld [vmem:[%s0 + $0x78] sm:$0xff]
  %v30 = vld [vmem:[%s0 + $0x80] sm:$0xff]
  %v31 = vld [vmem:[%s0 + $0x88] sm:$0xff]
  %v32 = vld [vmem:[%s0 + $0x90] sm:$0xff]
  %v33 = vld [vmem:[%s0 + $0x98] sm:$0xff]
  %v34 = vld [vmem:[%s0 + $0xa0] sm:$0xff]
  %v35 = vld [vmem:[%s0 + $0xa8] sm:$0xff]
  %v36 = vld [vmem:[%s0 + $0xb0] sm:$0xff]
  %v37 = vld [vmem:[%s0 + $0xb8] sm:$0xff]
  %v38 = vld [vmem:[%s0 + $0xc0] sm:$0xff]
  %v39 = vld [vmem:[%s1] sm:$0xff]
  %v40 = vld [vmem:[%s1 + $0x8] sm:$0xff]
  %v41 = vld [vmem:[%s1 + $0x10] sm:$0xff]
  %v42 = vld [vmem:[%s1 + $0x18] sm:$0xff]
  %v43 = vld [vmem:[%s1 + $0x20] sm:$0xff]
  %v44 = vld [vmem:[%s1 + $0x28] sm:$0xff]
  %v45 = vld [vmem:[%s1 + $0x30] sm:$0xff]
  %v46 = vld [vmem:[%s1 + $0x38] sm:$0xff]
  %v47 = vld [vmem:[%s1 + $0x40] sm:$0xff]
  %v48 = vld [vmem:[%s1 + $0x48] sm:$0xff]
  %v49 = vld [vmem:[%s1 + $0x50] sm:$0xff]
  %v50 = vld [vmem:[%s1 + $0x58] sm:$0x3]
  %v51 = vld [vmem:[%s2] sm:$0x1]
  %v53 = vlaneseq
  %v54 = vshrl.u32 %v53, 7
  %v55 = vsub.s32 0, %v54
  %v56 = vrot.slane %v51, %v55
  %vm58 = vcmask 736256
  %v60 = vsel %vm58, %v14, 0
  %v63 = vsel %vm58, %v15, 0
  %v66 = vsel %vm58, %v16, 0
  %v69 = vsel %vm58, %v17, 0
  %v72 = vsel %vm58, %v18, 0
  %v75 = vsel %vm58, %v19, 0
  %v78 = vsel %vm58, %v20, 0
  %v81 = vsel %vm58, %v21, 0
  %v84 = vsel %vm58, %v22, 0
  %v87 = vsel %vm58, %v23, 0
  %v90 = vsel %vm58, %v24, 0
  %v93 = vsel %vm58, %v25, 0
  %v96 = vsel %vm58, %v26, 0
  %v99 = vsel %vm58, %v27, 0
  %v102 = vsel %vm58, %v28, 0
  %v105 = vsel %vm58, %v29, 0
  %v108 = vsel %vm58, %v30, 0
  %v111 = vsel %vm58, %v31, 0
  %v114 = vsel %vm58, %v32, 0
  %v117 = vsel %vm58, %v33, 0
  %v120 = vsel %vm58, %v34, 0
  %v123 = vsel %vm58, %v35, 0
  %v126 = vsel %vm58, %v36, 0
  %v129 = vsel %vm58, %v37, 0
  %v132 = vsel %vm58, %v38, 0
  %vm134 = vcmask 1041408
  %v136 = vsel %vm134, %v50, 0
  %138 = vmatprep.subr.mxu0 0.0
  %139 = vmatpush1.msra.mxu0 0.0
  %140 = vmatprep.subr.mxu0 0.0
  %141 = vmatpush1.msra.mxu0 0.0
  %142 = vmatprep.subr.mxu0 0.0
  %143 = vmatpush1.msra.mxu0 0.0
  %144 = vmatprep.subr.mxu0 0.0
  %145 = vmatpush1.msra.mxu0 0.0
  %146 = vmatprep.subr.mxu0 0.0
  %147 = vmatpush1.msra.mxu0 %v136
  %148 = vmatprep.subr.mxu0 0.0
  %149 = vmatpush1.msra.mxu0 %v49
  %150 = vmatprep.subr.mxu0 0.0
  %151 = vmatpush1.msra.mxu0 %v48
  %152 = vmatprep.subr.mxu0 0.0
  %153 = vmatpush1.msra.mxu0 %v47
  %154 = vmatprep.subr.mxu0 0.0
  %155 = vmatpush1.msra.mxu0 %v46
  %156 = vmatprep.subr.mxu0 0.0
  %157 = vmatpush1.msra.mxu0 %v45
  %158 = vmatprep.subr.mxu0 0.0
  %159 = vmatpush1.msra.mxu0 %v44
  %160 = vmatprep.subr.mxu0 0.0
  %161 = vmatpush1.msra.mxu0 %v43
  %162 = vmatprep.subr.mxu0 0.0
  %163 = vmatpush1.msra.mxu0 %v42
  %164 = vmatprep.subr.mxu0 0.0
  %165 = vmatpush1.msra.mxu0 %v41
  %166 = vmatprep.subr.mxu0 0.0
  %167 = vmatpush1.msra.mxu0 %v40
  %168 = vmatprep.subr.mxu0 0.0
  %169 = vmatpush1.msra.mxu0 %v39
  %170 = vmatprep.subr.mxu0 0.0
  %171 = vmatpush2.msra.mxu0 0.0
  %172 = vmatprep.subr.mxu0 0.0
  %173 = vmatpush2.msra.mxu0 0.0
  %174 = vmatprep.subr.mxu0 0.0
  %175 = vmatpush2.msra.mxu0 0.0
  %176 = vmatprep.subr.mxu0 0.0
  %177 = vmatpush2.msra.mxu0 0.0
  %178 = vmatprep.subr.mxu0 0.0
  %179 = vmatpush2.msra.mxu0 0.0
  %180 = vmatprep.subr.mxu0 0.0
  %181 = vmatpush2.msra.mxu0 0.0
  %182 = vmatprep.subr.mxu0 0.0
  %183 = vmatpush2.msra.mxu0 0.0
  %184 = vmatprep.subr.mxu0 0.0
  %185 = vmatpush2.msra.mxu0 0.0
  %186 = vmatprep.subr.mxu0 0.0
  %187 = vmatpush2.msra.mxu0 0.0
  %188 = vmatprep.subr.mxu0 0.0
  %189 = vmatpush2.msra.mxu0 0.0
  %190 = vmatprep.subr.mxu0 0.0
  %191 = vmatpush2.msra.mxu0 0.0
  %192 = vmatprep.subr.mxu0 0.0
  %193 = vmatpush2.msra.mxu0 0.0
  %194 = vmatprep.subr.mxu0 0.0
  %195 = vmatpush2.msra.mxu0 0.0
  %196 = vmatprep.subr.mxu0 0.0
  %197 = vmatpush2.msra.mxu0 0.0
  %198 = vmatprep.subr.mxu0 0.0
  %199 = vmatpush2.msra.mxu0 0.0
  %200 = vmatprep.subr.mxu0 0.0
  %201 = vmatpush2.msra.mxu0 0.0
  %202 = vmatprep.mubr.f32.mxu0 0.0
  %203 = vmatmul.mubr.f32.gmra.mxu0 %v60
  %v204 = vpop.f32.mrf.mxu0
  %v205 = vadd.f32 %v56, %v204
  %v206 = vpop.f32.mrf.mxu0
  %207 = vmatprep.mubr.f32.mxu0 0.0
  %208 = vmatmul.mubr.f32.gmra.mxu0 %v63
  %v209 = vpop.f32.mrf.mxu0
  %v210 = vadd.f32 %v56, %v209
  %v211 = vpop.f32.mrf.mxu0
  %212 = vmatprep.mubr.f32.mxu0 0.0
  %213 = vmatmul.mubr.f32.gmra.mxu0 %v66
  %v214 = vpop.f32.mrf.mxu0
  %v215 = vadd.f32 %v56, %v214
  %v216 = vpop.f32.mrf.mxu0
  %217 = vmatprep.mubr.f32.mxu0 0.0
  %218 = vmatmul.mubr.f32.gmra.mxu0 %v69
  %v219 = vpop.f32.mrf.mxu0
  %v220 = vadd.f32 %v56, %v219
  %v221 = vpop.f32.mrf.mxu0
  %222 = vmatprep.mubr.f32.mxu0 0.0
  %223 = vmatmul.mubr.f32.gmra.mxu0 %v72
  %v224 = vpop.f32.mrf.mxu0
  %v225 = vadd.f32 %v56, %v224
  %v226 = vpop.f32.mrf.mxu0
  %227 = vmatprep.mubr.f32.mxu0 0.0
  %228 = vmatmul.mubr.f32.gmra.mxu0 %v75
  %v229 = vpop.f32.mrf.mxu0
  %v230 = vadd.f32 %v56, %v229
  %v231 = vpop.f32.mrf.mxu0
  %232 = vmatprep.mubr.f32.mxu0 0.0
  %233 = vmatmul.mubr.f32.gmra.mxu0 %v78
  %v234 = vpop.f32.mrf.mxu0
  %v235 = vadd.f32 %v56, %v234
  %v236 = vpop.f32.mrf.mxu0
  %237 = vmatprep.mubr.f32.mxu0 0.0
  %238 = vmatmul.mubr.f32.gmra.mxu0 %v81
  %v239 = vpop.f32.mrf.mxu0
  %v240 = vadd.f32 %v56, %v239
  %v241 = vpop.f32.mrf.mxu0
  %242 = vmatprep.mubr.f32.mxu0 0.0
  %243 = vmatmul.mubr.f32.gmra.mxu0 %v84
  %v244 = vpop.f32.mrf.mxu0
  %v245 = vadd.f32 %v56, %v244
  %v246 = vpop.f32.mrf.mxu0
  %247 = vmatprep.mubr.f32.mxu0 0.0
  %248 = vmatmul.mubr.f32.gmra.mxu0 %v87
  %v249 = vpop.f32.mrf.mxu0
  %v250 = vadd.f32 %v56, %v249
  %v251 = vpop.f32.mrf.mxu0
  %252 = vmatprep.mubr.f32.mxu0 0.0
  %253 = vmatmul.mubr.f32.gmra.mxu0 %v90
  %v254 = vpop.f32.mrf.mxu0
  %v255 = vadd.f32 %v56, %v254
  %v256 = vpop.f32.mrf.mxu0
  %257 = vmatprep.mubr.f32.mxu0 0.0
  %258 = vmatmul.mubr.f32.gmra.mxu0 %v93
  %v259 = vpop.f32.mrf.mxu0
  %v260 = vadd.f32 %v56, %v259
  %v261 = vpop.f32.mrf.mxu0
  %262 = vmatprep.mubr.f32.mxu0 0.0
  %263 = vmatmul.mubr.f32.gmra.mxu0 %v96
  %v264 = vpop.f32.mrf.mxu0
  %v265 = vadd.f32 %v56, %v264
  %v266 = vpop.f32.mrf.mxu0
  %267 = vmatprep.mubr.f32.mxu0 0.0
  %268 = vmatmul.mubr.f32.gmra.mxu0 %v99
  %v269 = vpop.f32.mrf.mxu0
  %v270 = vadd.f32 %v56, %v269
  %v271 = vpop.f32.mrf.mxu0
  %272 = vmatprep.mubr.f32.mxu0 0.0
  %273 = vmatmul.mubr.f32.gmra.mxu0 %v102
  %v274 = vpop.f32.mrf.mxu0
  %v275 = vadd.f32 %v56, %v274
  %v276 = vpop.f32.mrf.mxu0
  %277 = vmatprep.mubr.f32.mxu0 0.0
  %278 = vmatmul.mubr.f32.gmra.mxu0 %v105
  %v279 = vpop.f32.mrf.mxu0
  %v280 = vadd.f32 %v56, %v279
  %v281 = vpop.f32.mrf.mxu0
  %282 = vmatprep.mubr.f32.mxu0 0.0
  %283 = vmatmul.mubr.f32.gmra.mxu0 %v108
  %v284 = vpop.f32.mrf.mxu0
  %v285 = vadd.f32 %v56, %v284
  %v286 = vpop.f32.mrf.mxu0
  %287 = vmatprep.mubr.f32.mxu0 0.0
  %288 = vmatmul.mubr.f32.gmra.mxu0 %v111
  %v289 = vpop.f32.mrf.mxu0
  %v290 = vadd.f32 %v56, %v289
  %v291 = vpop.f32.mrf.mxu0
  %292 = vmatprep.mubr.f32.mxu0 0.0
  %293 = vmatmul.mubr.f32.gmra.mxu0 %v114
  %v294 = vpop.f32.mrf.mxu0
  %v295 = vadd.f32 %v56, %v294
  %v296 = vpop.f32.mrf.mxu0
  %297 = vmatprep.mubr.f32.mxu0 0.0
  %298 = vmatmul.mubr.f32.gmra.mxu0 %v117
  %v299 = vpop.f32.mrf.mxu0
  %v300 = vadd.f32 %v56, %v299
  %v301 = vpop.f32.mrf.mxu0
  %302 = vmatprep.mubr.f32.mxu0 0.0
  %303 = vmatmul.mubr.f32.gmra.mxu0 %v120
  %v304 = vpop.f32.mrf.mxu0
  %v305 = vadd.f32 %v56, %v304
  %v306 = vpop.f32.mrf.mxu0
  %307 = vmatprep.mubr.f32.mxu0 0.0
  %308 = vmatmul.mubr.f32.gmra.mxu0 %v123
  %v309 = vpop.f32.mrf.mxu0
  %v310 = vadd.f32 %v56, %v309
  %v311 = vpop.f32.mrf.mxu0
  %312 = vmatprep.mubr.f32.mxu0 0.0
  %313 = vmatmul.mubr.f32.gmra.mxu0 %v126
  %v314 = vpop.f32.mrf.mxu0
  %v315 = vadd.f32 %v56, %v314
  %v316 = vpop.f32.mrf.mxu0
  %317 = vmatprep.mubr.f32.mxu0 0.0
  %318 = vmatmul.mubr.f32.gmra.mxu0 %v129
  %v319 = vpop.f32.mrf.mxu0
  %v320 = vadd.f32 %v56, %v319
  %v321 = vpop.f32.mrf.mxu0
  %322 = vmatprep.mubr.f32.mxu0 0.0
  %323 = vmatmul.mubr.f32.gmra.mxu0 %v132
  %v324 = vpop.f32.mrf.mxu0
  %v325 = vadd.f32 %v56, %v324
  %v326 = vpop.f32.mrf.mxu0
  %327 = vdwg.mxu0
  %v328 = vmax.f32 %v205, 0.0
  %v329 = vmax.f32 %v210, 0.0
  %v330 = vmax.f32 %v215, 0.0
  %v331 = vmax.f32 %v220, 0.0
  %v332 = vmax.f32 %v225, 0.0
  %v333 = vmax.f32 %v230, 0.0
  %v334 = vmax.f32 %v235, 0.0
  %v335 = vmax.f32 %v240, 0.0
  %v336 = vmax.f32 %v245, 0.0
  %v337 = vmax.f32 %v250, 0.0
  %v338 = vmax.f32 %v255, 0.0
  %v339 = vmax.f32 %v260, 0.0
  %v340 = vmax.f32 %v265, 0.0
  %v341 = vmax.f32 %v270, 0.0
  %v342 = vmax.f32 %v275, 0.0
  %v343 = vmax.f32 %v280, 0.0
  %v344 = vmax.f32 %v285, 0.0
  %v345 = vmax.f32 %v290, 0.0
  %v346 = vmax.f32 %v295, 0.0
  %v347 = vmax.f32 %v300, 0.0
  %v348 = vmax.f32 %v305, 0.0
  %v349 = vmax.f32 %v310, 0.0
  %v350 = vmax.f32 %v315, 0.0
  %v351 = vmax.f32 %v320, 0.0
  %v352 = vmax.f32 %v325, 0.0
  %vm353 = vcmask 162816
  %354 = vst.msk [vmem:[%s3] sm:$0xff] %vm353, %v328
  %355 = vst.msk [vmem:[%s3 + $0x8] sm:$0xff] %vm353, %v329
  %356 = vst.msk [vmem:[%s3 + $0x10] sm:$0xff] %vm353, %v330
  %357 = vst.msk [vmem:[%s3 + $0x18] sm:$0xff] %vm353, %v331
  %358 = vst.msk [vmem:[%s3 + $0x20] sm:$0xff] %vm353, %v332
  %359 = vst.msk [vmem:[%s3 + $0x28] sm:$0xff] %vm353, %v333
  %360 = vst.msk [vmem:[%s3 + $0x30] sm:$0xff] %vm353, %v334
  %361 = vst.msk [vmem:[%s3 + $0x38] sm:$0xff] %vm353, %v335
  %362 = vst.msk [vmem:[%s3 + $0x40] sm:$0xff] %vm353, %v336
  %363 = vst.msk [vmem:[%s3 + $0x48] sm:$0xff] %vm353, %v337
  %364 = vst.msk [vmem:[%s3 + $0x50] sm:$0xff] %vm353, %v338
  %365 = vst.msk [vmem:[%s3 + $0x58] sm:$0xff] %vm353, %v339
  %366 = vst.msk [vmem:[%s3 + $0x60] sm:$0xff] %vm353, %v340
  %367 = vst.msk [vmem:[%s3 + $0x68] sm:$0xff] %vm353, %v341
  %368 = vst.msk [vmem:[%s3 + $0x70] sm:$0xff] %vm353, %v342
  %369 = vst.msk [vmem:[%s3 + $0x78] sm:$0xff] %vm353, %v343
  %370 = vst.msk [vmem:[%s3 + $0x80] sm:$0xff] %vm353, %v344
  %371 = vst.msk [vmem:[%s3 + $0x88] sm:$0xff] %vm353, %v345
  %372 = vst.msk [vmem:[%s3 + $0x90] sm:$0xff] %vm353, %v346
  %373 = vst.msk [vmem:[%s3 + $0x98] sm:$0xff] %vm353, %v347
  %374 = vst.msk [vmem:[%s3 + $0xa0] sm:$0xff] %vm353, %v348
  %375 = vst.msk [vmem:[%s3 + $0xa8] sm:$0xff] %vm353, %v349
  %376 = vst.msk [vmem:[%s3 + $0xb0] sm:$0xff] %vm353, %v350
  %377 = vst.msk [vmem:[%s3 + $0xb8] sm:$0xff] %vm353, %v351
  %378 = vst.msk [vmem:[%s3 + $0xc0] sm:$0xff] %vm353, %v352
  // Predicated region
  $region14: #{digit_forward.4} parent=0 // pred_check
    _
  $region15: #{digit_forward.4} parent=0 // pred_check_branch
    %380 = sbr.rel (0) target = $region17
  $region16: #{digit_forward.4} parent=0 // pred_region
    _
  $region17: #{digit_forward.4} parent=0 // pred_fallthru
    _
  // Predicated region
  $region18: #{digit_forward.4} parent=0 // pred_check
    _
  $region19: #{digit_forward.4} parent=0 // pred_check_branch
    %382 = sbr.rel (0) target = $region21
  $region20: #{digit_forward.4} parent=0 // pred_region
    _
  $region21: #{digit_forward.4} parent=0 // pred_fallthru
    _

// kernel: digit_forward.3
$region0: #{digit_forward.3}
  #allocation0 [shape = 'u32[]', space=smem, size = 0x4, offset = 0x4, fixed_abs, tag = 'smem constant byte address 0x4 - core index']
  #allocation1 [shape = 'u32[144,128]{1,0:T(1,128)}', space=vmem, size = 0x12000, scoped, tag = 'internal scratch']
  %s0 = inlined_call_operand.vmem [shape: f32[4,288,25], index: 0, kind: input, shape index: {}]
  %s1 = inlined_call_operand.vmem [shape: f32[25,10], index: 1, kind: input, shape index: {}]
  %s2 = inlined_call_operand.vmem [shape: f32[1,10], index: 2, kind: input, shape index: {}]
  %s3 = inlined_call_operand.vmem [shape: f32[288,10], index: 3, kind: output, shape index: {}]
  %s4 = sld [smem:[#allocation0]]
  $region22: #{digit_forward.3} parent=0
    _
  %s6 = ssub.s32 1, %s4
  %s7 = scalar_select 0, %s6, %s4
  // Predicated region
  $region2: #{digit_forward.3} parent=0 // pred_check
    _
  $region3: #{digit_forward.3} parent=0 // pred_check_branch
    %9 = sbr.rel (0) target = $region5
  $region4: #{digit_forward.3} parent=0 // pred_region
    _
  $region5: #{digit_forward.3} parent=0 // pred_fallthru
    _
  // Predicated region
  $region6: #{digit_forward.3} parent=0 // pred_check
    _
  $region7: #{digit_forward.3} parent=0 // pred_check_branch
    %11 = sbr.rel (0) target = $region9
  $region8: #{digit_forward.3} parent=0 // pred_region
    _
  $region9: #{digit_forward.3} parent=0 // pred_fallthru
    _
  // Predicated region
  $region10: #{digit_forward.3} parent=0 // pred_check
    _
  $region11: #{digit_forward.3} parent=0 // pred_check_branch
    %13 = sbr.rel (0) target = $region13
  $region12: #{digit_forward.3} parent=0 // pred_region
    _
  $region13: #{digit_forward.3} parent=0 // pred_fallthru
    _
  %v14 = vld [vmem:[%s0] sm:$0xff]
  %v15 = vld [vmem:[%s0 + $0x8] sm:$0xff]
  %v16 = vld [vmem:[%s0 + $0x10] sm:$0xff]
  %v17 = vld [vmem:[%s0 + $0x18] sm:$0xff]
  %v18 = vld [vmem:[%s0 + $0x20] sm:$0xff]
  %v19 = vld [vmem:[%s0 + $0x28] sm:$0xff]
  %v20 = vld [vmem:[%s0 + $0x30] sm:$0xff]
  %v21 = vld [vmem:[%s0 + $0x38] sm:$0xff]
  %v22 = vld [vmem:[%s0 + $0x40] sm:$0xff]
  %v23 = vld [vmem:[%s0 + $0x48] sm:$0xff]
  %v24 = vld [vmem:[%s0 + $0x50] sm:$0xff]
  %v25 = vld [vmem:[%s0 + $0x58] sm:$0xff]
  %v26 = vld [vmem:[%s0 + $0x60] sm:$0xff]
  %v27 = vld [vmem:[%s0 + $0x68] sm:$0xff]
  %v28 = vld [vmem:[%s0 + $0x70] sm:$0xff]
  %v29 = vld [vmem:[%s0 + $0x78] sm:$0xff]
  %v30 = vld [vmem:[%s0 + $0x80] sm:$0xff]
  %v31 = vld [vmem:[%s0 + $0x88] sm:$0xff]
  %v32 = vld [vmem:[%s0 + $0x90] sm:$0xff]
  %v33 = vld [vmem:[%s0 + $0x98] sm:$0xff]
  %v34 = vld [vmem:[%s0 + $0xa0] sm:$0xff]
  %v35 = vld [vmem:[%s0 + $0xa8] sm:$0xff]
  %v36 = vld [vmem:[%s0 + $0xb0] sm:$0xff]
  %v37 = vld [vmem:[%s0 + $0xb8] sm:$0xff]
  %v38 = vld [vmem:[%s0 + $0xc0] sm:$0xff]
  %v39 = vld [vmem:[%s0 + $0xc8] sm:$0xff]
  %v40 = vld [vmem:[%s0 + $0xd0] sm:$0xff]
  %v41 = vld [vmem:[%s0 + $0xd8] sm:$0xff]
  %v42 = vld [vmem:[%s0 + $0xe0] sm:$0xff]
  %v43 = vld [vmem:[%s0 + $0xe8] sm:$0xff]
  %v44 = vld [vmem:[%s0 + $0xf0] sm:$0xff]
  %v45 = vld [vmem:[%s0 + $0xf8] sm:$0xff]
  %v46 = vld [vmem:[%s0 + $0x100] sm:$0xff]
  %v47 = vld [vmem:[%s0 + $0x108] sm:$0xff]
  %v48 = vld [vmem:[%s0 + $0x110] sm:$0xff]
  %v49 = vld [vmem:[%s0 + $0x118] sm:$0xff]
  %v50 = vld [vmem:[%s0 + $0x120] sm:$0xff]
  %v51 = vld [vmem:[%s0 + $0x128] sm:$0xff]
  %v52 = vld [vmem:[%s0 + $0x130] sm:$0xff]
  %v53 = vld [vmem:[%s0 + $0x138] sm:$0xff]
  %v54 = vld [vmem:[%s0 + $0x140] sm:$0xff]
  %v55 = vld [vmem:[%s0 + $0x148] sm:$0xff]
  %v56 = vld [vmem:[%s0 + $0x150] sm:$0xff]
  %v57 = vld [vmem:[%s0 + $0x158] sm:$0xff]
  %v58 = vld [vmem:[%s0 + $0x160] sm:$0xff]
  %v59 = vld [vmem:[%s0 + $0x168] sm:$0xff]
  %v60 = vld [vmem:[%s0 + $0x170] sm:$0xff]
  %v61 = vld [vmem:[%s0 + $0x178] sm:$0xff]
  %v62 = vld [vmem:[%s0 + $0x180] sm:$0xff]
  %v63 = vld [vmem:[%s0 + $0x188] sm:$0xff]
  %v64 = vld [vmem:[%s0 + $0x190] sm:$0xff]
  %v65 = vld [vmem:[%s0 + $0x198] sm:$0xff]
  %v66 = vld [vmem:[%s0 + $0x1a0] sm:$0xff]
  %v67 = vld [vmem:[%s0 + $0x1a8] sm:$0xff]
  %v68 = vld [vmem:[%s0 + $0x1b0] sm:$0xff]
  %v69 = vld [vmem:[%s0 + $0x1b8] sm:$0xff]
  %v70 = vld [vmem:[%s0 + $0x1c0] sm:$0xff]
  %v71 = vld [vmem:[%s0 + $0x1c8] sm:$0xff]
  %v72 = vld [vmem:[%s0 + $0x1d0] sm:$0xff]
  %v73 = vld [vmem:[%s0 + $0x1d8] sm:$0xff]
  %v74 = vld [vmem:[%s0 + $0x1e0] sm:$0xff]
  %v75 = vld [vmem:[%s0 + $0x1e8] sm:$0xff]
  %v76 = vld [vmem:[%s0 + $0x1f0] sm:$0xff]
  %v77 = vld [vmem:[%s0 + $0x1f8] sm:$0xff]
  %v78 = vld [vmem:[%s0 + $0x200] sm:$0xff]
  %v79 = vld [vmem:[%s0 + $0x208] sm:$0xff]
  %v80 = vld [vmem:[%s0 + $0x210] sm:$0xff]
  %v81 = vld [vmem:[%s0 + $0x218] sm:$0xff]
  %v82 = vld [vmem:[%s0 + $0x220] sm:$0xff]
  %v83 = vld [vmem:[%s0 + $0x228] sm:$0xff]
  %v84 = vld [vmem:[%s0 + $0x230] sm:$0xff]
  %v85 = vld [vmem:[%s0 + $0x238] sm:$0xff]
  %v86 = vld [vmem:[%s0 + $0x240] sm:$0xff]
  %v87 = vld [vmem:[%s0 + $0x248] sm:$0xff]
  %v88 = vld [vmem:[%s0 + $0x250] sm:$0xff]
  %v89 = vld [vmem:[%s0 + $0x258] sm:$0xff]
  %v90 = vld [vmem:[%s0 + $0x260] sm:$0xff]
  %v91 = vld [vmem:[%s0 + $0x268] sm:$0xff]
  %v92 = vld [vmem:[%s0 + $0x270] sm:$0xff]
  %v93 = vld [vmem:[%s0 + $0x278] sm:$0xff]
  %v94 = vld [vmem:[%s0 + $0x280] sm:$0xff]
  %v95 = vld [vmem:[%s0 + $0x288] sm:$0xff]
  %v96 = vld [vmem:[%s0 + $0x290] sm:$0xff]
  %v97 = vld [vmem:[%s0 + $0x298] sm:$0xff]
  %v98 = vld [vmem:[%s0 + $0x2a0] sm:$0xff]
  %v99 = vld [vmem:[%s0 + $0x2a8] sm:$0xff]
  %v100 = vld [vmem:[%s0 + $0x2b0] sm:$0xff]
  %v101 = vld [vmem:[%s0 + $0x2b8] sm:$0xff]
  %v102 = vld [vmem:[%s0 + $0x2c0] sm:$0xff]
  %v103 = vld [vmem:[%s0 + $0x2c8] sm:$0xff]
  %v104 = vld [vmem:[%s0 + $0x2d0] sm:$0xff]
  %v105 = vld [vmem:[%s0 + $0x2d8] sm:$0xff]
  %v106 = vld [vmem:[%s0 + $0x2e0] sm:$0xff]
  %v107 = vld [vmem:[%s0 + $0x2e8] sm:$0xff]
  %v108 = vld [vmem:[%s0 + $0x2f0] sm:$0xff]
  %v109 = vld [vmem:[%s0 + $0x2f8] sm:$0xff]
  %v110 = vld [vmem:[%s0 + $0x300] sm:$0xff]
  %v111 = vld [vmem:[%s0 + $0x308] sm:$0xff]
  %v112 = vld [vmem:[%s0 + $0x310] sm:$0xff]
  %v113 = vld [vmem:[%s0 + $0x318] sm:$0xff]
  %v114 = vld [vmem:[%s0 + $0x320] sm:$0xff]
  %v115 = vld [vmem:[%s0 + $0x328] sm:$0xff]
  %v116 = vld [vmem:[%s0 + $0x330] sm:$0xff]
  %v117 = vld [vmem:[%s0 + $0x338] sm:$0xff]
  %v118 = vld [vmem:[%s0 + $0x340] sm:$0xff]
  %v119 = vld [vmem:[%s0 + $0x348] sm:$0xff]
  %v120 = vld [vmem:[%s0 + $0x350] sm:$0xff]
  %v121 = vld [vmem:[%s0 + $0x358] sm:$0xff]
  %v122 = vld [vmem:[%s0 + $0x360] sm:$0xff]
  %v123 = vld [vmem:[%s0 + $0x368] sm:$0xff]
  %v124 = vld [vmem:[%s0 + $0x370] sm:$0xff]
  %v125 = vld [vmem:[%s0 + $0x378] sm:$0xff]
  %v126 = vld [vmem:[%s0 + $0x380] sm:$0xff]
  %v127 = vld [vmem:[%s0 + $0x388] sm:$0xff]
  %v128 = vld [vmem:[%s0 + $0x390] sm:$0xff]
  %v129 = vld [vmem:[%s0 + $0x398] sm:$0xff]
  %v130 = vld [vmem:[%s0 + $0x3a0] sm:$0xff]
  %v131 = vld [vmem:[%s0 + $0x3a8] sm:$0xff]
  %v132 = vld [vmem:[%s0 + $0x3b0] sm:$0xff]
  %v133 = vld [vmem:[%s0 + $0x3b8] sm:$0xff]
  %v134 = vld [vmem:[%s0 + $0x3c0] sm:$0xff]
  %v135 = vld [vmem:[%s0 + $0x3c8] sm:$0xff]
  %v136 = vld [vmem:[%s0 + $0x3d0] sm:$0xff]
  %v137 = vld [vmem:[%s0 + $0x3d8] sm:$0xff]
  %v138 = vld [vmem:[%s0 + $0x3e0] sm:$0xff]
  %v139 = vld [vmem:[%s0 + $0x3e8] sm:$0xff]
  %v140 = vld [vmem:[%s0 + $0x3f0] sm:$0xff]
  %v141 = vld [vmem:[%s0 + $0x3f8] sm:$0xff]
  %v142 = vld [vmem:[%s0 + $0x400] sm:$0xff]
  %v143 = vld [vmem:[%s0 + $0x408] sm:$0xff]
  %v144 = vld [vmem:[%s0 + $0x410] sm:$0xff]
  %v145 = vld [vmem:[%s0 + $0x418] sm:$0xff]
  %v146 = vld [vmem:[%s0 + $0x420] sm:$0xff]
  %v147 = vld [vmem:[%s0 + $0x428] sm:$0xff]
  %v148 = vld [vmem:[%s0 + $0x430] sm:$0xff]
  %v149 = vld [vmem:[%s0 + $0x438] sm:$0xff]
  %v150 = vld [vmem:[%s0 + $0x440] sm:$0xff]
  %v151 = vld [vmem:[%s0 + $0x448] sm:$0xff]
  %v152 = vld [vmem:[%s0 + $0x450] sm:$0xff]
  %v153 = vld [vmem:[%s0 + $0x458] sm:$0xff]
  %v154 = vld [vmem:[%s0 + $0x460] sm:$0xff]
  %v155 = vld [vmem:[%s0 + $0x468] sm:$0xff]
  %v156 = vld [vmem:[%s0 + $0x470] sm:$0xff]
  %v157 = vld [vmem:[%s0 + $0x478] sm:$0xff]
  %v158 = vld [vmem:[%s1] sm:$0xff]
  %v159 = vld [vmem:[%s1 + $0x8] sm:$0xff]
  %v160 = vld [vmem:[%s1 + $0x10] sm:$0xff]
  %v161 = vld [vmem:[%s1 + $0x18] sm:$0x1]
  %vm162 = vcmask 203776
  %v164 = vsel %vm162, %v14, 0
  %v167 = vsel %vm162, %v15, 0
  %v170 = vsel %vm162, %v16, 0
  %v173 = vsel %vm162, %v17, 0
  %v176 = vsel %vm162, %v18, 0
  %v179 = vsel %vm162, %v19, 0
  %v182 = vsel %vm162, %v20, 0
  %v185 = vsel %vm162, %v21, 0
  %v188 = vsel %vm162, %v22, 0
  %v191 = vsel %vm162, %v23, 0
  %v194 = vsel %vm162, %v24, 0
  %v197 = vsel %vm162, %v25, 0
  %v200 = vsel %vm162, %v26, 0
  %v203 = vsel %vm162, %v27, 0
  %v206 = vsel %vm162, %v28, 0
  %v209 = vsel %vm162, %v29, 0
  %v212 = vsel %vm162, %v30, 0
  %v215 = vsel %vm162, %v31, 0
  %v218 = vsel %vm162, %v32, 0
  %v221 = vsel %vm162, %v33, 0
  %v224 = vsel %vm162, %v34, 0
  %v227 = vsel %vm162, %v35, 0
  %v230 = vsel %vm162, %v36, 0
  %v233 = vsel %vm162, %v37, 0
  %v236 = vsel %vm162, %v38, 0
  %v239 = vsel %vm162, %v39, 0
  %v242 = vsel %vm162, %v40, 0
  %v245 = vsel %vm162, %v41, 0
  %v248 = vsel %vm162, %v42, 0
  %v251 = vsel %vm162, %v43, 0
  %v254 = vsel %vm162, %v44, 0
  %v257 = vsel %vm162, %v45, 0
  %v260 = vsel %vm162, %v46, 0
  %v263 = vsel %vm162, %v47, 0
  %v266 = vsel %vm162, %v48, 0
  %v269 = vsel %vm162, %v49, 0
  %v272 = vsel %vm162, %v50, 0
  %v275 = vsel %vm162, %v51, 0
  %v278 = vsel %vm162, %v52, 0
  %v281 = vsel %vm162, %v53, 0
  %v284 = vsel %vm162, %v54, 0
  %v287 = vsel %vm162, %v55, 0
  %v290 = vsel %vm162, %v56, 0
  %v293 = vsel %vm162, %v57, 0
  %v296 = vsel %vm162, %v58, 0
  %v299 = vsel %vm162, %v59, 0
  %v302 = vsel %vm162, %v60, 0
  %v305 = vsel %vm162, %v61, 0
  %v308 = vsel %vm162, %v62, 0
  %v311 = vsel %vm162, %v63, 0
  %v314 = vsel %vm162, %v64, 0
  %v317 = vsel %vm162, %v65, 0
  %v320 = vsel %vm162, %v66, 0
  %v323 = vsel %vm162, %v67, 0
  %v326 = vsel %vm162, %v68, 0
  %v329 = vsel %vm162, %v69, 0
  %v332 = vsel %vm162, %v70, 0
  %v335 = vsel %vm162, %v71, 0
  %v338 = vsel %vm162, %v72, 0
  %v341 = vsel %vm162, %v73, 0
  %v344 = vsel %vm162, %v74, 0
  %v347 = vsel %vm162, %v75, 0
  %v350 = vsel %vm162, %v76, 0
  %v353 = vsel %vm162, %v77, 0
  %v356 = vsel %vm162, %v78, 0
  %v359 = vsel %vm162, %v79, 0
  %v362 = vsel %vm162, %v80, 0
  %v365 = vsel %vm162, %v81, 0
  %v368 = vsel %vm162, %v82, 0
  %v371 = vsel %vm162, %v83, 0
  %v374 = vsel %vm162, %v84, 0
  %v377 = vsel %vm162, %v85, 0
  %v380 = vsel %vm162, %v86, 0
  %v383 = vsel %vm162, %v87, 0
  %v386 = vsel %vm162, %v88, 0
  %v389 = vsel %vm162, %v89, 0
  %v392 = vsel %vm162, %v90, 0
  %v395 = vsel %vm162, %v91, 0
  %v398 = vsel %vm162, %v92, 0
  %v401 = vsel %vm162, %v93, 0
  %v404 = vsel %vm162, %v94, 0
  %v407 = vsel %vm162, %v95, 0
  %v410 = vsel %vm162, %v96, 0
  %v413 = vsel %vm162, %v97, 0
  %v416 = vsel %vm162, %v98, 0
  %v419 = vsel %vm162, %v99, 0
  %v422 = vsel %vm162, %v100, 0
  %v425 = vsel %vm162, %v101, 0
  %v428 = vsel %vm162, %v102, 0
  %v431 = vsel %vm162, %v103, 0
  %v434 = vsel %vm162, %v104, 0
  %v437 = vsel %vm162, %v105, 0
  %v440 = vsel %vm162, %v106, 0
  %v443 = vsel %vm162, %v107, 0
  %v446 = vsel %vm162, %v108, 0
  %v449 = vsel %vm162, %v109, 0
  %v452 = vsel %vm162, %v110, 0
  %v455 = vsel %vm162, %v111, 0
  %v458 = vsel %vm162, %v112, 0
  %v461 = vsel %vm162, %v113, 0
  %v464 = vsel %vm162, %v114, 0
  %v467 = vsel %vm162, %v115, 0
  %v470 = vsel %vm162, %v116, 0
  %v473 = vsel %vm162, %v117, 0
  %v476 = vsel %vm162, %v118, 0
  %v479 = vsel %vm162, %v119, 0
  %v482 = vsel %vm162, %v120, 0
  %v485 = vsel %vm162, %v121, 0
  %v488 = vsel %vm162, %v122, 0
  %v491 = vsel %vm162, %v123, 0
  %v494 = vsel %vm162, %v124, 0
  %v497 = vsel %vm162, %v125, 0
  %v500 = vsel %vm162, %v126, 0
  %v503 = vsel %vm162, %v127, 0
  %v506 = vsel %vm162, %v128, 0
  %v509 = vsel %vm162, %v129, 0
  %v512 = vsel %vm162, %v130, 0
  %v515 = vsel %vm162, %v131, 0
  %v518 = vsel %vm162, %v132, 0
  %v521 = vsel %vm162, %v133, 0
  %v524 = vsel %vm162, %v134, 0
  %v527 = vsel %vm162, %v135, 0
  %v530 = vsel %vm162, %v136, 0
  %v533 = vsel %vm162, %v137, 0
  %v536 = vsel %vm162, %v138, 0
  %v539 = vsel %vm162, %v139, 0
  %v542 = vsel %vm162, %v140, 0
  %v545 = vsel %vm162, %v141, 0
  %v548 = vsel %vm162, %v142, 0
  %v551 = vsel %vm162, %v143, 0
  %v554 = vsel %vm162, %v144, 0
  %v557 = vsel %vm162, %v145, 0
  %v560 = vsel %vm162, %v146, 0
  %v563 = vsel %vm162, %v147, 0
  %v566 = vsel %vm162, %v148, 0
  %v569 = vsel %vm162, %v149, 0
  %v572 = vsel %vm162, %v150, 0
  %v575 = vsel %vm162, %v151, 0
  %v578 = vsel %vm162, %v152, 0
  %v581 = vsel %vm162, %v153, 0
  %v584 = vsel %vm162, %v154, 0
  %v587 = vsel %vm162, %v155, 0
  %v590 = vsel %vm162, %v156, 0
  %v593 = vsel %vm162, %v157, 0
  %vm595 = vcmask 1040384
  %v597 = vsel %vm595, %v161, 0
  %599 = vmatprep.subr.mxu0 0.0
  %600 = vmatpush1.msra.mxu0 0.0
  %601 = vmatprep.subr.mxu0 0.0
  %602 = vmatpush1.msra.mxu0 0.0
  %603 = vmatprep.subr.mxu0 0.0
  %604 = vmatpush1.msra.mxu0 0.0
  %605 = vmatprep.subr.mxu0 0.0
  %606 = vmatpush1.msra.mxu0 0.0
  %607 = vmatprep.subr.mxu0 0.0
  %608 = vmatpush1.msra.mxu0 0.0
  %609 = vmatprep.subr.mxu0 0.0
  %610 = vmatpush1.msra.mxu0 0.0
  %611 = vmatprep.subr.mxu0 0.0
  %612 = vmatpush1.msra.mxu0 0.0
  %613 = vmatprep.subr.mxu0 0.0
  %614 = vmatpush1.msra.mxu0 0.0
  %615 = vmatprep.subr.mxu0 0.0
  %616 = vmatpush1.msra.mxu0 0.0
  %617 = vmatprep.subr.mxu0 0.0
  %618 = vmatpush1.msra.mxu0 0.0
  %619 = vmatprep.subr.mxu0 0.0
  %620 = vmatpush1.msra.mxu0 0.0
  %621 = vmatprep.subr.mxu0 0.0
  %622 = vmatpush1.msra.mxu0 0.0
  %623 = vmatprep.subr.mxu0 0.0
  %624 = vmatpush1.msra.mxu0 %v597
  %625 = vmatprep.subr.mxu0 0.0
  %626 = vmatpush1.msra.mxu0 %v160
  %627 = vmatprep.subr.mxu0 0.0
  %628 = vmatpush1.msra.mxu0 %v159
  %629 = vmatprep.subr.mxu0 0.0
  %630 = vmatpush1.msra.mxu0 %v158
  %631 = vmatprep.subr.mxu0 0.0
  %632 = vmatpush2.msra.mxu0 0.0
  %633 = vmatprep.subr.mxu0 0.0
  %634 = vmatpush2.msra.mxu0 0.0
  %635 = vmatprep.subr.mxu0 0.0
  %636 = vmatpush2.msra.mxu0 0.0
  %637 = vmatprep.subr.mxu0 0.0
  %638 = vmatpush2.msra.mxu0 0.0
  %639 = vmatprep.subr.mxu0 0.0
  %640 = vmatpush2.msra.mxu0 0.0
  %641 = vmatprep.subr.mxu0 0.0
  %642 = vmatpush2.msra.mxu0 0.0
  %643 = vmatprep.subr.mxu0 0.0
  %644 = vmatpush2.msra.mxu0 0.0
  %645 = vmatprep.subr.mxu0 0.0
  %646 = vmatpush2.msra.mxu0 0.0
  %647 = vmatprep.subr.mxu0 0.0
  %648 = vmatpush2.msra.mxu0 0.0
  %649 = vmatprep.subr.mxu0 0.0
  %650 = vmatpush2.msra.mxu0 0.0
  %651 = vmatprep.subr.mxu0 0.0
  %652 = vmatpush2.msra.mxu0 0.0
  %653 = vmatprep.subr.mxu0 0.0
  %654 = vmatpush2.msra.mxu0 0.0
  %655 = vmatprep.subr.mxu0 0.0
  %656 = vmatpush2.msra.mxu0 0.0
  %657 = vmatprep.subr.mxu0 0.0
  %658 = vmatpush2.msra.mxu0 0.0
  %659 = vmatprep.subr.mxu0 0.0
  %660 = vmatpush2.msra.mxu0 0.0
  %661 = vmatprep.subr.mxu0 0.0
  %662 = vmatpush2.msra.mxu0 0.0
  %663 = vmatprep.mubr.f32.mxu0 0.0
  %664 = vmatmul.mubr.f32.gmra.mxu0 %v164
  %v665 = vpop.f32.mrf.mxu0
  %v666 = vadd.f32 0.0, %v665
  %v667 = vpop.f32.mrf.mxu0
  %668 = vmatprep.mubr.f32.mxu0 0.0
  %669 = vmatmul.mubr.f32.gmra.mxu0 %v167
  %v670 = vpop.f32.mrf.mxu0
  %v671 = vadd.f32 0.0, %v670
  %v672 = vpop.f32.mrf.mxu0
  %673 = vmatprep.mubr.f32.mxu0 0.0
  %674 = vmatmul.mubr.f32.gmra.mxu0 %v170
  %v675 = vpop.f32.mrf.mxu0
  %v676 = vadd.f32 0.0, %v675
  %v677 = vpop.f32.mrf.mxu0
  %678 = vmatprep.mubr.f32.mxu0 0.0
  %679 = vmatmul.mubr.f32.gmra.mxu0 %v173
  %v680 = vpop.f32.mrf.mxu0
  %v681 = vadd.f32 0.0, %v680
  %v682 = vpop.f32.mrf.mxu0
  %683 = vmatprep.mubr.f32.mxu0 0.0
  %684 = vmatmul.mubr.f32.gmra.mxu0 %v176
  %v685 = vpop.f32.mrf.mxu0
  %v686 = vadd.f32 0.0, %v685
  %v687 = vpop.f32.mrf.mxu0
  %688 = vmatprep.mubr.f32.mxu0 0.0
  %689 = vmatmul.mubr.f32.gmra.mxu0 %v179
  %v690 = vpop.f32.mrf.mxu0
  %v691 = vadd.f32 0.0, %v690
  %v692 = vpop.f32.mrf.mxu0
  %693 = vmatprep.mubr.f32.mxu0 0.0
  %694 = vmatmul.mubr.f32.gmra.mxu0 %v182
  %v695 = vpop.f32.mrf.mxu0
  %v696 = vadd.f32 0.0, %v695
  %v697 = vpop.f32.mrf.mxu0
  %698 = vmatprep.mubr.f32.mxu0 0.0
  %699 = vmatmul.mubr.f32.gmra.mxu0 %v185
  %v700 = vpop.f32.mrf.mxu0
  %v701 = vadd.f32 0.0, %v700
  %v702 = vpop.f32.mrf.mxu0
  %703 = vmatprep.mubr.f32.mxu0 0.0
  %704 = vmatmul.mubr.f32.gmra.mxu0 %v188
  %v705 = vpop.f32.mrf.mxu0
  %v706 = vadd.f32 0.0, %v705
  %v707 = vpop.f32.mrf.mxu0
  %708 = vmatprep.mubr.f32.mxu0 0.0
  %709 = vmatmul.mubr.f32.gmra.mxu0 %v191
  %v710 = vpop.f32.mrf.mxu0
  %v711 = vadd.f32 0.0, %v710
  %v712 = vpop.f32.mrf.mxu0
  %713 = vmatprep.mubr.f32.mxu0 0.0
  %714 = vmatmul.mubr.f32.gmra.mxu0 %v194
  %v715 = vpop.f32.mrf.mxu0
  %v716 = vadd.f32 0.0, %v715
  %v717 = vpop.f32.mrf.mxu0
  %718 = vmatprep.mubr.f32.mxu0 0.0
  %719 = vmatmul.mubr.f32.gmra.mxu0 %v197
  %v720 = vpop.f32.mrf.mxu0
  %v721 = vadd.f32 0.0, %v720
  %v722 = vpop.f32.mrf.mxu0
  %723 = vmatprep.mubr.f32.mxu0 0.0
  %724 = vmatmul.mubr.f32.gmra.mxu0 %v200
  %v725 = vpop.f32.mrf.mxu0
  %v726 = vadd.f32 0.0, %v725
  %v727 = vpop.f32.mrf.mxu0
  %728 = vmatprep.mubr.f32.mxu0 0.0
  %729 = vmatmul.mubr.f32.gmra.mxu0 %v203
  %v730 = vpop.f32.mrf.mxu0
  %v731 = vadd.f32 0.0, %v730
  %v732 = vpop.f32.mrf.mxu0
  %733 = vmatprep.mubr.f32.mxu0 0.0
  %734 = vmatmul.mubr.f32.gmra.mxu0 %v206
  %v735 = vpop.f32.mrf.mxu0
  %v736 = vadd.f32 0.0, %v735
  %v737 = vpop.f32.mrf.mxu0
  %738 = vmatprep.mubr.f32.mxu0 0.0
  %739 = vmatmul.mubr.f32.gmra.mxu0 %v209
  %v740 = vpop.f32.mrf.mxu0
  %v741 = vadd.f32 0.0, %v740
  %v742 = vpop.f32.mrf.mxu0
  %743 = vmatprep.mubr.f32.mxu0 0.0
  %744 = vmatmul.mubr.f32.gmra.mxu0 %v212
  %v745 = vpop.f32.mrf.mxu0
  %v746 = vadd.f32 0.0, %v745
  %v747 = vpop.f32.mrf.mxu0
  %748 = vmatprep.mubr.f32.mxu0 0.0
  %749 = vmatmul.mubr.f32.gmra.mxu0 %v215
  %v750 = vpop.f32.mrf.mxu0
  %v751 = vadd.f32 0.0, %v750
  %v752 = vpop.f32.mrf.mxu0
  %753 = vmatprep.mubr.f32.mxu0 0.0
  %754 = vmatmul.mubr.f32.gmra.mxu0 %v218
  %v755 = vpop.f32.mrf.mxu0
  %v756 = vadd.f32 0.0, %v755
  %v757 = vpop.f32.mrf.mxu0
  %758 = vmatprep.mubr.f32.mxu0 0.0
  %759 = vmatmul.mubr.f32.gmra.mxu0 %v221
  %v760 = vpop.f32.mrf.mxu0
  %v761 = vadd.f32 0.0, %v760
  %v762 = vpop.f32.mrf.mxu0
  %763 = vmatprep.mubr.f32.mxu0 0.0
  %764 = vmatmul.mubr.f32.gmra.mxu0 %v224
  %v765 = vpop.f32.mrf.mxu0
  %v766 = vadd.f32 0.0, %v765
  %v767 = vpop.f32.mrf.mxu0
  %768 = vmatprep.mubr.f32.mxu0 0.0
  %769 = vmatmul.mubr.f32.gmra.mxu0 %v227
  %v770 = vpop.f32.mrf.mxu0
  %v771 = vadd.f32 0.0, %v770
  %v772 = vpop.f32.mrf.mxu0
  %773 = vmatprep.mubr.f32.mxu0 0.0
  %774 = vmatmul.mubr.f32.gmra.mxu0 %v230
  %v775 = vpop.f32.mrf.mxu0
  %v776 = vadd.f32 0.0, %v775
  %v777 = vpop.f32.mrf.mxu0
  %778 = vmatprep.mubr.f32.mxu0 0.0
  %779 = vmatmul.mubr.f32.gmra.mxu0 %v233
  %v780 = vpop.f32.mrf.mxu0
  %v781 = vadd.f32 0.0, %v780
  %v782 = vpop.f32.mrf.mxu0
  %783 = vmatprep.mubr.f32.mxu0 0.0
  %784 = vmatmul.mubr.f32.gmra.mxu0 %v236
  %v785 = vpop.f32.mrf.mxu0
  %v786 = vadd.f32 0.0, %v785
  %v787 = vpop.f32.mrf.mxu0
  %788 = vmatprep.mubr.f32.mxu0 0.0
  %789 = vmatmul.mubr.f32.gmra.mxu0 %v239
  %v790 = vpop.f32.mrf.mxu0
  %v791 = vadd.f32 0.0, %v790
  %v792 = vpop.f32.mrf.mxu0
  %793 = vmatprep.mubr.f32.mxu0 0.0
  %794 = vmatmul.mubr.f32.gmra.mxu0 %v242
  %v795 = vpop.f32.mrf.mxu0
  %v796 = vadd.f32 0.0, %v795
  %v797 = vpop.f32.mrf.mxu0
  %798 = vmatprep.mubr.f32.mxu0 0.0
  %799 = vmatmul.mubr.f32.gmra.mxu0 %v245
  %v800 = vpop.f32.mrf.mxu0
  %v801 = vadd.f32 0.0, %v800
  %v802 = vpop.f32.mrf.mxu0
  %803 = vmatprep.mubr.f32.mxu0 0.0
  %804 = vmatmul.mubr.f32.gmra.mxu0 %v248
  %v805 = vpop.f32.mrf.mxu0
  %v806 = vadd.f32 0.0, %v805
  %v807 = vpop.f32.mrf.mxu0
  %808 = vmatprep.mubr.f32.mxu0 0.0
  %809 = vmatmul.mubr.f32.gmra.mxu0 %v251
  %v810 = vpop.f32.mrf.mxu0
  %v811 = vadd.f32 0.0, %v810
  %v812 = vpop.f32.mrf.mxu0
  %813 = vmatprep.mubr.f32.mxu0 0.0
  %814 = vmatmul.mubr.f32.gmra.mxu0 %v254
  %v815 = vpop.f32.mrf.mxu0
  %v816 = vadd.f32 0.0, %v815
  %v817 = vpop.f32.mrf.mxu0
  %818 = vmatprep.mubr.f32.mxu0 0.0
  %819 = vmatmul.mubr.f32.gmra.mxu0 %v257
  %v820 = vpop.f32.mrf.mxu0
  %v821 = vadd.f32 0.0, %v820
  %v822 = vpop.f32.mrf.mxu0
  %823 = vmatprep.mubr.f32.mxu0 0.0
  %824 = vmatmul.mubr.f32.gmra.mxu0 %v260
  %v825 = vpop.f32.mrf.mxu0
  %v826 = vadd.f32 0.0, %v825
  %v827 = vpop.f32.mrf.mxu0
  %828 = vmatprep.mubr.f32.mxu0 0.0
  %829 = vmatmul.mubr.f32.gmra.mxu0 %v263
  %v830 = vpop.f32.mrf.mxu0
  %v831 = vadd.f32 0.0, %v830
  %v832 = vpop.f32.mrf.mxu0
  %833 = vmatprep.mubr.f32.mxu0 0.0
  %834 = vmatmul.mubr.f32.gmra.mxu0 %v266
  %v835 = vpop.f32.mrf.mxu0
  %v836 = vadd.f32 0.0, %v835
  %v837 = vpop.f32.mrf.mxu0
  %838 = vmatprep.mubr.f32.mxu0 0.0
  %839 = vmatmul.mubr.f32.gmra.mxu0 %v269
  %v840 = vpop.f32.mrf.mxu0
  %v841 = vadd.f32 0.0, %v840
  %v842 = vpop.f32.mrf.mxu0
  %843 = vmatprep.mubr.f32.mxu0 0.0
  %844 = vmatmul.mubr.f32.gmra.mxu0 %v272
  %v845 = vpop.f32.mrf.mxu0
  %v846 = vadd.f32 0.0, %v845
  %v847 = vpop.f32.mrf.mxu0
  %848 = vmatprep.mubr.f32.mxu0 0.0
  %849 = vmatmul.mubr.f32.gmra.mxu0 %v275
  %v850 = vpop.f32.mrf.mxu0
  %v851 = vadd.f32 0.0, %v850
  %v852 = vpop.f32.mrf.mxu0
  %853 = vmatprep.mubr.f32.mxu0 0.0
  %854 = vmatmul.mubr.f32.gmra.mxu0 %v278
  %v855 = vpop.f32.mrf.mxu0
  %v856 = vadd.f32 0.0, %v855
  %v857 = vpop.f32.mrf.mxu0
  %858 = vmatprep.mubr.f32.mxu0 0.0
  %859 = vmatmul.mubr.f32.gmra.mxu0 %v281
  %v860 = vpop.f32.mrf.mxu0
  %v861 = vadd.f32 0.0, %v860
  %v862 = vpop.f32.mrf.mxu0
  %863 = vmatprep.mubr.f32.mxu0 0.0
  %864 = vmatmul.mubr.f32.gmra.mxu0 %v284
  %v865 = vpop.f32.mrf.mxu0
  %v866 = vadd.f32 0.0, %v865
  %v867 = vpop.f32.mrf.mxu0
  %868 = vmatprep.mubr.f32.mxu0 0.0
  %869 = vmatmul.mubr.f32.gmra.mxu0 %v287
  %v870 = vpop.f32.mrf.mxu0
  %v871 = vadd.f32 0.0, %v870
  %v872 = vpop.f32.mrf.mxu0
  %873 = vmatprep.mubr.f32.mxu0 0.0
  %874 = vmatmul.mubr.f32.gmra.mxu0 %v290
  %v875 = vpop.f32.mrf.mxu0
  %v876 = vadd.f32 0.0, %v875
  %v877 = vpop.f32.mrf.mxu0
  %878 = vmatprep.mubr.f32.mxu0 0.0
  %879 = vmatmul.mubr.f32.gmra.mxu0 %v293
  %v880 = vpop.f32.mrf.mxu0
  %v881 = vadd.f32 0.0, %v880
  %v882 = vpop.f32.mrf.mxu0
  %883 = vmatprep.mubr.f32.mxu0 0.0
  %884 = vmatmul.mubr.f32.gmra.mxu0 %v296
  %v885 = vpop.f32.mrf.mxu0
  %v886 = vadd.f32 0.0, %v885
  %v887 = vpop.f32.mrf.mxu0
  %888 = vmatprep.mubr.f32.mxu0 0.0
  %889 = vmatmul.mubr.f32.gmra.mxu0 %v299
  %v890 = vpop.f32.mrf.mxu0
  %v891 = vadd.f32 0.0, %v890
  %v892 = vpop.f32.mrf.mxu0
  %893 = vmatprep.mubr.f32.mxu0 0.0
  %894 = vmatmul.mubr.f32.gmra.mxu0 %v302
  %v895 = vpop.f32.mrf.mxu0
  %v896 = vadd.f32 0.0, %v895
  %v897 = vpop.f32.mrf.mxu0
  %898 = vmatprep.mubr.f32.mxu0 0.0
  %899 = vmatmul.mubr.f32.gmra.mxu0 %v305
  %v900 = vpop.f32.mrf.mxu0
  %v901 = vadd.f32 0.0, %v900
  %v902 = vpop.f32.mrf.mxu0
  %903 = vmatprep.mubr.f32.mxu0 0.0
  %904 = vmatmul.mubr.f32.gmra.mxu0 %v308
  %v905 = vpop.f32.mrf.mxu0
  %v906 = vadd.f32 0.0, %v905
  %v907 = vpop.f32.mrf.mxu0
  %908 = vmatprep.mubr.f32.mxu0 0.0
  %909 = vmatmul.mubr.f32.gmra.mxu0 %v311
  %v910 = vpop.f32.mrf.mxu0
  %v911 = vadd.f32 0.0, %v910
  %v912 = vpop.f32.mrf.mxu0
  %913 = vmatprep.mubr.f32.mxu0 0.0
  %914 = vmatmul.mubr.f32.gmra.mxu0 %v314
  %v915 = vpop.f32.mrf.mxu0
  %v916 = vadd.f32 0.0, %v915
  %v917 = vpop.f32.mrf.mxu0
  %918 = vmatprep.mubr.f32.mxu0 0.0
  %919 = vmatmul.mubr.f32.gmra.mxu0 %v317
  %v920 = vpop.f32.mrf.mxu0
  %v921 = vadd.f32 0.0, %v920
  %v922 = vpop.f32.mrf.mxu0
  %923 = vmatprep.mubr.f32.mxu0 0.0
  %924 = vmatmul.mubr.f32.gmra.mxu0 %v320
  %v925 = vpop.f32.mrf.mxu0
  %v926 = vadd.f32 0.0, %v925
  %v927 = vpop.f32.mrf.mxu0
  %928 = vmatprep.mubr.f32.mxu0 0.0
  %929 = vmatmul.mubr.f32.gmra.mxu0 %v323
  %v930 = vpop.f32.mrf.mxu0
  %v931 = vadd.f32 0.0, %v930
  %v932 = vpop.f32.mrf.mxu0
  %933 = vmatprep.mubr.f32.mxu0 0.0
  %934 = vmatmul.mubr.f32.gmra.mxu0 %v326
  %v935 = vpop.f32.mrf.mxu0
  %v936 = vadd.f32 0.0, %v935
  %v937 = vpop.f32.mrf.mxu0
  %938 = vmatprep.mubr.f32.mxu0 0.0
  %939 = vmatmul.mubr.f32.gmra.mxu0 %v329
  %v940 = vpop.f32.mrf.mxu0
  %v941 = vadd.f32 0.0, %v940
  %v942 = vpop.f32.mrf.mxu0
  %943 = vmatprep.mubr.f32.mxu0 0.0
  %944 = vmatmul.mubr.f32.gmra.mxu0 %v332
  %v945 = vpop.f32.mrf.mxu0
  %v946 = vadd.f32 0.0, %v945
  %v947 = vpop.f32.mrf.mxu0
  %948 = vmatprep.mubr.f32.mxu0 0.0
  %949 = vmatmul.mubr.f32.gmra.mxu0 %v335
  %v950 = vpop.f32.mrf.mxu0
  %v951 = vadd.f32 0.0, %v950
  %v952 = vpop.f32.mrf.mxu0
  %953 = vmatprep.mubr.f32.mxu0 0.0
  %954 = vmatmul.mubr.f32.gmra.mxu0 %v338
  %v955 = vpop.f32.mrf.mxu0
  %v956 = vadd.f32 0.0, %v955
  %v957 = vpop.f32.mrf.mxu0
  %958 = vmatprep.mubr.f32.mxu0 0.0
  %959 = vmatmul.mubr.f32.gmra.mxu0 %v341
  %v960 = vpop.f32.mrf.mxu0
  %v961 = vadd.f32 0.0, %v960
  %v962 = vpop.f32.mrf.mxu0
  %963 = vmatprep.mubr.f32.mxu0 0.0
  %964 = vmatmul.mubr.f32.gmra.mxu0 %v344
  %v965 = vpop.f32.mrf.mxu0
  %v966 = vadd.f32 0.0, %v965
  %v967 = vpop.f32.mrf.mxu0
  %968 = vmatprep.mubr.f32.mxu0 0.0
  %969 = vmatmul.mubr.f32.gmra.mxu0 %v347
  %v970 = vpop.f32.mrf.mxu0
  %v971 = vadd.f32 0.0, %v970
  %v972 = vpop.f32.mrf.mxu0
  %973 = vmatprep.mubr.f32.mxu0 0.0
  %974 = vmatmul.mubr.f32.gmra.mxu0 %v350
  %v975 = vpop.f32.mrf.mxu0
  %v976 = vadd.f32 0.0, %v975
  %v977 = vpop.f32.mrf.mxu0
  %978 = vmatprep.mubr.f32.mxu0 0.0
  %979 = vmatmul.mubr.f32.gmra.mxu0 %v353
  %v980 = vpop.f32.mrf.mxu0
  %v981 = vadd.f32 0.0, %v980
  %v982 = vpop.f32.mrf.mxu0
  %983 = vmatprep.mubr.f32.mxu0 0.0
  %984 = vmatmul.mubr.f32.gmra.mxu0 %v356
  %v985 = vpop.f32.mrf.mxu0
  %v986 = vadd.f32 0.0, %v985
  %v987 = vpop.f32.mrf.mxu0
  %988 = vmatprep.mubr.f32.mxu0 0.0
  %989 = vmatmul.mubr.f32.gmra.mxu0 %v359
  %v990 = vpop.f32.mrf.mxu0
  %v991 = vadd.f32 0.0, %v990
  %v992 = vpop.f32.mrf.mxu0
  %993 = vmatprep.mubr.f32.mxu0 0.0
  %994 = vmatmul.mubr.f32.gmra.mxu0 %v362
  %v995 = vpop.f32.mrf.mxu0
  %v996 = vadd.f32 0.0, %v995
  %v997 = vpop.f32.mrf.mxu0
  %998 = vmatprep.mubr.f32.mxu0 0.0
  %999 = vmatmul.mubr.f32.gmra.mxu0 %v365
  %v1000 = vpop.f32.mrf.mxu0
  %v1001 = vadd.f32 0.0, %v1000
  %v1002 = vpop.f32.mrf.mxu0
  %1003 = vmatprep.mubr.f32.mxu0 0.0
  %1004 = vmatmul.mubr.f32.gmra.mxu0 %v368
  %v1005 = vpop.f32.mrf.mxu0
  %v1006 = vadd.f32 0.0, %v1005
  %v1007 = vpop.f32.mrf.mxu0
  %1008 = vmatprep.mubr.f32.mxu0 0.0
  %1009 = vmatmul.mubr.f32.gmra.mxu0 %v371
  %v1010 = vpop.f32.mrf.mxu0
  %v1011 = vadd.f32 0.0, %v1010
  %v1012 = vpop.f32.mrf.mxu0
  %1013 = vmatprep.mubr.f32.mxu0 0.0
  %1014 = vmatmul.mubr.f32.gmra.mxu0 %v374
  %v1015 = vpop.f32.mrf.mxu0
  %v1016 = vadd.f32 0.0, %v1015
  %v1017 = vpop.f32.mrf.mxu0
  %1018 = vmatprep.mubr.f32.mxu0 0.0
  %1019 = vmatmul.mubr.f32.gmra.mxu0 %v377
  %v1020 = vpop.f32.mrf.mxu0
  %v1021 = vadd.f32 0.0, %v1020
  %v1022 = vpop.f32.mrf.mxu0
  %1023 = vmatprep.mubr.f32.mxu0 0.0
  %1024 = vmatmul.mubr.f32.gmra.mxu0 %v380
  %v1025 = vpop.f32.mrf.mxu0
  %v1026 = vadd.f32 0.0, %v1025
  %v1027 = vpop.f32.mrf.mxu0
  %1028 = vmatprep.mubr.f32.mxu0 0.0
  %1029 = vmatmul.mubr.f32.gmra.mxu0 %v383
  %v1030 = vpop.f32.mrf.mxu0
  %v1031 = vadd.f32 0.0, %v1030
  %v1032 = vpop.f32.mrf.mxu0
  %1033 = vmatprep.mubr.f32.mxu0 0.0
  %1034 = vmatmul.mubr.f32.gmra.mxu0 %v386
  %v1035 = vpop.f32.mrf.mxu0
  %v1036 = vadd.f32 0.0, %v1035
  %v1037 = vpop.f32.mrf.mxu0
  %1038 = vmatprep.mubr.f32.mxu0 0.0
  %1039 = vmatmul.mubr.f32.gmra.mxu0 %v389
  %v1040 = vpop.f32.mrf.mxu0
  %v1041 = vadd.f32 0.0, %v1040
  %v1042 = vpop.f32.mrf.mxu0
  %1043 = vmatprep.mubr.f32.mxu0 0.0
  %1044 = vmatmul.mubr.f32.gmra.mxu0 %v392
  %v1045 = vpop.f32.mrf.mxu0
  %v1046 = vadd.f32 0.0, %v1045
  %v1047 = vpop.f32.mrf.mxu0
  %1048 = vmatprep.mubr.f32.mxu0 0.0
  %1049 = vmatmul.mubr.f32.gmra.mxu0 %v395
  %v1050 = vpop.f32.mrf.mxu0
  %v1051 = vadd.f32 0.0, %v1050
  %v1052 = vpop.f32.mrf.mxu0
  %1053 = vmatprep.mubr.f32.mxu0 0.0
  %1054 = vmatmul.mubr.f32.gmra.mxu0 %v398
  %v1055 = vpop.f32.mrf.mxu0
  %v1056 = vadd.f32 0.0, %v1055
  %v1057 = vpop.f32.mrf.mxu0
  %1058 = vmatprep.mubr.f32.mxu0 0.0
  %1059 = vmatmul.mubr.f32.gmra.mxu0 %v401
  %v1060 = vpop.f32.mrf.mxu0
  %v1061 = vadd.f32 0.0, %v1060
  %v1062 = vpop.f32.mrf.mxu0
  %1063 = vmatprep.mubr.f32.mxu0 0.0
  %1064 = vmatmul.mubr.f32.gmra.mxu0 %v404
  %v1065 = vpop.f32.mrf.mxu0
  %v1066 = vadd.f32 0.0, %v1065
  %v1067 = vpop.f32.mrf.mxu0
  %1068 = vmatprep.mubr.f32.mxu0 0.0
  %1069 = vmatmul.mubr.f32.gmra.mxu0 %v407
  %v1070 = vpop.f32.mrf.mxu0
  %v1071 = vadd.f32 0.0, %v1070
  %v1072 = vpop.f32.mrf.mxu0
  %1073 = vmatprep.mubr.f32.mxu0 0.0
  %1074 = vmatmul.mubr.f32.gmra.mxu0 %v410
  %v1075 = vpop.f32.mrf.mxu0
  %v1076 = vadd.f32 0.0, %v1075
  %v1077 = vpop.f32.mrf.mxu0
  %1078 = vmatprep.mubr.f32.mxu0 0.0
  %1079 = vmatmul.mubr.f32.gmra.mxu0 %v413
  %v1080 = vpop.f32.mrf.mxu0
  %v1081 = vadd.f32 0.0, %v1080
  %v1082 = vpop.f32.mrf.mxu0
  %1083 = vmatprep.mubr.f32.mxu0 0.0
  %1084 = vmatmul.mubr.f32.gmra.mxu0 %v416
  %v1085 = vpop.f32.mrf.mxu0
  %v1086 = vadd.f32 0.0, %v1085
  %v1087 = vpop.f32.mrf.mxu0
  %1088 = vmatprep.mubr.f32.mxu0 0.0
  %1089 = vmatmul.mubr.f32.gmra.mxu0 %v419
  %v1090 = vpop.f32.mrf.mxu0
  %v1091 = vadd.f32 0.0, %v1090
  %v1092 = vpop.f32.mrf.mxu0
  %1093 = vmatprep.mubr.f32.mxu0 0.0
  %1094 = vmatmul.mubr.f32.gmra.mxu0 %v422
  %v1095 = vpop.f32.mrf.mxu0
  %v1096 = vadd.f32 0.0, %v1095
  %v1097 = vpop.f32.mrf.mxu0
  %1098 = vmatprep.mubr.f32.mxu0 0.0
  %1099 = vmatmul.mubr.f32.gmra.mxu0 %v425
  %v1100 = vpop.f32.mrf.mxu0
  %v1101 = vadd.f32 0.0, %v1100
  %v1102 = vpop.f32.mrf.mxu0
  %1103 = vmatprep.mubr.f32.mxu0 0.0
  %1104 = vmatmul.mubr.f32.gmra.mxu0 %v428
  %v1105 = vpop.f32.mrf.mxu0
  %v1106 = vadd.f32 0.0, %v1105
  %v1107 = vpop.f32.mrf.mxu0
  %1108 = vmatprep.mubr.f32.mxu0 0.0
  %1109 = vmatmul.mubr.f32.gmra.mxu0 %v431
  %v1110 = vpop.f32.mrf.mxu0
  %v1111 = vadd.f32 0.0, %v1110
  %v1112 = vpop.f32.mrf.mxu0
  %1113 = vmatprep.mubr.f32.mxu0 0.0
  %1114 = vmatmul.mubr.f32.gmra.mxu0 %v434
  %v1115 = vpop.f32.mrf.mxu0
  %v1116 = vadd.f32 0.0, %v1115
  %v1117 = vpop.f32.mrf.mxu0
  %1118 = vmatprep.mubr.f32.mxu0 0.0
  %1119 = vmatmul.mubr.f32.gmra.mxu0 %v437
  %v1120 = vpop.f32.mrf.mxu0
  %v1121 = vadd.f32 0.0, %v1120
  %v1122 = vpop.f32.mrf.mxu0
  %1123 = vmatprep.mubr.f32.mxu0 0.0
  %1124 = vmatmul.mubr.f32.gmra.mxu0 %v440
  %v1125 = vpop.f32.mrf.mxu0
  %v1126 = vadd.f32 0.0, %v1125
  %v1127 = vpop.f32.mrf.mxu0
  %1128 = vmatprep.mubr.f32.mxu0 0.0
  %1129 = vmatmul.mubr.f32.gmra.mxu0 %v443
  %v1130 = vpop.f32.mrf.mxu0
  %v1131 = vadd.f32 0.0, %v1130
  %v1132 = vpop.f32.mrf.mxu0
  %1133 = vmatprep.mubr.f32.mxu0 0.0
  %1134 = vmatmul.mubr.f32.gmra.mxu0 %v446
  %v1135 = vpop.f32.mrf.mxu0
  %v1136 = vadd.f32 0.0, %v1135
  %v1137 = vpop.f32.mrf.mxu0
  %1138 = vmatprep.mubr.f32.mxu0 0.0
  %1139 = vmatmul.mubr.f32.gmra.mxu0 %v449
  %v1140 = vpop.f32.mrf.mxu0
  %v1141 = vadd.f32 0.0, %v1140
  %v1142 = vpop.f32.mrf.mxu0
  %1143 = vmatprep.mubr.f32.mxu0 0.0
  %1144 = vmatmul.mubr.f32.gmra.mxu0 %v452
  %v1145 = vpop.f32.mrf.mxu0
  %v1146 = vadd.f32 0.0, %v1145
  %v1147 = vpop.f32.mrf.mxu0
  %1148 = vmatprep.mubr.f32.mxu0 0.0
  %1149 = vmatmul.mubr.f32.gmra.mxu0 %v455
  %v1150 = vpop.f32.mrf.mxu0
  %v1151 = vadd.f32 0.0, %v1150
  %v1152 = vpop.f32.mrf.mxu0
  %1153 = vmatprep.mubr.f32.mxu0 0.0
  %1154 = vmatmul.mubr.f32.gmra.mxu0 %v458
  %v1155 = vpop.f32.mrf.mxu0
  %v1156 = vadd.f32 0.0, %v1155
  %v1157 = vpop.f32.mrf.mxu0
  %1158 = vmatprep.mubr.f32.mxu0 0.0
  %1159 = vmatmul.mubr.f32.gmra.mxu0 %v461
  %v1160 = vpop.f32.mrf.mxu0
  %v1161 = vadd.f32 0.0, %v1160
  %v1162 = vpop.f32.mrf.mxu0
  %1163 = vmatprep.mubr.f32.mxu0 0.0
  %1164 = vmatmul.mubr.f32.gmra.mxu0 %v464
  %v1165 = vpop.f32.mrf.mxu0
  %v1166 = vadd.f32 0.0, %v1165
  %v1167 = vpop.f32.mrf.mxu0
  %1168 = vmatprep.mubr.f32.mxu0 0.0
  %1169 = vmatmul.mubr.f32.gmra.mxu0 %v467
  %v1170 = vpop.f32.mrf.mxu0
  %v1171 = vadd.f32 0.0, %v1170
  %v1172 = vpop.f32.mrf.mxu0
  %1173 = vmatprep.mubr.f32.mxu0 0.0
  %1174 = vmatmul.mubr.f32.gmra.mxu0 %v470
  %v1175 = vpop.f32.mrf.mxu0
  %v1176 = vadd.f32 0.0, %v1175
  %v1177 = vpop.f32.mrf.mxu0
  %1178 = vmatprep.mubr.f32.mxu0 0.0
  %1179 = vmatmul.mubr.f32.gmra.mxu0 %v473
  %v1180 = vpop.f32.mrf.mxu0
  %v1181 = vadd.f32 0.0, %v1180
  %v1182 = vpop.f32.mrf.mxu0
  %1183 = vmatprep.mubr.f32.mxu0 0.0
  %1184 = vmatmul.mubr.f32.gmra.mxu0 %v476
  %v1185 = vpop.f32.mrf.mxu0
  %v1186 = vadd.f32 0.0, %v1185
  %v1187 = vpop.f32.mrf.mxu0
  %1188 = vmatprep.mubr.f32.mxu0 0.0
  %1189 = vmatmul.mubr.f32.gmra.mxu0 %v479
  %v1190 = vpop.f32.mrf.mxu0
  %v1191 = vadd.f32 0.0, %v1190
  %v1192 = vpop.f32.mrf.mxu0
  %1193 = vmatprep.mubr.f32.mxu0 0.0
  %1194 = vmatmul.mubr.f32.gmra.mxu0 %v482
  %v1195 = vpop.f32.mrf.mxu0
  %v1196 = vadd.f32 0.0, %v1195
  %v1197 = vpop.f32.mrf.mxu0
  %1198 = vmatprep.mubr.f32.mxu0 0.0
  %1199 = vmatmul.mubr.f32.gmra.mxu0 %v485
  %v1200 = vpop.f32.mrf.mxu0
  %v1201 = vadd.f32 0.0, %v1200
  %v1202 = vpop.f32.mrf.mxu0
  %1203 = vmatprep.mubr.f32.mxu0 0.0
  %1204 = vmatmul.mubr.f32.gmra.mxu0 %v488
  %v1205 = vpop.f32.mrf.mxu0
  %v1206 = vadd.f32 0.0, %v1205
  %v1207 = vpop.f32.mrf.mxu0
  %1208 = vmatprep.mubr.f32.mxu0 0.0
  %1209 = vmatmul.mubr.f32.gmra.mxu0 %v491
  %v1210 = vpop.f32.mrf.mxu0
  %v1211 = vadd.f32 0.0, %v1210
  %v1212 = vpop.f32.mrf.mxu0
  %1213 = vmatprep.mubr.f32.mxu0 0.0
  %1214 = vmatmul.mubr.f32.gmra.mxu0 %v494
  %v1215 = vpop.f32.mrf.mxu0
  %v1216 = vadd.f32 0.0, %v1215
  %v1217 = vpop.f32.mrf.mxu0
  %1218 = vmatprep.mubr.f32.mxu0 0.0
  %1219 = vmatmul.mubr.f32.gmra.mxu0 %v497
  %v1220 = vpop.f32.mrf.mxu0
  %v1221 = vadd.f32 0.0, %v1220
  %v1222 = vpop.f32.mrf.mxu0
  %1223 = vmatprep.mubr.f32.mxu0 0.0
  %1224 = vmatmul.mubr.f32.gmra.mxu0 %v500
  %v1225 = vpop.f32.mrf.mxu0
  %v1226 = vadd.f32 0.0, %v1225
  %v1227 = vpop.f32.mrf.mxu0
  %1228 = vmatprep.mubr.f32.mxu0 0.0
  %1229 = vmatmul.mubr.f32.gmra.mxu0 %v503
  %v1230 = vpop.f32.mrf.mxu0
  %v1231 = vadd.f32 0.0, %v1230
  %v1232 = vpop.f32.mrf.mxu0
  %1233 = vmatprep.mubr.f32.mxu0 0.0
  %1234 = vmatmul.mubr.f32.gmra.mxu0 %v506
  %v1235 = vpop.f32.mrf.mxu0
  %v1236 = vadd.f32 0.0, %v1235
  %v1237 = vpop.f32.mrf.mxu0
  %1238 = vmatprep.mubr.f32.mxu0 0.0
  %1239 = vmatmul.mubr.f32.gmra.mxu0 %v509
  %v1240 = vpop.f32.mrf.mxu0
  %v1241 = vadd.f32 0.0, %v1240
  %v1242 = vpop.f32.mrf.mxu0
  %1243 = vmatprep.mubr.f32.mxu0 0.0
  %1244 = vmatmul.mubr.f32.gmra.mxu0 %v512
  %v1245 = vpop.f32.mrf.mxu0
  %v1246 = vadd.f32 0.0, %v1245
  %v1247 = vpop.f32.mrf.mxu0
  %1248 = vmatprep.mubr.f32.mxu0 0.0
  %1249 = vmatmul.mubr.f32.gmra.mxu0 %v515
  %v1250 = vpop.f32.mrf.mxu0
  %v1251 = vadd.f32 0.0, %v1250
  %v1252 = vpop.f32.mrf.mxu0
  %1253 = vmatprep.mubr.f32.mxu0 0.0
  %1254 = vmatmul.mubr.f32.gmra.mxu0 %v518
  %v1255 = vpop.f32.mrf.mxu0
  %v1256 = vadd.f32 0.0, %v1255
  %v1257 = vpop.f32.mrf.mxu0
  %1258 = vmatprep.mubr.f32.mxu0 0.0
  %1259 = vmatmul.mubr.f32.gmra.mxu0 %v521
  %v1260 = vpop.f32.mrf.mxu0
  %v1261 = vadd.f32 0.0, %v1260
  %v1262 = vpop.f32.mrf.mxu0
  %1263 = vmatprep.mubr.f32.mxu0 0.0
  %1264 = vmatmul.mubr.f32.gmra.mxu0 %v524
  %v1265 = vpop.f32.mrf.mxu0
  %v1266 = vadd.f32 0.0, %v1265
  %v1267 = vpop.f32.mrf.mxu0
  %1268 = vmatprep.mubr.f32.mxu0 0.0
  %1269 = vmatmul.mubr.f32.gmra.mxu0 %v527
  %v1270 = vpop.f32.mrf.mxu0
  %v1271 = vadd.f32 0.0, %v1270
  %v1272 = vpop.f32.mrf.mxu0
  %1273 = vmatprep.mubr.f32.mxu0 0.0
  %1274 = vmatmul.mubr.f32.gmra.mxu0 %v530
  %v1275 = vpop.f32.mrf.mxu0
  %v1276 = vadd.f32 0.0, %v1275
  %v1277 = vpop.f32.mrf.mxu0
  %1278 = vmatprep.mubr.f32.mxu0 0.0
  %1279 = vmatmul.mubr.f32.gmra.mxu0 %v533
  %v1280 = vpop.f32.mrf.mxu0
  %v1281 = vadd.f32 0.0, %v1280
  %v1282 = vpop.f32.mrf.mxu0
  %1283 = vmatprep.mubr.f32.mxu0 0.0
  %1284 = vmatmul.mubr.f32.gmra.mxu0 %v536
  %v1285 = vpop.f32.mrf.mxu0
  %v1286 = vadd.f32 0.0, %v1285
  %v1287 = vpop.f32.mrf.mxu0
  %1288 = vmatprep.mubr.f32.mxu0 0.0
  %1289 = vmatmul.mubr.f32.gmra.mxu0 %v539
  %v1290 = vpop.f32.mrf.mxu0
  %v1291 = vadd.f32 0.0, %v1290
  %v1292 = vpop.f32.mrf.mxu0
  %1293 = vmatprep.mubr.f32.mxu0 0.0
  %1294 = vmatmul.mubr.f32.gmra.mxu0 %v542
  %v1295 = vpop.f32.mrf.mxu0
  %v1296 = vadd.f32 0.0, %v1295
  %v1297 = vpop.f32.mrf.mxu0
  %1298 = vmatprep.mubr.f32.mxu0 0.0
  %1299 = vmatmul.mubr.f32.gmra.mxu0 %v545
  %v1300 = vpop.f32.mrf.mxu0
  %v1301 = vadd.f32 0.0, %v1300
  %v1302 = vpop.f32.mrf.mxu0
  %1303 = vmatprep.mubr.f32.mxu0 0.0
  %1304 = vmatmul.mubr.f32.gmra.mxu0 %v548
  %v1305 = vpop.f32.mrf.mxu0
  %v1306 = vadd.f32 0.0, %v1305
  %v1307 = vpop.f32.mrf.mxu0
  %1308 = vmatprep.mubr.f32.mxu0 0.0
  %1309 = vmatmul.mubr.f32.gmra.mxu0 %v551
  %v1310 = vpop.f32.mrf.mxu0
  %v1311 = vadd.f32 0.0, %v1310
  %v1312 = vpop.f32.mrf.mxu0
  %1313 = vmatprep.mubr.f32.mxu0 0.0
  %1314 = vmatmul.mubr.f32.gmra.mxu0 %v554
  %v1315 = vpop.f32.mrf.mxu0
  %v1316 = vadd.f32 0.0, %v1315
  %v1317 = vpop.f32.mrf.mxu0
  %1318 = vmatprep.mubr.f32.mxu0 0.0
  %1319 = vmatmul.mubr.f32.gmra.mxu0 %v557
  %v1320 = vpop.f32.mrf.mxu0
  %v1321 = vadd.f32 0.0, %v1320
  %v1322 = vpop.f32.mrf.mxu0
  %1323 = vmatprep.mubr.f32.mxu0 0.0
  %1324 = vmatmul.mubr.f32.gmra.mxu0 %v560
  %v1325 = vpop.f32.mrf.mxu0
  %v1326 = vadd.f32 0.0, %v1325
  %v1327 = vpop.f32.mrf.mxu0
  %1328 = vmatprep.mubr.f32.mxu0 0.0
  %1329 = vmatmul.mubr.f32.gmra.mxu0 %v563
  %v1330 = vpop.f32.mrf.mxu0
  %v1331 = vadd.f32 0.0, %v1330
  %v1332 = vpop.f32.mrf.mxu0
  %1333 = vmatprep.mubr.f32.mxu0 0.0
  %1334 = vmatmul.mubr.f32.gmra.mxu0 %v566
  %v1335 = vpop.f32.mrf.mxu0
  %v1336 = vadd.f32 0.0, %v1335
  %v1337 = vpop.f32.mrf.mxu0
  %1338 = vmatprep.mubr.f32.mxu0 0.0
  %1339 = vmatmul.mubr.f32.gmra.mxu0 %v569
  %v1340 = vpop.f32.mrf.mxu0
  %v1341 = vadd.f32 0.0, %v1340
  %v1342 = vpop.f32.mrf.mxu0
  %1343 = vmatprep.mubr.f32.mxu0 0.0
  %1344 = vmatmul.mubr.f32.gmra.mxu0 %v572
  %v1345 = vpop.f32.mrf.mxu0
  %v1346 = vadd.f32 0.0, %v1345
  %v1347 = vpop.f32.mrf.mxu0
  %1348 = vmatprep.mubr.f32.mxu0 0.0
  %1349 = vmatmul.mubr.f32.gmra.mxu0 %v575
  %v1350 = vpop.f32.mrf.mxu0
  %v1351 = vadd.f32 0.0, %v1350
  %v1352 = vpop.f32.mrf.mxu0
  %1353 = vmatprep.mubr.f32.mxu0 0.0
  %1354 = vmatmul.mubr.f32.gmra.mxu0 %v578
  %v1355 = vpop.f32.mrf.mxu0
  %v1356 = vadd.f32 0.0, %v1355
  %v1357 = vpop.f32.mrf.mxu0
  %1358 = vmatprep.mubr.f32.mxu0 0.0
  %1359 = vmatmul.mubr.f32.gmra.mxu0 %v581
  %v1360 = vpop.f32.mrf.mxu0
  %v1361 = vadd.f32 0.0, %v1360
  %v1362 = vpop.f32.mrf.mxu0
  %1363 = vmatprep.mubr.f32.mxu0 0.0
  %1364 = vmatmul.mubr.f32.gmra.mxu0 %v584
  %v1365 = vpop.f32.mrf.mxu0
  %v1366 = vadd.f32 0.0, %v1365
  %v1367 = vpop.f32.mrf.mxu0
  %1368 = vmatprep.mubr.f32.mxu0 0.0
  %1369 = vmatmul.mubr.f32.gmra.mxu0 %v587
  %v1370 = vpop.f32.mrf.mxu0
  %v1371 = vadd.f32 0.0, %v1370
  %v1372 = vpop.f32.mrf.mxu0
  %1373 = vmatprep.mubr.f32.mxu0 0.0
  %1374 = vmatmul.mubr.f32.gmra.mxu0 %v590
  %v1375 = vpop.f32.mrf.mxu0
  %v1376 = vadd.f32 0.0, %v1375
  %v1377 = vpop.f32.mrf.mxu0
  %1378 = vmatprep.mubr.f32.mxu0 0.0
  %1379 = vmatmul.mubr.f32.gmra.mxu0 %v593
  %v1380 = vpop.f32.mrf.mxu0
  %v1381 = vadd.f32 0.0, %v1380
  %v1382 = vpop.f32.mrf.mxu0
  %1383 = vdwg.mxu0
  %vm1384 = vcmask 80896
  %v1385 = vsel %vm1384, %v666, -inf
  %v1386 = vsel %vm1384, %v846, -inf
  %v1387 = vmax.f32 %v1385, %v1386
  %v1388 = vsel %vm1384, %v1026, -inf
  %v1389 = vmax.f32 %v1387, %v1388
  %v1390 = vsel %vm1384, %v1206, -inf
  %v1391 = vmax.f32 %v1389, %v1390
  %v1392 = vsel %vm1384, %v671, -inf
  %v1393 = vsel %vm1384, %v851, -inf
  %v1394 = vmax.f32 %v1392, %v1393
  %v1395 = vsel %vm1384, %v1031, -inf
  %v1396 = vmax.f32 %v1394, %v1395
  %v1397 = vsel %vm1384, %v1211, -inf
  %v1398 = vmax.f32 %v1396, %v1397
  %v1399 = vsel %vm1384, %v676, -inf
  %v1400 = vsel %vm1384, %v856, -inf
  %v1401 = vmax.f32 %v1399, %v1400
  %v1402 = vsel %vm1384, %v1036, -inf
  %v1403 = vmax.f32 %v1401, %v1402
  %v1404 = vsel %vm1384, %v1216, -inf
  %v1405 = vmax.f32 %v1403, %v1404
  %v1406 = vsel %vm1384, %v681, -inf
  %v1407 = vsel %vm1384, %v861, -inf
  %v1408 = vmax.f32 %v1406, %v1407
  %v1409 = vsel %vm1384, %v1041, -inf
  %v1410 = vmax.f32 %v1408, %v1409
  %v1411 = vsel %vm1384, %v1221, -inf
  %v1412 = vmax.f32 %v1410, %v1411
  %v1413 = vsel %vm1384, %v686, -inf
  %v1414 = vsel %vm1384, %v866, -inf
  %v1415 = vmax.f32 %v1413, %v1414
  %v1416 = vsel %vm1384, %v1046, -inf
  %v1417 = vmax.f32 %v1415, %v1416
  %v1418 = vsel %vm1384, %v1226, -inf
  %v1419 = vmax.f32 %v1417, %v1418
  %v1420 = vsel %vm1384, %v691, -inf
  %v1421 = vsel %vm1384, %v871, -inf
  %v1422 = vmax.f32 %v1420, %v1421
  %v1423 = vsel %vm1384, %v1051, -inf
  %v1424 = vmax.f32 %v1422, %v1423
  %v1425 = vsel %vm1384, %v1231, -inf
  %v1426 = vmax.f32 %v1424, %v1425
  %v1427 = vsel %vm1384, %v696, -inf
  %v1428 = vsel %vm1384, %v876, -inf
  %v1429 = vmax.f32 %v1427, %v1428
  %v1430 = vsel %vm1384, %v1056, -inf
  %v1431 = vmax.f32 %v1429, %v1430
  %v1432 = vsel %vm1384, %v1236, -inf
  %v1433 = vmax.f32 %v1431, %v1432
  %v1434 = vsel %vm1384, %v701, -inf
  %v1435 = vsel %vm1384, %v881, -inf
  %v1436 = vmax.f32 %v1434, %v1435
  %v1437 = vsel %vm1384, %v1061, -inf
  %v1438 = vmax.f32 %v1436, %v1437
  %v1439 = vsel %vm1384, %v1241, -inf
  %v1440 = vmax.f32 %v1438, %v1439
  %v1441 = vsel %vm1384, %v706, -inf
  %v1442 = vsel %vm1384, %v886, -inf
  %v1443 = vmax.f32 %v1441, %v1442
  %v1444 = vsel %vm1384, %v1066, -inf
  %v1445 = vmax.f32 %v1443, %v1444
  %v1446 = vsel %vm1384, %v1246, -inf
  %v1447 = vmax.f32 %v1445, %v1446
  %v1448 = vsel %vm1384, %v711, -inf
  %v1449 = vsel %vm1384, %v891, -inf
  %v1450 = vmax.f32 %v1448, %v1449
  %v1451 = vsel %vm1384, %v1071, -inf
  %v1452 = vmax.f32 %v1450, %v1451
  %v1453 = vsel %vm1384, %v1251, -inf
  %v1454 = vmax.f32 %v1452, %v1453
  %v1455 = vsel %vm1384, %v716, -inf
  %v1456 = vsel %vm1384, %v896, -inf
  %v1457 = vmax.f32 %v1455, %v1456
  %v1458 = vsel %vm1384, %v1076, -inf
  %v1459 = vmax.f32 %v1457, %v1458
  %v1460 = vsel %vm1384, %v1256, -inf
  %v1461 = vmax.f32 %v1459, %v1460
  %v1462 = vsel %vm1384, %v721, -inf
  %v1463 = vsel %vm1384, %v901, -inf
  %v1464 = vmax.f32 %v1462, %v1463
  %v1465 = vsel %vm1384, %v1081, -inf
  %v1466 = vmax.f32 %v1464, %v1465
  %v1467 = vsel %vm1384, %v1261, -inf
  %v1468 = vmax.f32 %v1466, %v1467
  %v1469 = vsel %vm1384, %v726, -inf
  %v1470 = vsel %vm1384, %v906, -inf
  %v1471 = vmax.f32 %v1469, %v1470
  %v1472 = vsel %vm1384, %v1086, -inf
  %v1473 = vmax.f32 %v1471, %v1472
  %v1474 = vsel %vm1384, %v1266, -inf
  %v1475 = vmax.f32 %v1473, %v1474
  %v1476 = vsel %vm1384, %v731, -inf
  %v1477 = vsel %vm1384, %v911, -inf
  %v1478 = vmax.f32 %v1476, %v1477
  %v1479 = vsel %vm1384, %v1091, -inf
  %v1480 = vmax.f32 %v1478, %v1479
  %v1481 = vsel %vm1384, %v1271, -inf
  %v1482 = vmax.f32 %v1480, %v1481
  %v1483 = vsel %vm1384, %v736, -inf
  %v1484 = vsel %vm1384, %v916, -inf
  %v1485 = vmax.f32 %v1483, %v1484
  %v1486 = vsel %vm1384, %v1096, -inf
  %v1487 = vmax.f32 %v1485, %v1486
  %v1488 = vsel %vm1384, %v1276, -inf
  %v1489 = vmax.f32 %v1487, %v1488
  %v1490 = vsel %vm1384, %v741, -inf
  %v1491 = vsel %vm1384, %v921, -inf
  %v1492 = vmax.f32 %v1490, %v1491
  %v1493 = vsel %vm1384, %v1101, -inf
  %v1494 = vmax.f32 %v1492, %v1493
  %v1495 = vsel %vm1384, %v1281, -inf
  %v1496 = vmax.f32 %v1494, %v1495
  %v1497 = vsel %vm1384, %v746, -inf
  %v1498 = vsel %vm1384, %v926, -inf
  %v1499 = vmax.f32 %v1497, %v1498
  %v1500 = vsel %vm1384, %v1106, -inf
  %v1501 = vmax.f32 %v1499, %v1500
  %v1502 = vsel %vm1384, %v1286, -inf
  %v1503 = vmax.f32 %v1501, %v1502
  %v1504 = vsel %vm1384, %v751, -inf
  %v1505 = vsel %vm1384, %v931, -inf
  %v1506 = vmax.f32 %v1504, %v1505
  %v1507 = vsel %vm1384, %v1111, -inf
  %v1508 = vmax.f32 %v1506, %v1507
  %v1509 = vsel %vm1384, %v1291, -inf
  %v1510 = vmax.f32 %v1508, %v1509
  %v1511 = vsel %vm1384, %v756, -inf
  %v1512 = vsel %vm1384, %v936, -inf
  %v1513 = vmax.f32 %v1511, %v1512
  %v1514 = vsel %vm1384, %v1116, -inf
  %v1515 = vmax.f32 %v1513, %v1514
  %v1516 = vsel %vm1384, %v1296, -inf
  %v1517 = vmax.f32 %v1515, %v1516
  %v1518 = vsel %vm1384, %v761, -inf
  %v1519 = vsel %vm1384, %v941, -inf
  %v1520 = vmax.f32 %v1518, %v1519
  %v1521 = vsel %vm1384, %v1121, -inf
  %v1522 = vmax.f32 %v1520, %v1521
  %v1523 = vsel %vm1384, %v1301, -inf
  %v1524 = vmax.f32 %v1522, %v1523
  %v1525 = vsel %vm1384, %v766, -inf
  %v1526 = vsel %vm1384, %v946, -inf
  %v1527 = vmax.f32 %v1525, %v1526
  %v1528 = vsel %vm1384, %v1126, -inf
  %v1529 = vmax.f32 %v1527, %v1528
  %v1530 = vsel %vm1384, %v1306, -inf
  %v1531 = vmax.f32 %v1529, %v1530
  %v1532 = vsel %vm1384, %v771, -inf
  %v1533 = vsel %vm1384, %v951, -inf
  %v1534 = vmax.f32 %v1532, %v1533
  %v1535 = vsel %vm1384, %v1131, -inf
  %v1536 = vmax.f32 %v1534, %v1535
  %v1537 = vsel %vm1384, %v1311, -inf
  %v1538 = vmax.f32 %v1536, %v1537
  %v1539 = vsel %vm1384, %v776, -inf
  %v1540 = vsel %vm1384, %v956, -inf
  %v1541 = vmax.f32 %v1539, %v1540
  %v1542 = vsel %vm1384, %v1136, -inf
  %v1543 = vmax.f32 %v1541, %v1542
  %v1544 = vsel %vm1384, %v1316, -inf
  %v1545 = vmax.f32 %v1543, %v1544
  %v1546 = vsel %vm1384, %v781, -inf
  %v1547 = vsel %vm1384, %v961, -inf
  %v1548 = vmax.f32 %v1546, %v1547
  %v1549 = vsel %vm1384, %v1141, -inf
  %v1550 = vmax.f32 %v1548, %v1549
  %v1551 = vsel %vm1384, %v1321, -inf
  %v1552 = vmax.f32 %v1550, %v1551
  %v1553 = vsel %vm1384, %v786, -inf
  %v1554 = vsel %vm1384, %v966, -inf
  %v1555 = vmax.f32 %v1553, %v1554
  %v1556 = vsel %vm1384, %v1146, -inf
  %v1557 = vmax.f32 %v1555, %v1556
  %v1558 = vsel %vm1384, %v1326, -inf
  %v1559 = vmax.f32 %v1557, %v1558
  %v1560 = vsel %vm1384, %v791, -inf
  %v1561 = vsel %vm1384, %v971, -inf
  %v1562 = vmax.f32 %v1560, %v1561
  %v1563 = vsel %vm1384, %v1151, -inf
  %v1564 = vmax.f32 %v1562, %v1563
  %v1565 = vsel %vm1384, %v1331, -inf
  %v1566 = vmax.f32 %v1564, %v1565
  %v1567 = vsel %vm1384, %v796, -inf
  %v1568 = vsel %vm1384, %v976, -inf
  %v1569 = vmax.f32 %v1567, %v1568
  %v1570 = vsel %vm1384, %v1156, -inf
  %v1571 = vmax.f32 %v1569, %v1570
  %v1572 = vsel %vm1384, %v1336, -inf
  %v1573 = vmax.f32 %v1571, %v1572
  %v1574 = vsel %vm1384, %v801, -inf
  %v1575 = vsel %vm1384, %v981, -inf
  %v1576 = vmax.f32 %v1574, %v1575
  %v1577 = vsel %vm1384, %v1161, -inf
  %v1578 = vmax.f32 %v1576, %v1577
  %v1579 = vsel %vm1384, %v1341, -inf
  %v1580 = vmax.f32 %v1578, %v1579
  %v1581 = vsel %vm1384, %v806, -inf
  %v1582 = vsel %vm1384, %v986, -inf
  %v1583 = vmax.f32 %v1581, %v1582
  %v1584 = vsel %vm1384, %v1166, -inf
  %v1585 = vmax.f32 %v1583, %v1584
  %v1586 = vsel %vm1384, %v1346, -inf
  %v1587 = vmax.f32 %v1585, %v1586
  %v1588 = vsel %vm1384, %v811, -inf
  %v1589 = vsel %vm1384, %v991, -inf
  %v1590 = vmax.f32 %v1588, %v1589
  %v1591 = vsel %vm1384, %v1171, -inf
  %v1592 = vmax.f32 %v1590, %v1591
  %v1593 = vsel %vm1384, %v1351, -inf
  %v1594 = vmax.f32 %v1592, %v1593
  %v1595 = vsel %vm1384, %v816, -inf
  %v1596 = vsel %vm1384, %v996, -inf
  %v1597 = vmax.f32 %v1595, %v1596
  %v1598 = vsel %vm1384, %v1176, -inf
  %v1599 = vmax.f32 %v1597, %v1598
  %v1600 = vsel %vm1384, %v1356, -inf
  %v1601 = vmax.f32 %v1599, %v1600
  %v1602 = vsel %vm1384, %v821, -inf
  %v1603 = vsel %vm1384, %v1001, -inf
  %v1604 = vmax.f32 %v1602, %v1603
  %v1605 = vsel %vm1384, %v1181, -inf
  %v1606 = vmax.f32 %v1604, %v1605
  %v1607 = vsel %vm1384, %v1361, -inf
  %v1608 = vmax.f32 %v1606, %v1607
  %v1609 = vsel %vm1384, %v826, -inf
  %v1610 = vsel %vm1384, %v1006, -inf
  %v1611 = vmax.f32 %v1609, %v1610
  %v1612 = vsel %vm1384, %v1186, -inf
  %v1613 = vmax.f32 %v1611, %v1612
  %v1614 = vsel %vm1384, %v1366, -inf
  %v1615 = vmax.f32 %v1613, %v1614
  %v1616 = vsel %vm1384, %v831, -inf
  %v1617 = vsel %vm1384, %v1011, -inf
  %v1618 = vmax.f32 %v1616, %v1617
  %v1619 = vsel %vm1384, %v1191, -inf
  %v1620 = vmax.f32 %v1618, %v1619
  %v1621 = vsel %vm1384, %v1371, -inf
  %v1622 = vmax.f32 %v1620, %v1621
  %v1623 = vsel %vm1384, %v836, -inf
  %v1624 = vsel %vm1384, %v1016, -inf
  %v1625 = vmax.f32 %v1623, %v1624
  %v1626 = vsel %vm1384, %v1196, -inf
  %v1627 = vmax.f32 %v1625, %v1626
  %v1628 = vsel %vm1384, %v1376, -inf
  %v1629 = vmax.f32 %v1627, %v1628
  %v1630 = vsel %vm1384, %v841, -inf
  %v1631 = vsel %vm1384, %v1021, -inf
  %v1632 = vmax.f32 %v1630, %v1631
  %v1633 = vsel %vm1384, %v1201, -inf
  %v1634 = vmax.f32 %v1632, %v1633
  %v1635 = vsel %vm1384, %v1381, -inf
  %v1636 = vmax.f32 %v1634, %v1635
  %v1637 = vld [vmem:[%s2] sm:$0x1]
  %v1639 = vlaneseq
  %v1640 = vshrl.u32 %v1639, 7
  %v1641 = vsub.s32 0, %v1640
  %v1642 = vrot.slane %v1637, %v1641
  %v1644 = vadd.f32 %v1391, %v1642
  %v1645 = vadd.f32 %v1398, %v1642
  %v1646 = vadd.f32 %v1405, %v1642
  %v1647 = vadd.f32 %v1412, %v1642
  %v1648 = vadd.f32 %v1419, %v1642
  %v1649 = vadd.f32 %v1426, %v1642
  %v1650 = vadd.f32 %v1433, %v1642
  %v1651 = vadd.f32 %v1440, %v1642
  %v1652 = vadd.f32 %v1447, %v1642
  %v1653 = vadd.f32 %v1454, %v1642
  %v1654 = vadd.f32 %v1461, %v1642
  %v1655 = vadd.f32 %v1468, %v1642
  %v1656 = vadd.f32 %v1475, %v1642
  %v1657 = vadd.f32 %v1482, %v1642
  %v1658 = vadd.f32 %v1489, %v1642
  %v1659 = vadd.f32 %v1496, %v1642
  %v1660 = vadd.f32 %v1503, %v1642
  %v1661 = vadd.f32 %v1510, %v1642
  %v1662 = vadd.f32 %v1517, %v1642
  %v1663 = vadd.f32 %v1524, %v1642
  %v1664 = vadd.f32 %v1531, %v1642
  %v1665 = vadd.f32 %v1538, %v1642
  %v1666 = vadd.f32 %v1545, %v1642
  %v1667 = vadd.f32 %v1552, %v1642
  %v1668 = vadd.f32 %v1559, %v1642
  %v1669 = vadd.f32 %v1566, %v1642
  %v1670 = vadd.f32 %v1573, %v1642
  %v1671 = vadd.f32 %v1580, %v1642
  %v1672 = vadd.f32 %v1587, %v1642
  %v1673 = vadd.f32 %v1594, %v1642
  %v1674 = vadd.f32 %v1601, %v1642
  %v1675 = vadd.f32 %v1608, %v1642
  %v1676 = vadd.f32 %v1615, %v1642
  %v1677 = vadd.f32 %v1622, %v1642
  %v1678 = vadd.f32 %v1629, %v1642
  %v1679 = vadd.f32 %v1636, %v1642
  %v1680 = vmax.f32 %v1644, 0.0
  %v1681 = vmax.f32 %v1645, 0.0
  %v1682 = vmax.f32 %v1646, 0.0
  %v1683 = vmax.f32 %v1647, 0.0
  %v1684 = vmax.f32 %v1648, 0.0
  %v1685 = vmax.f32 %v1649, 0.0
  %v1686 = vmax.f32 %v1650, 0.0
  %v1687 = vmax.f32 %v1651, 0.0
  %v1688 = vmax.f32 %v1652, 0.0
  %v1689 = vmax.f32 %v1653, 0.0
  %v1690 = vmax.f32 %v1654, 0.0
  %v1691 = vmax.f32 %v1655, 0.0
  %v1692 = vmax.f32 %v1656, 0.0
  %v1693 = vmax.f32 %v1657, 0.0
  %v1694 = vmax.f32 %v1658, 0.0
  %v1695 = vmax.f32 %v1659, 0.0
  %v1696 = vmax.f32 %v1660, 0.0
  %v1697 = vmax.f32 %v1661, 0.0
  %v1698 = vmax.f32 %v1662, 0.0
  %v1699 = vmax.f32 %v1663, 0.0
  %v1700 = vmax.f32 %v1664, 0.0
  %v1701 = vmax.f32 %v1665, 0.0
  %v1702 = vmax.f32 %v1666, 0.0
  %v1703 = vmax.f32 %v1667, 0.0
  %v1704 = vmax.f32 %v1668, 0.0
  %v1705 = vmax.f32 %v1669, 0.0
  %v1706 = vmax.f32 %v1670, 0.0
  %v1707 = vmax.f32 %v1671, 0.0
  %v1708 = vmax.f32 %v1672, 0.0
  %v1709 = vmax.f32 %v1673, 0.0
  %v1710 = vmax.f32 %v1674, 0.0
  %v1711 = vmax.f32 %v1675, 0.0
  %v1712 = vmax.f32 %v1676, 0.0
  %v1713 = vmax.f32 %v1677, 0.0
  %v1714 = vmax.f32 %v1678, 0.0
  %v1715 = vmax.f32 %v1679, 0.0
  %1716 = vst.msk [vmem:[%s3] sm:$0xff] %vm1384, %v1680
  %1717 = vst.msk [vmem:[%s3 + $0x8] sm:$0xff] %vm1384, %v1681
  %1718 = vst.msk [vmem:[%s3 + $0x10] sm:$0xff] %vm1384, %v1682
  %1719 = vst.msk [vmem:[%s3 + $0x18] sm:$0xff] %vm1384, %v1683
  %1720 = vst.msk [vmem:[%s3 + $0x20] sm:$0xff] %vm1384, %v1684
  %1721 = vst.msk [vmem:[%s3 + $0x28] sm:$0xff] %vm1384, %v1685
  %1722 = vst.msk [vmem:[%s3 + $0x30] sm:$0xff] %vm1384, %v1686
  %1723 = vst.msk [vmem:[%s3 + $0x38] sm:$0xff] %vm1384, %v1687
  %1724 = vst.msk [vmem:[%s3 + $0x40] sm:$0xff] %vm1384, %v1688
  %1725 = vst.msk [vmem:[%s3 + $0x48] sm:$0xff] %vm1384, %v1689
  %1726 = vst.msk [vmem:[%s3 + $0x50] sm:$0xff] %vm1384, %v1690
  %1727 = vst.msk [vmem:[%s3 + $0x58] sm:$0xff] %vm1384, %v1691
  %1728 = vst.msk [vmem:[%s3 + $0x60] sm:$0xff] %vm1384, %v1692
  %1729 = vst.msk [vmem:[%s3 + $0x68] sm:$0xff] %vm1384, %v1693
  %1730 = vst.msk [vmem:[%s3 + $0x70] sm:$0xff] %vm1384, %v1694
  %1731 = vst.msk [vmem:[%s3 + $0x78] sm:$0xff] %vm1384, %v1695
  %1732 = vst.msk [vmem:[%s3 + $0x80] sm:$0xff] %vm1384, %v1696
  %1733 = vst.msk [vmem:[%s3 + $0x88] sm:$0xff] %vm1384, %v1697
  %1734 = vst.msk [vmem:[%s3 + $0x90] sm:$0xff] %vm1384, %v1698
  %1735 = vst.msk [vmem:[%s3 + $0x98] sm:$0xff] %vm1384, %v1699
  %1736 = vst.msk [vmem:[%s3 + $0xa0] sm:$0xff] %vm1384, %v1700
  %1737 = vst.msk [vmem:[%s3 + $0xa8] sm:$0xff] %vm1384, %v1701
  %1738 = vst.msk [vmem:[%s3 + $0xb0] sm:$0xff] %vm1384, %v1702
  %1739 = vst.msk [vmem:[%s3 + $0xb8] sm:$0xff] %vm1384, %v1703
  %1740 = vst.msk [vmem:[%s3 + $0xc0] sm:$0xff] %vm1384, %v1704
  %1741 = vst.msk [vmem:[%s3 + $0xc8] sm:$0xff] %vm1384, %v1705
  %1742 = vst.msk [vmem:[%s3 + $0xd0] sm:$0xff] %vm1384, %v1706
  %1743 = vst.msk [vmem:[%s3 + $0xd8] sm:$0xff] %vm1384, %v1707
  %1744 = vst.msk [vmem:[%s3 + $0xe0] sm:$0xff] %vm1384, %v1708
  %1745 = vst.msk [vmem:[%s3 + $0xe8] sm:$0xff] %vm1384, %v1709
  %1746 = vst.msk [vmem:[%s3 + $0xf0] sm:$0xff] %vm1384, %v1710
  %1747 = vst.msk [vmem:[%s3 + $0xf8] sm:$0xff] %vm1384, %v1711
  %1748 = vst.msk [vmem:[%s3 + $0x100] sm:$0xff] %vm1384, %v1712
  %1749 = vst.msk [vmem:[%s3 + $0x108] sm:$0xff] %vm1384, %v1713
  %1750 = vst.msk [vmem:[%s3 + $0x110] sm:$0xff] %vm1384, %v1714
  %1751 = vst.msk [vmem:[%s3 + $0x118] sm:$0xff] %vm1384, %v1715
  // Predicated region
  $region14: #{digit_forward.3} parent=0 // pred_check
    _
  $region15: #{digit_forward.3} parent=0 // pred_check_branch
    %1753 = sbr.rel (0) target = $region17
  $region16: #{digit_forward.3} parent=0 // pred_region
    _
  $region17: #{digit_forward.3} parent=0 // pred_fallthru
    _
  // Predicated region
  $region18: #{digit_forward.3} parent=0 // pred_check
    _
  $region19: #{digit_forward.3} parent=0 // pred_check_branch
    %1755 = sbr.rel (0) target = $region21
  $region20: #{digit_forward.3} parent=0 // pred_region
    _
  $region21: #{digit_forward.3} parent=0 // pred_fallthru
    _

// kernel: digit_forward.5
$region0: #{digit_forward.5}
  #allocation0 [shape = 'u32[]', space=smem, size = 0x4, offset = 0x4, fixed_abs, tag = 'smem constant byte address 0x4 - core index']
  #allocation1 [shape = 'u32[144,128]{1,0:T(1,128)}', space=vmem, size = 0x12000, scoped, tag = 'internal scratch']
  %s0 = inlined_call_operand.vmem [shape: f32[2,2000], index: 0, kind: input, shape index: {}]
  %s1 = inlined_call_operand.vmem [shape: f32[2000,500], index: 1, kind: input, shape index: {}]
  %s2 = inlined_call_operand.vmem [shape: f32[1,500], index: 2, kind: input, shape index: {}]
  %s3 = inlined_call_operand.vmem [shape: f32[500,10], index: 3, kind: input, shape index: {}]
  %s4 = inlined_call_operand.vmem [shape: f32[1,10], index: 4, kind: input, shape index: {}]
  %s5 = inlined_call_operand.hbm [shape: f32[2,10], index: 5, kind: output, shape index: {}]
  %s6 = sld [smem:[#allocation0]]
  $region30: #{digit_forward.5} parent=0
    _
  %s8 = ssub.s32 1, %s6
  %s9 = scalar_select 0, %s8, %s6
  $region1: #{digit_forward.5} parent=0
    #allocation2 [shape = 'u8[1024]{0}', space=vmem, size = 0x400, scoped, tag = 'output window, operand 0, single buffered']
    #allocation3 [shape = 's32[1]{0}', space=sflag, size = 0x4, scoped, tag = 'scoped memory for digit_forward.5']
    %10 = vsyncpa [#allocation3], 0
    // Predicated region
    $region2: #{digit_forward.5} parent=1 // pred_check
      _
    $region3: #{digit_forward.5} parent=1 // pred_check_branch
      %12 = sbr.rel (0) target = $region5
    $region4: #{digit_forward.5} parent=1 // pred_region
      _
    $region5: #{digit_forward.5} parent=1 // pred_fallthru
      _
    // Predicated region
    $region6: #{digit_forward.5} parent=1 // pred_check
      _
    $region7: #{digit_forward.5} parent=1 // pred_check_branch
      %14 = sbr.rel (0) target = $region9
    $region8: #{digit_forward.5} parent=1 // pred_region
      _
    $region9: #{digit_forward.5} parent=1 // pred_fallthru
      _
    // Predicated region
    $region10: #{digit_forward.5} parent=1 // pred_check
      _
    $region11: #{digit_forward.5} parent=1 // pred_check_branch
      %16 = sbr.rel (0) target = $region13
    $region12: #{digit_forward.5} parent=1 // pred_region
      _
    $region13: #{digit_forward.5} parent=1 // pred_fallthru
      _
    // Predicated region
    $region14: #{digit_forward.5} parent=1 // pred_check
      _
    $region15: #{digit_forward.5} parent=1 // pred_check_branch
      %18 = sbr.rel (0) target = $region17
    $region16: #{digit_forward.5} parent=1 // pred_region
      _
    $region17: #{digit_forward.5} parent=1 // pred_fallthru
      _
    // Predicated region
    $region18: #{digit_forward.5} parent=1 // pred_check
      _
    $region19: #{digit_forward.5} parent=1 // pred_check_branch
      %20 = sbr.rel (0) target = $region21
    $region20: #{digit_forward.5} parent=1 // pred_region
      _
    $region21: #{digit_forward.5} parent=1 // pred_fallthru
      _
    %v21 = vld [vmem:[%s0] sm:$0xff]
    %v22 = vld [vmem:[%s0 + $0x8] sm:$0xff]
    %v23 = vld [vmem:[%s0 + $0x10] sm:$0xff]
    %v24 = vld [vmem:[%s0 + $0x18] sm:$0xff]
    %v25 = vld [vmem:[%s1] sm:$0xff]
    %v26 = vld [vmem:[%s1 + $0x8] sm:$0xff]
    %v27 = vld [vmem:[%s1 + $0x10] sm:$0xff]
    %v28 = vld [vmem:[%s1 + $0x18] sm:$0xff]
    %v29 = vld [vmem:[%s1 + $0x20] sm:$0xff]
    %v30 = vld [vmem:[%s1 + $0x28] sm:$0xff]
    %v31 = vld [vmem:[%s1 + $0x30] sm:$0xff]
    %v32 = vld [vmem:[%s1 + $0x38] sm:$0xff]
    %v33 = vld [vmem:[%s1 + $0x40] sm:$0xff]
    %v34 = vld [vmem:[%s1 + $0x48] sm:$0xff]
    %v35 = vld [vmem:[%s1 + $0x50] sm:$0xff]
    %v36 = vld [vmem:[%s1 + $0x58] sm:$0xff]
    %v37 = vld [vmem:[%s1 + $0x60] sm:$0xff]
    %v38 = vld [vmem:[%s1 + $0x68] sm:$0xff]
    %v39 = vld [vmem:[%s1 + $0x70] sm:$0xff]
    %v40 = vld [vmem:[%s1 + $0x78] sm:$0xff]
    %v41 = vld [vmem:[%s1 + $0x80] sm:$0xff]
    %v42 = vld [vmem:[%s1 + $0x88] sm:$0xff]
    %v43 = vld [vmem:[%s1 + $0x90] sm:$0xff]
    %v44 = vld [vmem:[%s1 + $0x98] sm:$0xff]
    %v45 = vld [vmem:[%s1 + $0xa0] sm:$0xff]
    %v46 = vld [vmem:[%s1 + $0xa8] sm:$0xff]
    %v47 = vld [vmem:[%s1 + $0xb0] sm:$0xff]
    %v48 = vld [vmem:[%s1 + $0xb8] sm:$0xff]
    %v49 = vld [vmem:[%s1 + $0xc0] sm:$0xff]
    %v50 = vld [vmem:[%s1 + $0xc8] sm:$0xff]
    %v51 = vld [vmem:[%s1 + $0xd0] sm:$0xff]
    %v52 = vld [vmem:[%s1 + $0xd8] sm:$0xff]
    %v53 = vld [vmem:[%s1 + $0xe0] sm:$0xff]
    %v54 = vld [vmem:[%s1 + $0xe8] sm:$0xff]
    %v55 = vld [vmem:[%s1 + $0xf0] sm:$0xff]
    %v56 = vld [vmem:[%s1 + $0xf8] sm:$0xff]
    %v57 = vld [vmem:[%s1 + $0x100] sm:$0xff]
    %v58 = vld [vmem:[%s1 + $0x108] sm:$0xff]
    %v59 = vld [vmem:[%s1 + $0x110] sm:$0xff]
    %v60 = vld [vmem:[%s1 + $0x118] sm:$0xff]
    %v61 = vld [vmem:[%s1 + $0x120] sm:$0xff]
    %v62 = vld [vmem:[%s1 + $0x128] sm:$0xff]
    %v63 = vld [vmem:[%s1 + $0x130] sm:$0xff]
    %v64 = vld [vmem:[%s1 + $0x138] sm:$0xff]
    %v65 = vld [vmem:[%s1 + $0x140] sm:$0xff]
    %v66 = vld [vmem:[%s1 + $0x148] sm:$0xff]
    %v67 = vld [vmem:[%s1 + $0x150] sm:$0xff]
    %v68 = vld [vmem:[%s1 + $0x158] sm:$0xff]
    %v69 = vld [vmem:[%s1 + $0x160] sm:$0xff]
    %v70 = vld [vmem:[%s1 + $0x168] sm:$0xff]
    %v71 = vld [vmem:[%s1 + $0x170] sm:$0xff]
    %v72 = vld [vmem:[%s1 + $0x178] sm:$0xff]
    %v73 = vld [vmem:[%s1 + $0x180] sm:$0xff]
    %v74 = vld [vmem:[%s1 + $0x188] sm:$0xff]
    %v75 = vld [vmem:[%s1 + $0x190] sm:$0xff]
    %v76 = vld [vmem:[%s1 + $0x198] sm:$0xff]
    %v77 = vld [vmem:[%s1 + $0x1a0] sm:$0xff]
    %v78 = vld [vmem:[%s1 + $0x1a8] sm:$0xff]
    %v79 = vld [vmem:[%s1 + $0x1b0] sm:$0xff]
    %v80 = vld [vmem:[%s1 + $0x1b8] sm:$0xff]
    %v81 = vld [vmem:[%s1 + $0x1c0] sm:$0xff]
    %v82 = vld [vmem:[%s1 + $0x1c8] sm:$0xff]
    %v83 = vld [vmem:[%s1 + $0x1d0] sm:$0xff]
    %v84 = vld [vmem:[%s1 + $0x1d8] sm:$0xff]
    %v85 = vld [vmem:[%s1 + $0x1e0] sm:$0xff]
    %v86 = vld [vmem:[%s1 + $0x1e8] sm:$0xff]
    %v87 = vld [vmem:[%s1 + $0x1f0] sm:$0xff]
    %v88 = vld [vmem:[%s1 + $0x1f8] sm:$0xff]
    %v89 = vld [vmem:[%s1 + $0x200] sm:$0xff]
    %v90 = vld [vmem:[%s1 + $0x208] sm:$0xff]
    %v91 = vld [vmem:[%s1 + $0x210] sm:$0xff]
    %v92 = vld [vmem:[%s1 + $0x218] sm:$0xff]
    %v93 = vld [vmem:[%s1 + $0x220] sm:$0xff]
    %v94 = vld [vmem:[%s1 + $0x228] sm:$0xff]
    %v95 = vld [vmem:[%s1 + $0x230] sm:$0xff]
    %v96 = vld [vmem:[%s1 + $0x238] sm:$0xff]
    %v97 = vld [vmem:[%s1 + $0x240] sm:$0xff]
    %v98 = vld [vmem:[%s1 + $0x248] sm:$0xff]
    %v99 = vld [vmem:[%s1 + $0x250] sm:$0xff]
    %v100 = vld [vmem:[%s1 + $0x258] sm:$0xff]
    %v101 = vld [vmem:[%s1 + $0x260] sm:$0xff]
    %v102 = vld [vmem:[%s1 + $0x268] sm:$0xff]
    %v103 = vld [vmem:[%s1 + $0x270] sm:$0xff]
    %v104 = vld [vmem:[%s1 + $0x278] sm:$0xff]
    %v105 = vld [vmem:[%s1 + $0x280] sm:$0xff]
    %v106 = vld [vmem:[%s1 + $0x288] sm:$0xff]
    %v107 = vld [vmem:[%s1 + $0x290] sm:$0xff]
    %v108 = vld [vmem:[%s1 + $0x298] sm:$0xff]
    %v109 = vld [vmem:[%s1 + $0x2a0] sm:$0xff]
    %v110 = vld [vmem:[%s1 + $0x2a8] sm:$0xff]
    %v111 = vld [vmem:[%s1 + $0x2b0] sm:$0xff]
    %v112 = vld [vmem:[%s1 + $0x2b8] sm:$0xff]
    %v113 = vld [vmem:[%s1 + $0x2c0] sm:$0xff]
    %v114 = vld [vmem:[%s1 + $0x2c8] sm:$0xff]
    %v115 = vld [vmem:[%s1 + $0x2d0] sm:$0xff]
    %v116 = vld [vmem:[%s1 + $0x2d8] sm:$0xff]
    %v117 = vld [vmem:[%s1 + $0x2e0] sm:$0xff]
    %v118 = vld [vmem:[%s1 + $0x2e8] sm:$0xff]
    %v119 = vld [vmem:[%s1 + $0x2f0] sm:$0xff]
    %v120 = vld [vmem:[%s1 + $0x2f8] sm:$0xff]
    %v121 = vld [vmem:[%s1 + $0x300] sm:$0xff]
    %v122 = vld [vmem:[%s1 + $0x308] sm:$0xff]
    %v123 = vld [vmem:[%s1 + $0x310] sm:$0xff]
    %v124 = vld [vmem:[%s1 + $0x318] sm:$0xff]
    %v125 = vld [vmem:[%s1 + $0x320] sm:$0xff]
    %v126 = vld [vmem:[%s1 + $0x328] sm:$0xff]
    %v127 = vld [vmem:[%s1 + $0x330] sm:$0xff]
    %v128 = vld [vmem:[%s1 + $0x338] sm:$0xff]
    %v129 = vld [vmem:[%s1 + $0x340] sm:$0xff]
    %v130 = vld [vmem:[%s1 + $0x348] sm:$0xff]
    %v131 = vld [vmem:[%s1 + $0x350] sm:$0xff]
    %v132 = vld [vmem:[%s1 + $0x358] sm:$0xff]
    %v133 = vld [vmem:[%s1 + $0x360] sm:$0xff]
    %v134 = vld [vmem:[%s1 + $0x368] sm:$0xff]
    %v135 = vld [vmem:[%s1 + $0x370] sm:$0xff]
    %v136 = vld [vmem:[%s1 + $0x378] sm:$0xff]
    %v137 = vld [vmem:[%s1 + $0x380] sm:$0xff]
    %v138 = vld [vmem:[%s1 + $0x388] sm:$0xff]
    %v139 = vld [vmem:[%s1 + $0x390] sm:$0xff]
    %v140 = vld [vmem:[%s1 + $0x398] sm:$0xff]
    %v141 = vld [vmem:[%s1 + $0x3a0] sm:$0xff]
    %v142 = vld [vmem:[%s1 + $0x3a8] sm:$0xff]
    %v143 = vld [vmem:[%s1 + $0x3b0] sm:$0xff]
    %v144 = vld [vmem:[%s1 + $0x3b8] sm:$0xff]
    %v145 = vld [vmem:[%s1 + $0x3c0] sm:$0xff]
    %v146 = vld [vmem:[%s1 + $0x3c8] sm:$0xff]
    %v147 = vld [vmem:[%s1 + $0x3d0] sm:$0xff]
    %v148 = vld [vmem:[%s1 + $0x3d8] sm:$0xff]
    %v149 = vld [vmem:[%s1 + $0x3e0] sm:$0xff]
    %v150 = vld [vmem:[%s1 + $0x3e8] sm:$0xff]
    %v151 = vld [vmem:[%s1 + $0x3f0] sm:$0xff]
    %v152 = vld [vmem:[%s1 + $0x3f8] sm:$0xff]
    %v153 = vld [vmem:[%s1 + $0x400] sm:$0xff]
    %v154 = vld [vmem:[%s1 + $0x408] sm:$0xff]
    %v155 = vld [vmem:[%s1 + $0x410] sm:$0xff]
    %v156 = vld [vmem:[%s1 + $0x418] sm:$0xff]
    %v157 = vld [vmem:[%s1 + $0x420] sm:$0xff]
    %v158 = vld [vmem:[%s1 + $0x428] sm:$0xff]
    %v159 = vld [vmem:[%s1 + $0x430] sm:$0xff]
    %v160 = vld [vmem:[%s1 + $0x438] sm:$0xff]
    %v161 = vld [vmem:[%s1 + $0x440] sm:$0xff]
    %v162 = vld [vmem:[%s1 + $0x448] sm:$0xff]
    %v163 = vld [vmem:[%s1 + $0x450] sm:$0xff]
    %v164 = vld [vmem:[%s1 + $0x458] sm:$0xff]
    %v165 = vld [vmem:[%s1 + $0x460] sm:$0xff]
    %v166 = vld [vmem:[%s1 + $0x468] sm:$0xff]
    %v167 = vld [vmem:[%s1 + $0x470] sm:$0xff]
    %v168 = vld [vmem:[%s1 + $0x478] sm:$0xff]
    %v169 = vld [vmem:[%s1 + $0x480] sm:$0xff]
    %v170 = vld [vmem:[%s1 + $0x488] sm:$0xff]
    %v171 = vld [vmem:[%s1 + $0x490] sm:$0xff]
    %v172 = vld [vmem:[%s1 + $0x498] sm:$0xff]
    %v173 = vld [vmem:[%s1 + $0x4a0] sm:$0xff]
    %v174 = vld [vmem:[%s1 + $0x4a8] sm:$0xff]
    %v175 = vld [vmem:[%s1 + $0x4b0] sm:$0xff]
    %v176 = vld [vmem:[%s1 + $0x4b8] sm:$0xff]
    %v177 = vld [vmem:[%s1 + $0x4c0] sm:$0xff]
    %v178 = vld [vmem:[%s1 + $0x4c8] sm:$0xff]
    %v179 = vld [vmem:[%s1 + $0x4d0] sm:$0xff]
    %v180 = vld [vmem:[%s1 + $0x4d8] sm:$0xff]
    %v181 = vld [vmem:[%s1 + $0x4e0] sm:$0xff]
    %v182 = vld [vmem:[%s1 + $0x4e8] sm:$0xff]
    %v183 = vld [vmem:[%s1 + $0x4f0] sm:$0xff]
    %v184 = vld [vmem:[%s1 + $0x4f8] sm:$0xff]
    %v185 = vld [vmem:[%s1 + $0x500] sm:$0xff]
    %v186 = vld [vmem:[%s1 + $0x508] sm:$0xff]
    %v187 = vld [vmem:[%s1 + $0x510] sm:$0xff]
    %v188 = vld [vmem:[%s1 + $0x518] sm:$0xff]
    %v189 = vld [vmem:[%s1 + $0x520] sm:$0xff]
    %v190 = vld [vmem:[%s1 + $0x528] sm:$0xff]
    %v191 = vld [vmem:[%s1 + $0x530] sm:$0xff]
    %v192 = vld [vmem:[%s1 + $0x538] sm:$0xff]
    %v193 = vld [vmem:[%s1 + $0x540] sm:$0xff]
    %v194 = vld [vmem:[%s1 + $0x548] sm:$0xff]
    %v195 = vld [vmem:[%s1 + $0x550] sm:$0xff]
    %v196 = vld [vmem:[%s1 + $0x558] sm:$0xff]
    %v197 = vld [vmem:[%s1 + $0x560] sm:$0xff]
    %v198 = vld [vmem:[%s1 + $0x568] sm:$0xff]
    %v199 = vld [vmem:[%s1 + $0x570] sm:$0xff]
    %v200 = vld [vmem:[%s1 + $0x578] sm:$0xff]
    %v201 = vld [vmem:[%s1 + $0x580] sm:$0xff]
    %v202 = vld [vmem:[%s1 + $0x588] sm:$0xff]
    %v203 = vld [vmem:[%s1 + $0x590] sm:$0xff]
    %v204 = vld [vmem:[%s1 + $0x598] sm:$0xff]
    %v205 = vld [vmem:[%s1 + $0x5a0] sm:$0xff]
    %v206 = vld [vmem:[%s1 + $0x5a8] sm:$0xff]
    %v207 = vld [vmem:[%s1 + $0x5b0] sm:$0xff]
    %v208 = vld [vmem:[%s1 + $0x5b8] sm:$0xff]
    %v209 = vld [vmem:[%s1 + $0x5c0] sm:$0xff]
    %v210 = vld [vmem:[%s1 + $0x5c8] sm:$0xff]
    %v211 = vld [vmem:[%s1 + $0x5d0] sm:$0xff]
    %v212 = vld [vmem:[%s1 + $0x5d8] sm:$0xff]
    %v213 = vld [vmem:[%s1 + $0x5e0] sm:$0xff]
    %v214 = vld [vmem:[%s1 + $0x5e8] sm:$0xff]
    %v215 = vld [vmem:[%s1 + $0x5f0] sm:$0xff]
    %v216 = vld [vmem:[%s1 + $0x5f8] sm:$0xff]
    %v217 = vld [vmem:[%s1 + $0x600] sm:$0xff]
    %v218 = vld [vmem:[%s1 + $0x608] sm:$0xff]
    %v219 = vld [vmem:[%s1 + $0x610] sm:$0xff]
    %v220 = vld [vmem:[%s1 + $0x618] sm:$0xff]
    %v221 = vld [vmem:[%s1 + $0x620] sm:$0xff]
    %v222 = vld [vmem:[%s1 + $0x628] sm:$0xff]
    %v223 = vld [vmem:[%s1 + $0x630] sm:$0xff]
    %v224 = vld [vmem:[%s1 + $0x638] sm:$0xff]
    %v225 = vld [vmem:[%s1 + $0x640] sm:$0xff]
    %v226 = vld [vmem:[%s1 + $0x648] sm:$0xff]
    %v227 = vld [vmem:[%s1 + $0x650] sm:$0xff]
    %v228 = vld [vmem:[%s1 + $0x658] sm:$0xff]
    %v229 = vld [vmem:[%s1 + $0x660] sm:$0xff]
    %v230 = vld [vmem:[%s1 + $0x668] sm:$0xff]
    %v231 = vld [vmem:[%s1 + $0x670] sm:$0xff]
    %v232 = vld [vmem:[%s1 + $0x678] sm:$0xff]
    %v233 = vld [vmem:[%s1 + $0x680] sm:$0xff]
    %v234 = vld [vmem:[%s1 + $0x688] sm:$0xff]
    %v235 = vld [vmem:[%s1 + $0x690] sm:$0xff]
    %v236 = vld [vmem:[%s1 + $0x698] sm:$0xff]
    %v237 = vld [vmem:[%s1 + $0x6a0] sm:$0xff]
    %v238 = vld [vmem:[%s1 + $0x6a8] sm:$0xff]
    %v239 = vld [vmem:[%s1 + $0x6b0] sm:$0xff]
    %v240 = vld [vmem:[%s1 + $0x6b8] sm:$0xff]
    %v241 = vld [vmem:[%s1 + $0x6c0] sm:$0xff]
    %v242 = vld [vmem:[%s1 + $0x6c8] sm:$0xff]
    %v243 = vld [vmem:[%s1 + $0x6d0] sm:$0xff]
    %v244 = vld [vmem:[%s1 + $0x6d8] sm:$0xff]
    %v245 = vld [vmem:[%s1 + $0x6e0] sm:$0xff]
    %v246 = vld [vmem:[%s1 + $0x6e8] sm:$0xff]
    %v247 = vld [vmem:[%s1 + $0x6f0] sm:$0xff]
    %v248 = vld [vmem:[%s1 + $0x6f8] sm:$0xff]
    %v249 = vld [vmem:[%s1 + $0x700] sm:$0xff]
    %v250 = vld [vmem:[%s1 + $0x708] sm:$0xff]
    %v251 = vld [vmem:[%s1 + $0x710] sm:$0xff]
    %v252 = vld [vmem:[%s1 + $0x718] sm:$0xff]
    %v253 = vld [vmem:[%s1 + $0x720] sm:$0xff]
    %v254 = vld [vmem:[%s1 + $0x728] sm:$0xff]
    %v255 = vld [vmem:[%s1 + $0x730] sm:$0xff]
    %v256 = vld [vmem:[%s1 + $0x738] sm:$0xff]
    %v257 = vld [vmem:[%s1 + $0x740] sm:$0xff]
    %v258 = vld [vmem:[%s1 + $0x748] sm:$0xff]
    %v259 = vld [vmem:[%s1 + $0x750] sm:$0xff]
    %v260 = vld [vmem:[%s1 + $0x758] sm:$0xff]
    %v261 = vld [vmem:[%s1 + $0x760] sm:$0xff]
    %v262 = vld [vmem:[%s1 + $0x768] sm:$0xff]
    %v263 = vld [vmem:[%s1 + $0x770] sm:$0xff]
    %v264 = vld [vmem:[%s1 + $0x778] sm:$0xff]
    %v265 = vld [vmem:[%s1 + $0x780] sm:$0xff]
    %v266 = vld [vmem:[%s1 + $0x788] sm:$0xff]
    %v267 = vld [vmem:[%s1 + $0x790] sm:$0xff]
    %v268 = vld [vmem:[%s1 + $0x798] sm:$0xff]
    %v269 = vld [vmem:[%s1 + $0x7a0] sm:$0xff]
    %v270 = vld [vmem:[%s1 + $0x7a8] sm:$0xff]
    %v271 = vld [vmem:[%s1 + $0x7b0] sm:$0xff]
    %v272 = vld [vmem:[%s1 + $0x7b8] sm:$0xff]
    %v273 = vld [vmem:[%s1 + $0x7c0] sm:$0xff]
    %v274 = vld [vmem:[%s1 + $0x7c8] sm:$0xff]
    %v275 = vld [vmem:[%s1 + $0x7d0] sm:$0xff]
    %v276 = vld [vmem:[%s1 + $0x7d8] sm:$0xff]
    %v277 = vld [vmem:[%s1 + $0x7e0] sm:$0xff]
    %v278 = vld [vmem:[%s1 + $0x7e8] sm:$0xff]
    %v279 = vld [vmem:[%s1 + $0x7f0] sm:$0xff]
    %v280 = vld [vmem:[%s1 + $0x7f8] sm:$0xff]
    %v281 = vld [vmem:[%s1 + $0x800] sm:$0xff]
    %v282 = vld [vmem:[%s1 + $0x808] sm:$0xff]
    %v283 = vld [vmem:[%s1 + $0x810] sm:$0xff]
    %v284 = vld [vmem:[%s1 + $0x818] sm:$0xff]
    %v285 = vld [vmem:[%s1 + $0x820] sm:$0xff]
    %v286 = vld [vmem:[%s1 + $0x828] sm:$0xff]
    %v287 = vld [vmem:[%s1 + $0x830] sm:$0xff]
    %v288 = vld [vmem:[%s1 + $0x838] sm:$0xff]
    %v289 = vld [vmem:[%s1 + $0x840] sm:$0xff]
    %v290 = vld [vmem:[%s1 + $0x848] sm:$0xff]
    %v291 = vld [vmem:[%s1 + $0x850] sm:$0xff]
    %v292 = vld [vmem:[%s1 + $0x858] sm:$0xff]
    %v293 = vld [vmem:[%s1 + $0x860] sm:$0xff]
    %v294 = vld [vmem:[%s1 + $0x868] sm:$0xff]
    %v295 = vld [vmem:[%s1 + $0x870] sm:$0xff]
    %v296 = vld [vmem:[%s1 + $0x878] sm:$0xff]
    %v297 = vld [vmem:[%s1 + $0x880] sm:$0xff]
    %v298 = vld [vmem:[%s1 + $0x888] sm:$0xff]
    %v299 = vld [vmem:[%s1 + $0x890] sm:$0xff]
    %v300 = vld [vmem:[%s1 + $0x898] sm:$0xff]
    %v301 = vld [vmem:[%s1 + $0x8a0] sm:$0xff]
    %v302 = vld [vmem:[%s1 + $0x8a8] sm:$0xff]
    %v303 = vld [vmem:[%s1 + $0x8b0] sm:$0xff]
    %v304 = vld [vmem:[%s1 + $0x8b8] sm:$0xff]
    %v305 = vld [vmem:[%s1 + $0x8c0] sm:$0xff]
    %v306 = vld [vmem:[%s1 + $0x8c8] sm:$0xff]
    %v307 = vld [vmem:[%s1 + $0x8d0] sm:$0xff]
    %v308 = vld [vmem:[%s1 + $0x8d8] sm:$0xff]
    %v309 = vld [vmem:[%s1 + $0x8e0] sm:$0xff]
    %v310 = vld [vmem:[%s1 + $0x8e8] sm:$0xff]
    %v311 = vld [vmem:[%s1 + $0x8f0] sm:$0xff]
    %v312 = vld [vmem:[%s1 + $0x8f8] sm:$0xff]
    %v313 = vld [vmem:[%s1 + $0x900] sm:$0xff]
    %v314 = vld [vmem:[%s1 + $0x908] sm:$0xff]
    %v315 = vld [vmem:[%s1 + $0x910] sm:$0xff]
    %v316 = vld [vmem:[%s1 + $0x918] sm:$0xff]
    %v317 = vld [vmem:[%s1 + $0x920] sm:$0xff]
    %v318 = vld [vmem:[%s1 + $0x928] sm:$0xff]
    %v319 = vld [vmem:[%s1 + $0x930] sm:$0xff]
    %v320 = vld [vmem:[%s1 + $0x938] sm:$0xff]
    %v321 = vld [vmem:[%s1 + $0x940] sm:$0xff]
    %v322 = vld [vmem:[%s1 + $0x948] sm:$0xff]
    %v323 = vld [vmem:[%s1 + $0x950] sm:$0xff]
    %v324 = vld [vmem:[%s1 + $0x958] sm:$0xff]
    %v325 = vld [vmem:[%s1 + $0x960] sm:$0xff]
    %v326 = vld [vmem:[%s1 + $0x968] sm:$0xff]
    %v327 = vld [vmem:[%s1 + $0x970] sm:$0xff]
    %v328 = vld [vmem:[%s1 + $0x978] sm:$0xff]
    %v329 = vld [vmem:[%s1 + $0x980] sm:$0xff]
    %v330 = vld [vmem:[%s1 + $0x988] sm:$0xff]
    %v331 = vld [vmem:[%s1 + $0x990] sm:$0xff]
    %v332 = vld [vmem:[%s1 + $0x998] sm:$0xff]
    %v333 = vld [vmem:[%s1 + $0x9a0] sm:$0xff]
    %v334 = vld [vmem:[%s1 + $0x9a8] sm:$0xff]
    %v335 = vld [vmem:[%s1 + $0x9b0] sm:$0xff]
    %v336 = vld [vmem:[%s1 + $0x9b8] sm:$0xff]
    %v337 = vld [vmem:[%s1 + $0x9c0] sm:$0xff]
    %v338 = vld [vmem:[%s1 + $0x9c8] sm:$0xff]
    %v339 = vld [vmem:[%s1 + $0x9d0] sm:$0xff]
    %v340 = vld [vmem:[%s1 + $0x9d8] sm:$0xff]
    %v341 = vld [vmem:[%s1 + $0x9e0] sm:$0xff]
    %v342 = vld [vmem:[%s1 + $0x9e8] sm:$0xff]
    %v343 = vld [vmem:[%s1 + $0x9f0] sm:$0xff]
    %v344 = vld [vmem:[%s1 + $0x9f8] sm:$0xff]
    %v345 = vld [vmem:[%s1 + $0xa00] sm:$0xff]
    %v346 = vld [vmem:[%s1 + $0xa08] sm:$0xff]
    %v347 = vld [vmem:[%s1 + $0xa10] sm:$0xff]
    %v348 = vld [vmem:[%s1 + $0xa18] sm:$0xff]
    %v349 = vld [vmem:[%s1 + $0xa20] sm:$0xff]
    %v350 = vld [vmem:[%s1 + $0xa28] sm:$0xff]
    %v351 = vld [vmem:[%s1 + $0xa30] sm:$0xff]
    %v352 = vld [vmem:[%s1 + $0xa38] sm:$0xff]
    %v353 = vld [vmem:[%s1 + $0xa40] sm:$0xff]
    %v354 = vld [vmem:[%s1 + $0xa48] sm:$0xff]
    %v355 = vld [vmem:[%s1 + $0xa50] sm:$0xff]
    %v356 = vld [vmem:[%s1 + $0xa58] sm:$0xff]
    %v357 = vld [vmem:[%s1 + $0xa60] sm:$0xff]
    %v358 = vld [vmem:[%s1 + $0xa68] sm:$0xff]
    %v359 = vld [vmem:[%s1 + $0xa70] sm:$0xff]
    %v360 = vld [vmem:[%s1 + $0xa78] sm:$0xff]
    %v361 = vld [vmem:[%s1 + $0xa80] sm:$0xff]
    %v362 = vld [vmem:[%s1 + $0xa88] sm:$0xff]
    %v363 = vld [vmem:[%s1 + $0xa90] sm:$0xff]
    %v364 = vld [vmem:[%s1 + $0xa98] sm:$0xff]
    %v365 = vld [vmem:[%s1 + $0xaa0] sm:$0xff]
    %v366 = vld [vmem:[%s1 + $0xaa8] sm:$0xff]
    %v367 = vld [vmem:[%s1 + $0xab0] sm:$0xff]
    %v368 = vld [vmem:[%s1 + $0xab8] sm:$0xff]
    %v369 = vld [vmem:[%s1 + $0xac0] sm:$0xff]
    %v370 = vld [vmem:[%s1 + $0xac8] sm:$0xff]
    %v371 = vld [vmem:[%s1 + $0xad0] sm:$0xff]
    %v372 = vld [vmem:[%s1 + $0xad8] sm:$0xff]
    %v373 = vld [vmem:[%s1 + $0xae0] sm:$0xff]
    %v374 = vld [vmem:[%s1 + $0xae8] sm:$0xff]
    %v375 = vld [vmem:[%s1 + $0xaf0] sm:$0xff]
    %v376 = vld [vmem:[%s1 + $0xaf8] sm:$0xff]
    %v377 = vld [vmem:[%s1 + $0xb00] sm:$0xff]
    %v378 = vld [vmem:[%s1 + $0xb08] sm:$0xff]
    %v379 = vld [vmem:[%s1 + $0xb10] sm:$0xff]
    %v380 = vld [vmem:[%s1 + $0xb18] sm:$0xff]
    %v381 = vld [vmem:[%s1 + $0xb20] sm:$0xff]
    %v382 = vld [vmem:[%s1 + $0xb28] sm:$0xff]
    %v383 = vld [vmem:[%s1 + $0xb30] sm:$0xff]
    %v384 = vld [vmem:[%s1 + $0xb38] sm:$0xff]
    %v385 = vld [vmem:[%s1 + $0xb40] sm:$0xff]
    %v386 = vld [vmem:[%s1 + $0xb48] sm:$0xff]
    %v387 = vld [vmem:[%s1 + $0xb50] sm:$0xff]
    %v388 = vld [vmem:[%s1 + $0xb58] sm:$0xff]
    %v389 = vld [vmem:[%s1 + $0xb60] sm:$0xff]
    %v390 = vld [vmem:[%s1 + $0xb68] sm:$0xff]
    %v391 = vld [vmem:[%s1 + $0xb70] sm:$0xff]
    %v392 = vld [vmem:[%s1 + $0xb78] sm:$0xff]
    %v393 = vld [vmem:[%s1 + $0xb80] sm:$0xff]
    %v394 = vld [vmem:[%s1 + $0xb88] sm:$0xff]
    %v395 = vld [vmem:[%s1 + $0xb90] sm:$0xff]
    %v396 = vld [vmem:[%s1 + $0xb98] sm:$0xff]
    %v397 = vld [vmem:[%s1 + $0xba0] sm:$0xff]
    %v398 = vld [vmem:[%s1 + $0xba8] sm:$0xff]
    %v399 = vld [vmem:[%s1 + $0xbb0] sm:$0xff]
    %v400 = vld [vmem:[%s1 + $0xbb8] sm:$0xff]
    %v401 = vld [vmem:[%s1 + $0xbc0] sm:$0xff]
    %v402 = vld [vmem:[%s1 + $0xbc8] sm:$0xff]
    %v403 = vld [vmem:[%s1 + $0xbd0] sm:$0xff]
    %v404 = vld [vmem:[%s1 + $0xbd8] sm:$0xff]
    %v405 = vld [vmem:[%s1 + $0xbe0] sm:$0xff]
    %v406 = vld [vmem:[%s1 + $0xbe8] sm:$0xff]
    %v407 = vld [vmem:[%s1 + $0xbf0] sm:$0xff]
    %v408 = vld [vmem:[%s1 + $0xbf8] sm:$0xff]
    %v409 = vld [vmem:[%s1 + $0xc00] sm:$0xff]
    %v410 = vld [vmem:[%s1 + $0xc08] sm:$0xff]
    %v411 = vld [vmem:[%s1 + $0xc10] sm:$0xff]
    %v412 = vld [vmem:[%s1 + $0xc18] sm:$0xff]
    %v413 = vld [vmem:[%s1 + $0xc20] sm:$0xff]
    %v414 = vld [vmem:[%s1 + $0xc28] sm:$0xff]
    %v415 = vld [vmem:[%s1 + $0xc30] sm:$0xff]
    %v416 = vld [vmem:[%s1 + $0xc38] sm:$0xff]
    %v417 = vld [vmem:[%s1 + $0xc40] sm:$0xff]
    %v418 = vld [vmem:[%s1 + $0xc48] sm:$0xff]
    %v419 = vld [vmem:[%s1 + $0xc50] sm:$0xff]
    %v420 = vld [vmem:[%s1 + $0xc58] sm:$0xff]
    %v421 = vld [vmem:[%s1 + $0xc60] sm:$0xff]
    %v422 = vld [vmem:[%s1 + $0xc68] sm:$0xff]
    %v423 = vld [vmem:[%s1 + $0xc70] sm:$0xff]
    %v424 = vld [vmem:[%s1 + $0xc78] sm:$0xff]
    %v425 = vld [vmem:[%s1 + $0xc80] sm:$0xff]
    %v426 = vld [vmem:[%s1 + $0xc88] sm:$0xff]
    %v427 = vld [vmem:[%s1 + $0xc90] sm:$0xff]
    %v428 = vld [vmem:[%s1 + $0xc98] sm:$0xff]
    %v429 = vld [vmem:[%s1 + $0xca0] sm:$0xff]
    %v430 = vld [vmem:[%s1 + $0xca8] sm:$0xff]
    %v431 = vld [vmem:[%s1 + $0xcb0] sm:$0xff]
    %v432 = vld [vmem:[%s1 + $0xcb8] sm:$0xff]
    %v433 = vld [vmem:[%s1 + $0xcc0] sm:$0xff]
    %v434 = vld [vmem:[%s1 + $0xcc8] sm:$0xff]
    %v435 = vld [vmem:[%s1 + $0xcd0] sm:$0xff]
    %v436 = vld [vmem:[%s1 + $0xcd8] sm:$0xff]
    %v437 = vld [vmem:[%s1 + $0xce0] sm:$0xff]
    %v438 = vld [vmem:[%s1 + $0xce8] sm:$0xff]
    %v439 = vld [vmem:[%s1 + $0xcf0] sm:$0xff]
    %v440 = vld [vmem:[%s1 + $0xcf8] sm:$0xff]
    %v441 = vld [vmem:[%s1 + $0xd00] sm:$0xff]
    %v442 = vld [vmem:[%s1 + $0xd08] sm:$0xff]
    %v443 = vld [vmem:[%s1 + $0xd10] sm:$0xff]
    %v444 = vld [vmem:[%s1 + $0xd18] sm:$0xff]
    %v445 = vld [vmem:[%s1 + $0xd20] sm:$0xff]
    %v446 = vld [vmem:[%s1 + $0xd28] sm:$0xff]
    %v447 = vld [vmem:[%s1 + $0xd30] sm:$0xff]
    %v448 = vld [vmem:[%s1 + $0xd38] sm:$0xff]
    %v449 = vld [vmem:[%s1 + $0xd40] sm:$0xff]
    %v450 = vld [vmem:[%s1 + $0xd48] sm:$0xff]
    %v451 = vld [vmem:[%s1 + $0xd50] sm:$0xff]
    %v452 = vld [vmem:[%s1 + $0xd58] sm:$0xff]
    %v453 = vld [vmem:[%s1 + $0xd60] sm:$0xff]
    %v454 = vld [vmem:[%s1 + $0xd68] sm:$0xff]
    %v455 = vld [vmem:[%s1 + $0xd70] sm:$0xff]
    %v456 = vld [vmem:[%s1 + $0xd78] sm:$0xff]
    %v457 = vld [vmem:[%s1 + $0xd80] sm:$0xff]
    %v458 = vld [vmem:[%s1 + $0xd88] sm:$0xff]
    %v459 = vld [vmem:[%s1 + $0xd90] sm:$0xff]
    %v460 = vld [vmem:[%s1 + $0xd98] sm:$0xff]
    %v461 = vld [vmem:[%s1 + $0xda0] sm:$0xff]
    %v462 = vld [vmem:[%s1 + $0xda8] sm:$0xff]
    %v463 = vld [vmem:[%s1 + $0xdb0] sm:$0xff]
    %v464 = vld [vmem:[%s1 + $0xdb8] sm:$0xff]
    %v465 = vld [vmem:[%s1 + $0xdc0] sm:$0xff]
    %v466 = vld [vmem:[%s1 + $0xdc8] sm:$0xff]
    %v467 = vld [vmem:[%s1 + $0xdd0] sm:$0xff]
    %v468 = vld [vmem:[%s1 + $0xdd8] sm:$0xff]
    %v469 = vld [vmem:[%s1 + $0xde0] sm:$0xff]
    %v470 = vld [vmem:[%s1 + $0xde8] sm:$0xff]
    %v471 = vld [vmem:[%s1 + $0xdf0] sm:$0xff]
    %v472 = vld [vmem:[%s1 + $0xdf8] sm:$0xff]
    %v473 = vld [vmem:[%s1 + $0xe00] sm:$0xff]
    %v474 = vld [vmem:[%s1 + $0xe08] sm:$0xff]
    %v475 = vld [vmem:[%s1 + $0xe10] sm:$0xff]
    %v476 = vld [vmem:[%s1 + $0xe18] sm:$0xff]
    %v477 = vld [vmem:[%s1 + $0xe20] sm:$0xff]
    %v478 = vld [vmem:[%s1 + $0xe28] sm:$0xff]
    %v479 = vld [vmem:[%s1 + $0xe30] sm:$0xff]
    %v480 = vld [vmem:[%s1 + $0xe38] sm:$0xff]
    %v481 = vld [vmem:[%s1 + $0xe40] sm:$0xff]
    %v482 = vld [vmem:[%s1 + $0xe48] sm:$0xff]
    %v483 = vld [vmem:[%s1 + $0xe50] sm:$0xff]
    %v484 = vld [vmem:[%s1 + $0xe58] sm:$0xff]
    %v485 = vld [vmem:[%s1 + $0xe60] sm:$0xff]
    %v486 = vld [vmem:[%s1 + $0xe68] sm:$0xff]
    %v487 = vld [vmem:[%s1 + $0xe70] sm:$0xff]
    %v488 = vld [vmem:[%s1 + $0xe78] sm:$0xff]
    %v489 = vld [vmem:[%s1 + $0xe80] sm:$0xff]
    %v490 = vld [vmem:[%s1 + $0xe88] sm:$0xff]
    %v491 = vld [vmem:[%s1 + $0xe90] sm:$0xff]
    %v492 = vld [vmem:[%s1 + $0xe98] sm:$0xff]
    %v493 = vld [vmem:[%s1 + $0xea0] sm:$0xff]
    %v494 = vld [vmem:[%s1 + $0xea8] sm:$0xff]
    %v495 = vld [vmem:[%s1 + $0xeb0] sm:$0xff]
    %v496 = vld [vmem:[%s1 + $0xeb8] sm:$0xff]
    %v497 = vld [vmem:[%s1 + $0xec0] sm:$0xff]
    %v498 = vld [vmem:[%s1 + $0xec8] sm:$0xff]
    %v499 = vld [vmem:[%s1 + $0xed0] sm:$0xff]
    %v500 = vld [vmem:[%s1 + $0xed8] sm:$0xff]
    %v501 = vld [vmem:[%s1 + $0xee0] sm:$0xff]
    %v502 = vld [vmem:[%s1 + $0xee8] sm:$0xff]
    %v503 = vld [vmem:[%s1 + $0xef0] sm:$0xff]
    %v504 = vld [vmem:[%s1 + $0xef8] sm:$0xff]
    %v505 = vld [vmem:[%s1 + $0xf00] sm:$0xff]
    %v506 = vld [vmem:[%s1 + $0xf08] sm:$0xff]
    %v507 = vld [vmem:[%s1 + $0xf10] sm:$0xff]
    %v508 = vld [vmem:[%s1 + $0xf18] sm:$0xff]
    %v509 = vld [vmem:[%s1 + $0xf20] sm:$0xff]
    %v510 = vld [vmem:[%s1 + $0xf28] sm:$0xff]
    %v511 = vld [vmem:[%s1 + $0xf30] sm:$0xff]
    %v512 = vld [vmem:[%s1 + $0xf38] sm:$0xff]
    %v513 = vld [vmem:[%s1 + $0xf40] sm:$0xff]
    %v514 = vld [vmem:[%s1 + $0xf48] sm:$0xff]
    %v515 = vld [vmem:[%s1 + $0xf50] sm:$0xff]
    %v516 = vld [vmem:[%s1 + $0xf58] sm:$0xff]
    %v517 = vld [vmem:[%s1 + $0xf60] sm:$0xff]
    %v518 = vld [vmem:[%s1 + $0xf68] sm:$0xff]
    %v519 = vld [vmem:[%s1 + $0xf70] sm:$0xff]
    %v520 = vld [vmem:[%s1 + $0xf78] sm:$0xff]
    %v521 = vld [vmem:[%s1 + $0xf80] sm:$0xff]
    %v522 = vld [vmem:[%s1 + $0xf88] sm:$0xff]
    %v523 = vld [vmem:[%s1 + $0xf90] sm:$0xff]
    %v524 = vld [vmem:[%s1 + $0xf98] sm:$0xff]
    %v525 = vld [vmem:[%s1 + $0xfa0] sm:$0xff]
    %v526 = vld [vmem:[%s1 + $0xfa8] sm:$0xff]
    %v527 = vld [vmem:[%s1 + $0xfb0] sm:$0xff]
    %v528 = vld [vmem:[%s1 + $0xfb8] sm:$0xff]
    %v529 = vld [vmem:[%s1 + $0xfc0] sm:$0xff]
    %v530 = vld [vmem:[%s1 + $0xfc8] sm:$0xff]
    %v531 = vld [vmem:[%s1 + $0xfd0] sm:$0xff]
    %v532 = vld [vmem:[%s1 + $0xfd8] sm:$0xff]
    %v533 = vld [vmem:[%s1 + $0xfe0] sm:$0xff]
    %v534 = vld [vmem:[%s1 + $0xfe8] sm:$0xff]
    %v535 = vld [vmem:[%s1 + $0xff0] sm:$0xff]
    %v536 = vld [vmem:[%s1 + $0xff8] sm:$0xff]
    %v537 = vld [vmem:[%s1 + $0x1000] sm:$0xff]
    %v538 = vld [vmem:[%s1 + $0x1008] sm:$0xff]
    %v539 = vld [vmem:[%s1 + $0x1010] sm:$0xff]
    %v540 = vld [vmem:[%s1 + $0x1018] sm:$0xff]
    %v541 = vld [vmem:[%s1 + $0x1020] sm:$0xff]
    %v542 = vld [vmem:[%s1 + $0x1028] sm:$0xff]
    %v543 = vld [vmem:[%s1 + $0x1030] sm:$0xff]
    %v544 = vld [vmem:[%s1 + $0x1038] sm:$0xff]
    %v545 = vld [vmem:[%s1 + $0x1040] sm:$0xff]
    %v546 = vld [vmem:[%s1 + $0x1048] sm:$0xff]
    %v547 = vld [vmem:[%s1 + $0x1050] sm:$0xff]
    %v548 = vld [vmem:[%s1 + $0x1058] sm:$0xff]
    %v549 = vld [vmem:[%s1 + $0x1060] sm:$0xff]
    %v550 = vld [vmem:[%s1 + $0x1068] sm:$0xff]
    %v551 = vld [vmem:[%s1 + $0x1070] sm:$0xff]
    %v552 = vld [vmem:[%s1 + $0x1078] sm:$0xff]
    %v553 = vld [vmem:[%s1 + $0x1080] sm:$0xff]
    %v554 = vld [vmem:[%s1 + $0x1088] sm:$0xff]
    %v555 = vld [vmem:[%s1 + $0x1090] sm:$0xff]
    %v556 = vld [vmem:[%s1 + $0x1098] sm:$0xff]
    %v557 = vld [vmem:[%s1 + $0x10a0] sm:$0xff]
    %v558 = vld [vmem:[%s1 + $0x10a8] sm:$0xff]
    %v559 = vld [vmem:[%s1 + $0x10b0] sm:$0xff]
    %v560 = vld [vmem:[%s1 + $0x10b8] sm:$0xff]
    %v561 = vld [vmem:[%s1 + $0x10c0] sm:$0xff]
    %v562 = vld [vmem:[%s1 + $0x10c8] sm:$0xff]
    %v563 = vld [vmem:[%s1 + $0x10d0] sm:$0xff]
    %v564 = vld [vmem:[%s1 + $0x10d8] sm:$0xff]
    %v565 = vld [vmem:[%s1 + $0x10e0] sm:$0xff]
    %v566 = vld [vmem:[%s1 + $0x10e8] sm:$0xff]
    %v567 = vld [vmem:[%s1 + $0x10f0] sm:$0xff]
    %v568 = vld [vmem:[%s1 + $0x10f8] sm:$0xff]
    %v569 = vld [vmem:[%s1 + $0x1100] sm:$0xff]
    %v570 = vld [vmem:[%s1 + $0x1108] sm:$0xff]
    %v571 = vld [vmem:[%s1 + $0x1110] sm:$0xff]
    %v572 = vld [vmem:[%s1 + $0x1118] sm:$0xff]
    %v573 = vld [vmem:[%s1 + $0x1120] sm:$0xff]
    %v574 = vld [vmem:[%s1 + $0x1128] sm:$0xff]
    %v575 = vld [vmem:[%s1 + $0x1130] sm:$0xff]
    %v576 = vld [vmem:[%s1 + $0x1138] sm:$0xff]
    %v577 = vld [vmem:[%s1 + $0x1140] sm:$0xff]
    %v578 = vld [vmem:[%s1 + $0x1148] sm:$0xff]
    %v579 = vld [vmem:[%s1 + $0x1150] sm:$0xff]
    %v580 = vld [vmem:[%s1 + $0x1158] sm:$0xff]
    %v581 = vld [vmem:[%s1 + $0x1160] sm:$0xff]
    %v582 = vld [vmem:[%s1 + $0x1168] sm:$0xff]
    %v583 = vld [vmem:[%s1 + $0x1170] sm:$0xff]
    %v584 = vld [vmem:[%s1 + $0x1178] sm:$0xff]
    %v585 = vld [vmem:[%s1 + $0x1180] sm:$0xff]
    %v586 = vld [vmem:[%s1 + $0x1188] sm:$0xff]
    %v587 = vld [vmem:[%s1 + $0x1190] sm:$0xff]
    %v588 = vld [vmem:[%s1 + $0x1198] sm:$0xff]
    %v589 = vld [vmem:[%s1 + $0x11a0] sm:$0xff]
    %v590 = vld [vmem:[%s1 + $0x11a8] sm:$0xff]
    %v591 = vld [vmem:[%s1 + $0x11b0] sm:$0xff]
    %v592 = vld [vmem:[%s1 + $0x11b8] sm:$0xff]
    %v593 = vld [vmem:[%s1 + $0x11c0] sm:$0xff]
    %v594 = vld [vmem:[%s1 + $0x11c8] sm:$0xff]
    %v595 = vld [vmem:[%s1 + $0x11d0] sm:$0xff]
    %v596 = vld [vmem:[%s1 + $0x11d8] sm:$0xff]
    %v597 = vld [vmem:[%s1 + $0x11e0] sm:$0xff]
    %v598 = vld [vmem:[%s1 + $0x11e8] sm:$0xff]
    %v599 = vld [vmem:[%s1 + $0x11f0] sm:$0xff]
    %v600 = vld [vmem:[%s1 + $0x11f8] sm:$0xff]
    %v601 = vld [vmem:[%s1 + $0x1200] sm:$0xff]
    %v602 = vld [vmem:[%s1 + $0x1208] sm:$0xff]
    %v603 = vld [vmem:[%s1 + $0x1210] sm:$0xff]
    %v604 = vld [vmem:[%s1 + $0x1218] sm:$0xff]
    %v605 = vld [vmem:[%s1 + $0x1220] sm:$0xff]
    %v606 = vld [vmem:[%s1 + $0x1228] sm:$0xff]
    %v607 = vld [vmem:[%s1 + $0x1230] sm:$0xff]
    %v608 = vld [vmem:[%s1 + $0x1238] sm:$0xff]
    %v609 = vld [vmem:[%s1 + $0x1240] sm:$0xff]
    %v610 = vld [vmem:[%s1 + $0x1248] sm:$0xff]
    %v611 = vld [vmem:[%s1 + $0x1250] sm:$0xff]
    %v612 = vld [vmem:[%s1 + $0x1258] sm:$0xff]
    %v613 = vld [vmem:[%s1 + $0x1260] sm:$0xff]
    %v614 = vld [vmem:[%s1 + $0x1268] sm:$0xff]
    %v615 = vld [vmem:[%s1 + $0x1270] sm:$0xff]
    %v616 = vld [vmem:[%s1 + $0x1278] sm:$0xff]
    %v617 = vld [vmem:[%s1 + $0x1280] sm:$0xff]
    %v618 = vld [vmem:[%s1 + $0x1288] sm:$0xff]
    %v619 = vld [vmem:[%s1 + $0x1290] sm:$0xff]
    %v620 = vld [vmem:[%s1 + $0x1298] sm:$0xff]
    %v621 = vld [vmem:[%s1 + $0x12a0] sm:$0xff]
    %v622 = vld [vmem:[%s1 + $0x12a8] sm:$0xff]
    %v623 = vld [vmem:[%s1 + $0x12b0] sm:$0xff]
    %v624 = vld [vmem:[%s1 + $0x12b8] sm:$0xff]
    %v625 = vld [vmem:[%s1 + $0x12c0] sm:$0xff]
    %v626 = vld [vmem:[%s1 + $0x12c8] sm:$0xff]
    %v627 = vld [vmem:[%s1 + $0x12d0] sm:$0xff]
    %v628 = vld [vmem:[%s1 + $0x12d8] sm:$0xff]
    %v629 = vld [vmem:[%s1 + $0x12e0] sm:$0xff]
    %v630 = vld [vmem:[%s1 + $0x12e8] sm:$0xff]
    %v631 = vld [vmem:[%s1 + $0x12f0] sm:$0xff]
    %v632 = vld [vmem:[%s1 + $0x12f8] sm:$0xff]
    %v633 = vld [vmem:[%s1 + $0x1300] sm:$0xff]
    %v634 = vld [vmem:[%s1 + $0x1308] sm:$0xff]
    %v635 = vld [vmem:[%s1 + $0x1310] sm:$0xff]
    %v636 = vld [vmem:[%s1 + $0x1318] sm:$0xff]
    %v637 = vld [vmem:[%s1 + $0x1320] sm:$0xff]
    %v638 = vld [vmem:[%s1 + $0x1328] sm:$0xff]
    %v639 = vld [vmem:[%s1 + $0x1330] sm:$0xff]
    %v640 = vld [vmem:[%s1 + $0x1338] sm:$0xff]
    %v641 = vld [vmem:[%s1 + $0x1340] sm:$0xff]
    %v642 = vld [vmem:[%s1 + $0x1348] sm:$0xff]
    %v643 = vld [vmem:[%s1 + $0x1350] sm:$0xff]
    %v644 = vld [vmem:[%s1 + $0x1358] sm:$0xff]
    %v645 = vld [vmem:[%s1 + $0x1360] sm:$0xff]
    %v646 = vld [vmem:[%s1 + $0x1368] sm:$0xff]
    %v647 = vld [vmem:[%s1 + $0x1370] sm:$0xff]
    %v648 = vld [vmem:[%s1 + $0x1378] sm:$0xff]
    %v649 = vld [vmem:[%s1 + $0x1380] sm:$0xff]
    %v650 = vld [vmem:[%s1 + $0x1388] sm:$0xff]
    %v651 = vld [vmem:[%s1 + $0x1390] sm:$0xff]
    %v652 = vld [vmem:[%s1 + $0x1398] sm:$0xff]
    %v653 = vld [vmem:[%s1 + $0x13a0] sm:$0xff]
    %v654 = vld [vmem:[%s1 + $0x13a8] sm:$0xff]
    %v655 = vld [vmem:[%s1 + $0x13b0] sm:$0xff]
    %v656 = vld [vmem:[%s1 + $0x13b8] sm:$0xff]
    %v657 = vld [vmem:[%s1 + $0x13c0] sm:$0xff]
    %v658 = vld [vmem:[%s1 + $0x13c8] sm:$0xff]
    %v659 = vld [vmem:[%s1 + $0x13d0] sm:$0xff]
    %v660 = vld [vmem:[%s1 + $0x13d8] sm:$0xff]
    %v661 = vld [vmem:[%s1 + $0x13e0] sm:$0xff]
    %v662 = vld [vmem:[%s1 + $0x13e8] sm:$0xff]
    %v663 = vld [vmem:[%s1 + $0x13f0] sm:$0xff]
    %v664 = vld [vmem:[%s1 + $0x13f8] sm:$0xff]
    %v665 = vld [vmem:[%s1 + $0x1400] sm:$0xff]
    %v666 = vld [vmem:[%s1 + $0x1408] sm:$0xff]
    %v667 = vld [vmem:[%s1 + $0x1410] sm:$0xff]
    %v668 = vld [vmem:[%s1 + $0x1418] sm:$0xff]
    %v669 = vld [vmem:[%s1 + $0x1420] sm:$0xff]
    %v670 = vld [vmem:[%s1 + $0x1428] sm:$0xff]
    %v671 = vld [vmem:[%s1 + $0x1430] sm:$0xff]
    %v672 = vld [vmem:[%s1 + $0x1438] sm:$0xff]
    %v673 = vld [vmem:[%s1 + $0x1440] sm:$0xff]
    %v674 = vld [vmem:[%s1 + $0x1448] sm:$0xff]
    %v675 = vld [vmem:[%s1 + $0x1450] sm:$0xff]
    %v676 = vld [vmem:[%s1 + $0x1458] sm:$0xff]
    %v677 = vld [vmem:[%s1 + $0x1460] sm:$0xff]
    %v678 = vld [vmem:[%s1 + $0x1468] sm:$0xff]
    %v679 = vld [vmem:[%s1 + $0x1470] sm:$0xff]
    %v680 = vld [vmem:[%s1 + $0x1478] sm:$0xff]
    %v681 = vld [vmem:[%s1 + $0x1480] sm:$0xff]
    %v682 = vld [vmem:[%s1 + $0x1488] sm:$0xff]
    %v683 = vld [vmem:[%s1 + $0x1490] sm:$0xff]
    %v684 = vld [vmem:[%s1 + $0x1498] sm:$0xff]
    %v685 = vld [vmem:[%s1 + $0x14a0] sm:$0xff]
    %v686 = vld [vmem:[%s1 + $0x14a8] sm:$0xff]
    %v687 = vld [vmem:[%s1 + $0x14b0] sm:$0xff]
    %v688 = vld [vmem:[%s1 + $0x14b8] sm:$0xff]
    %v689 = vld [vmem:[%s1 + $0x14c0] sm:$0xff]
    %v690 = vld [vmem:[%s1 + $0x14c8] sm:$0xff]
    %v691 = vld [vmem:[%s1 + $0x14d0] sm:$0xff]
    %v692 = vld [vmem:[%s1 + $0x14d8] sm:$0xff]
    %v693 = vld [vmem:[%s1 + $0x14e0] sm:$0xff]
    %v694 = vld [vmem:[%s1 + $0x14e8] sm:$0xff]
    %v695 = vld [vmem:[%s1 + $0x14f0] sm:$0xff]
    %v696 = vld [vmem:[%s1 + $0x14f8] sm:$0xff]
    %v697 = vld [vmem:[%s1 + $0x1500] sm:$0xff]
    %v698 = vld [vmem:[%s1 + $0x1508] sm:$0xff]
    %v699 = vld [vmem:[%s1 + $0x1510] sm:$0xff]
    %v700 = vld [vmem:[%s1 + $0x1518] sm:$0xff]
    %v701 = vld [vmem:[%s1 + $0x1520] sm:$0xff]
    %v702 = vld [vmem:[%s1 + $0x1528] sm:$0xff]
    %v703 = vld [vmem:[%s1 + $0x1530] sm:$0xff]
    %v704 = vld [vmem:[%s1 + $0x1538] sm:$0xff]
    %v705 = vld [vmem:[%s1 + $0x1540] sm:$0xff]
    %v706 = vld [vmem:[%s1 + $0x1548] sm:$0xff]
    %v707 = vld [vmem:[%s1 + $0x1550] sm:$0xff]
    %v708 = vld [vmem:[%s1 + $0x1558] sm:$0xff]
    %v709 = vld [vmem:[%s1 + $0x1560] sm:$0xff]
    %v710 = vld [vmem:[%s1 + $0x1568] sm:$0xff]
    %v711 = vld [vmem:[%s1 + $0x1570] sm:$0xff]
    %v712 = vld [vmem:[%s1 + $0x1578] sm:$0xff]
    %v713 = vld [vmem:[%s1 + $0x1580] sm:$0xff]
    %v714 = vld [vmem:[%s1 + $0x1588] sm:$0xff]
    %v715 = vld [vmem:[%s1 + $0x1590] sm:$0xff]
    %v716 = vld [vmem:[%s1 + $0x1598] sm:$0xff]
    %v717 = vld [vmem:[%s1 + $0x15a0] sm:$0xff]
    %v718 = vld [vmem:[%s1 + $0x15a8] sm:$0xff]
    %v719 = vld [vmem:[%s1 + $0x15b0] sm:$0xff]
    %v720 = vld [vmem:[%s1 + $0x15b8] sm:$0xff]
    %v721 = vld [vmem:[%s1 + $0x15c0] sm:$0xff]
    %v722 = vld [vmem:[%s1 + $0x15c8] sm:$0xff]
    %v723 = vld [vmem:[%s1 + $0x15d0] sm:$0xff]
    %v724 = vld [vmem:[%s1 + $0x15d8] sm:$0xff]
    %v725 = vld [vmem:[%s1 + $0x15e0] sm:$0xff]
    %v726 = vld [vmem:[%s1 + $0x15e8] sm:$0xff]
    %v727 = vld [vmem:[%s1 + $0x15f0] sm:$0xff]
    %v728 = vld [vmem:[%s1 + $0x15f8] sm:$0xff]
    %v729 = vld [vmem:[%s1 + $0x1600] sm:$0xff]
    %v730 = vld [vmem:[%s1 + $0x1608] sm:$0xff]
    %v731 = vld [vmem:[%s1 + $0x1610] sm:$0xff]
    %v732 = vld [vmem:[%s1 + $0x1618] sm:$0xff]
    %v733 = vld [vmem:[%s1 + $0x1620] sm:$0xff]
    %v734 = vld [vmem:[%s1 + $0x1628] sm:$0xff]
    %v735 = vld [vmem:[%s1 + $0x1630] sm:$0xff]
    %v736 = vld [vmem:[%s1 + $0x1638] sm:$0xff]
    %v737 = vld [vmem:[%s1 + $0x1640] sm:$0xff]
    %v738 = vld [vmem:[%s1 + $0x1648] sm:$0xff]
    %v739 = vld [vmem:[%s1 + $0x1650] sm:$0xff]
    %v740 = vld [vmem:[%s1 + $0x1658] sm:$0xff]
    %v741 = vld [vmem:[%s1 + $0x1660] sm:$0xff]
    %v742 = vld [vmem:[%s1 + $0x1668] sm:$0xff]
    %v743 = vld [vmem:[%s1 + $0x1670] sm:$0xff]
    %v744 = vld [vmem:[%s1 + $0x1678] sm:$0xff]
    %v745 = vld [vmem:[%s1 + $0x1680] sm:$0xff]
    %v746 = vld [vmem:[%s1 + $0x1688] sm:$0xff]
    %v747 = vld [vmem:[%s1 + $0x1690] sm:$0xff]
    %v748 = vld [vmem:[%s1 + $0x1698] sm:$0xff]
    %v749 = vld [vmem:[%s1 + $0x16a0] sm:$0xff]
    %v750 = vld [vmem:[%s1 + $0x16a8] sm:$0xff]
    %v751 = vld [vmem:[%s1 + $0x16b0] sm:$0xff]
    %v752 = vld [vmem:[%s1 + $0x16b8] sm:$0xff]
    %v753 = vld [vmem:[%s1 + $0x16c0] sm:$0xff]
    %v754 = vld [vmem:[%s1 + $0x16c8] sm:$0xff]
    %v755 = vld [vmem:[%s1 + $0x16d0] sm:$0xff]
    %v756 = vld [vmem:[%s1 + $0x16d8] sm:$0xff]
    %v757 = vld [vmem:[%s1 + $0x16e0] sm:$0xff]
    %v758 = vld [vmem:[%s1 + $0x16e8] sm:$0xff]
    %v759 = vld [vmem:[%s1 + $0x16f0] sm:$0xff]
    %v760 = vld [vmem:[%s1 + $0x16f8] sm:$0xff]
    %v761 = vld [vmem:[%s1 + $0x1700] sm:$0xff]
    %v762 = vld [vmem:[%s1 + $0x1708] sm:$0xff]
    %v763 = vld [vmem:[%s1 + $0x1710] sm:$0xff]
    %v764 = vld [vmem:[%s1 + $0x1718] sm:$0xff]
    %v765 = vld [vmem:[%s1 + $0x1720] sm:$0xff]
    %v766 = vld [vmem:[%s1 + $0x1728] sm:$0xff]
    %v767 = vld [vmem:[%s1 + $0x1730] sm:$0xff]
    %v768 = vld [vmem:[%s1 + $0x1738] sm:$0xff]
    %v769 = vld [vmem:[%s1 + $0x1740] sm:$0xff]
    %v770 = vld [vmem:[%s1 + $0x1748] sm:$0xff]
    %v771 = vld [vmem:[%s1 + $0x1750] sm:$0xff]
    %v772 = vld [vmem:[%s1 + $0x1758] sm:$0xff]
    %v773 = vld [vmem:[%s1 + $0x1760] sm:$0xff]
    %v774 = vld [vmem:[%s1 + $0x1768] sm:$0xff]
    %v775 = vld [vmem:[%s1 + $0x1770] sm:$0xff]
    %v776 = vld [vmem:[%s1 + $0x1778] sm:$0xff]
    %v777 = vld [vmem:[%s1 + $0x1780] sm:$0xff]
    %v778 = vld [vmem:[%s1 + $0x1788] sm:$0xff]
    %v779 = vld [vmem:[%s1 + $0x1790] sm:$0xff]
    %v780 = vld [vmem:[%s1 + $0x1798] sm:$0xff]
    %v781 = vld [vmem:[%s1 + $0x17a0] sm:$0xff]
    %v782 = vld [vmem:[%s1 + $0x17a8] sm:$0xff]
    %v783 = vld [vmem:[%s1 + $0x17b0] sm:$0xff]
    %v784 = vld [vmem:[%s1 + $0x17b8] sm:$0xff]
    %v785 = vld [vmem:[%s1 + $0x17c0] sm:$0xff]
    %v786 = vld [vmem:[%s1 + $0x17c8] sm:$0xff]
    %v787 = vld [vmem:[%s1 + $0x17d0] sm:$0xff]
    %v788 = vld [vmem:[%s1 + $0x17d8] sm:$0xff]
    %v789 = vld [vmem:[%s1 + $0x17e0] sm:$0xff]
    %v790 = vld [vmem:[%s1 + $0x17e8] sm:$0xff]
    %v791 = vld [vmem:[%s1 + $0x17f0] sm:$0xff]
    %v792 = vld [vmem:[%s1 + $0x17f8] sm:$0xff]
    %v793 = vld [vmem:[%s1 + $0x1800] sm:$0xff]
    %v794 = vld [vmem:[%s1 + $0x1808] sm:$0xff]
    %v795 = vld [vmem:[%s1 + $0x1810] sm:$0xff]
    %v796 = vld [vmem:[%s1 + $0x1818] sm:$0xff]
    %v797 = vld [vmem:[%s1 + $0x1820] sm:$0xff]
    %v798 = vld [vmem:[%s1 + $0x1828] sm:$0xff]
    %v799 = vld [vmem:[%s1 + $0x1830] sm:$0xff]
    %v800 = vld [vmem:[%s1 + $0x1838] sm:$0xff]
    %v801 = vld [vmem:[%s1 + $0x1840] sm:$0xff]
    %v802 = vld [vmem:[%s1 + $0x1848] sm:$0xff]
    %v803 = vld [vmem:[%s1 + $0x1850] sm:$0xff]
    %v804 = vld [vmem:[%s1 + $0x1858] sm:$0xff]
    %v805 = vld [vmem:[%s1 + $0x1860] sm:$0xff]
    %v806 = vld [vmem:[%s1 + $0x1868] sm:$0xff]
    %v807 = vld [vmem:[%s1 + $0x1870] sm:$0xff]
    %v808 = vld [vmem:[%s1 + $0x1878] sm:$0xff]
    %v809 = vld [vmem:[%s1 + $0x1880] sm:$0xff]
    %v810 = vld [vmem:[%s1 + $0x1888] sm:$0xff]
    %v811 = vld [vmem:[%s1 + $0x1890] sm:$0xff]
    %v812 = vld [vmem:[%s1 + $0x1898] sm:$0xff]
    %v813 = vld [vmem:[%s1 + $0x18a0] sm:$0xff]
    %v814 = vld [vmem:[%s1 + $0x18a8] sm:$0xff]
    %v815 = vld [vmem:[%s1 + $0x18b0] sm:$0xff]
    %v816 = vld [vmem:[%s1 + $0x18b8] sm:$0xff]
    %v817 = vld [vmem:[%s1 + $0x18c0] sm:$0xff]
    %v818 = vld [vmem:[%s1 + $0x18c8] sm:$0xff]
    %v819 = vld [vmem:[%s1 + $0x18d0] sm:$0xff]
    %v820 = vld [vmem:[%s1 + $0x18d8] sm:$0xff]
    %v821 = vld [vmem:[%s1 + $0x18e0] sm:$0xff]
    %v822 = vld [vmem:[%s1 + $0x18e8] sm:$0xff]
    %v823 = vld [vmem:[%s1 + $0x18f0] sm:$0xff]
    %v824 = vld [vmem:[%s1 + $0x18f8] sm:$0xff]
    %v825 = vld [vmem:[%s1 + $0x1900] sm:$0xff]
    %v826 = vld [vmem:[%s1 + $0x1908] sm:$0xff]
    %v827 = vld [vmem:[%s1 + $0x1910] sm:$0xff]
    %v828 = vld [vmem:[%s1 + $0x1918] sm:$0xff]
    %v829 = vld [vmem:[%s1 + $0x1920] sm:$0xff]
    %v830 = vld [vmem:[%s1 + $0x1928] sm:$0xff]
    %v831 = vld [vmem:[%s1 + $0x1930] sm:$0xff]
    %v832 = vld [vmem:[%s1 + $0x1938] sm:$0xff]
    %v833 = vld [vmem:[%s1 + $0x1940] sm:$0xff]
    %v834 = vld [vmem:[%s1 + $0x1948] sm:$0xff]
    %v835 = vld [vmem:[%s1 + $0x1950] sm:$0xff]
    %v836 = vld [vmem:[%s1 + $0x1958] sm:$0xff]
    %v837 = vld [vmem:[%s1 + $0x1960] sm:$0xff]
    %v838 = vld [vmem:[%s1 + $0x1968] sm:$0xff]
    %v839 = vld [vmem:[%s1 + $0x1970] sm:$0xff]
    %v840 = vld [vmem:[%s1 + $0x1978] sm:$0xff]
    %v841 = vld [vmem:[%s1 + $0x1980] sm:$0xff]
    %v842 = vld [vmem:[%s1 + $0x1988] sm:$0xff]
    %v843 = vld [vmem:[%s1 + $0x1990] sm:$0xff]
    %v844 = vld [vmem:[%s1 + $0x1998] sm:$0xff]
    %v845 = vld [vmem:[%s1 + $0x19a0] sm:$0xff]
    %v846 = vld [vmem:[%s1 + $0x19a8] sm:$0xff]
    %v847 = vld [vmem:[%s1 + $0x19b0] sm:$0xff]
    %v848 = vld [vmem:[%s1 + $0x19b8] sm:$0xff]
    %v849 = vld [vmem:[%s1 + $0x19c0] sm:$0xff]
    %v850 = vld [vmem:[%s1 + $0x19c8] sm:$0xff]
    %v851 = vld [vmem:[%s1 + $0x19d0] sm:$0xff]
    %v852 = vld [vmem:[%s1 + $0x19d8] sm:$0xff]
    %v853 = vld [vmem:[%s1 + $0x19e0] sm:$0xff]
    %v854 = vld [vmem:[%s1 + $0x19e8] sm:$0xff]
    %v855 = vld [vmem:[%s1 + $0x19f0] sm:$0xff]
    %v856 = vld [vmem:[%s1 + $0x19f8] sm:$0xff]
    %v857 = vld [vmem:[%s1 + $0x1a00] sm:$0xff]
    %v858 = vld [vmem:[%s1 + $0x1a08] sm:$0xff]
    %v859 = vld [vmem:[%s1 + $0x1a10] sm:$0xff]
    %v860 = vld [vmem:[%s1 + $0x1a18] sm:$0xff]
    %v861 = vld [vmem:[%s1 + $0x1a20] sm:$0xff]
    %v862 = vld [vmem:[%s1 + $0x1a28] sm:$0xff]
    %v863 = vld [vmem:[%s1 + $0x1a30] sm:$0xff]
    %v864 = vld [vmem:[%s1 + $0x1a38] sm:$0xff]
    %v865 = vld [vmem:[%s1 + $0x1a40] sm:$0xff]
    %v866 = vld [vmem:[%s1 + $0x1a48] sm:$0xff]
    %v867 = vld [vmem:[%s1 + $0x1a50] sm:$0xff]
    %v868 = vld [vmem:[%s1 + $0x1a58] sm:$0xff]
    %v869 = vld [vmem:[%s1 + $0x1a60] sm:$0xff]
    %v870 = vld [vmem:[%s1 + $0x1a68] sm:$0xff]
    %v871 = vld [vmem:[%s1 + $0x1a70] sm:$0xff]
    %v872 = vld [vmem:[%s1 + $0x1a78] sm:$0xff]
    %v873 = vld [vmem:[%s1 + $0x1a80] sm:$0xff]
    %v874 = vld [vmem:[%s1 + $0x1a88] sm:$0xff]
    %v875 = vld [vmem:[%s1 + $0x1a90] sm:$0xff]
    %v876 = vld [vmem:[%s1 + $0x1a98] sm:$0xff]
    %v877 = vld [vmem:[%s1 + $0x1aa0] sm:$0xff]
    %v878 = vld [vmem:[%s1 + $0x1aa8] sm:$0xff]
    %v879 = vld [vmem:[%s1 + $0x1ab0] sm:$0xff]
    %v880 = vld [vmem:[%s1 + $0x1ab8] sm:$0xff]
    %v881 = vld [vmem:[%s1 + $0x1ac0] sm:$0xff]
    %v882 = vld [vmem:[%s1 + $0x1ac8] sm:$0xff]
    %v883 = vld [vmem:[%s1 + $0x1ad0] sm:$0xff]
    %v884 = vld [vmem:[%s1 + $0x1ad8] sm:$0xff]
    %v885 = vld [vmem:[%s1 + $0x1ae0] sm:$0xff]
    %v886 = vld [vmem:[%s1 + $0x1ae8] sm:$0xff]
    %v887 = vld [vmem:[%s1 + $0x1af0] sm:$0xff]
    %v888 = vld [vmem:[%s1 + $0x1af8] sm:$0xff]
    %v889 = vld [vmem:[%s1 + $0x1b00] sm:$0xff]
    %v890 = vld [vmem:[%s1 + $0x1b08] sm:$0xff]
    %v891 = vld [vmem:[%s1 + $0x1b10] sm:$0xff]
    %v892 = vld [vmem:[%s1 + $0x1b18] sm:$0xff]
    %v893 = vld [vmem:[%s1 + $0x1b20] sm:$0xff]
    %v894 = vld [vmem:[%s1 + $0x1b28] sm:$0xff]
    %v895 = vld [vmem:[%s1 + $0x1b30] sm:$0xff]
    %v896 = vld [vmem:[%s1 + $0x1b38] sm:$0xff]
    %v897 = vld [vmem:[%s1 + $0x1b40] sm:$0xff]
    %v898 = vld [vmem:[%s1 + $0x1b48] sm:$0xff]
    %v899 = vld [vmem:[%s1 + $0x1b50] sm:$0xff]
    %v900 = vld [vmem:[%s1 + $0x1b58] sm:$0xff]
    %v901 = vld [vmem:[%s1 + $0x1b60] sm:$0xff]
    %v902 = vld [vmem:[%s1 + $0x1b68] sm:$0xff]
    %v903 = vld [vmem:[%s1 + $0x1b70] sm:$0xff]
    %v904 = vld [vmem:[%s1 + $0x1b78] sm:$0xff]
    %v905 = vld [vmem:[%s1 + $0x1b80] sm:$0xff]
    %v906 = vld [vmem:[%s1 + $0x1b88] sm:$0xff]
    %v907 = vld [vmem:[%s1 + $0x1b90] sm:$0xff]
    %v908 = vld [vmem:[%s1 + $0x1b98] sm:$0xff]
    %v909 = vld [vmem:[%s1 + $0x1ba0] sm:$0xff]
    %v910 = vld [vmem:[%s1 + $0x1ba8] sm:$0xff]
    %v911 = vld [vmem:[%s1 + $0x1bb0] sm:$0xff]
    %v912 = vld [vmem:[%s1 + $0x1bb8] sm:$0xff]
    %v913 = vld [vmem:[%s1 + $0x1bc0] sm:$0xff]
    %v914 = vld [vmem:[%s1 + $0x1bc8] sm:$0xff]
    %v915 = vld [vmem:[%s1 + $0x1bd0] sm:$0xff]
    %v916 = vld [vmem:[%s1 + $0x1bd8] sm:$0xff]
    %v917 = vld [vmem:[%s1 + $0x1be0] sm:$0xff]
    %v918 = vld [vmem:[%s1 + $0x1be8] sm:$0xff]
    %v919 = vld [vmem:[%s1 + $0x1bf0] sm:$0xff]
    %v920 = vld [vmem:[%s1 + $0x1bf8] sm:$0xff]
    %v921 = vld [vmem:[%s1 + $0x1c00] sm:$0xff]
    %v922 = vld [vmem:[%s1 + $0x1c08] sm:$0xff]
    %v923 = vld [vmem:[%s1 + $0x1c10] sm:$0xff]
    %v924 = vld [vmem:[%s1 + $0x1c18] sm:$0xff]
    %v925 = vld [vmem:[%s1 + $0x1c20] sm:$0xff]
    %v926 = vld [vmem:[%s1 + $0x1c28] sm:$0xff]
    %v927 = vld [vmem:[%s1 + $0x1c30] sm:$0xff]
    %v928 = vld [vmem:[%s1 + $0x1c38] sm:$0xff]
    %v929 = vld [vmem:[%s1 + $0x1c40] sm:$0xff]
    %v930 = vld [vmem:[%s1 + $0x1c48] sm:$0xff]
    %v931 = vld [vmem:[%s1 + $0x1c50] sm:$0xff]
    %v932 = vld [vmem:[%s1 + $0x1c58] sm:$0xff]
    %v933 = vld [vmem:[%s1 + $0x1c60] sm:$0xff]
    %v934 = vld [vmem:[%s1 + $0x1c68] sm:$0xff]
    %v935 = vld [vmem:[%s1 + $0x1c70] sm:$0xff]
    %v936 = vld [vmem:[%s1 + $0x1c78] sm:$0xff]
    %v937 = vld [vmem:[%s1 + $0x1c80] sm:$0xff]
    %v938 = vld [vmem:[%s1 + $0x1c88] sm:$0xff]
    %v939 = vld [vmem:[%s1 + $0x1c90] sm:$0xff]
    %v940 = vld [vmem:[%s1 + $0x1c98] sm:$0xff]
    %v941 = vld [vmem:[%s1 + $0x1ca0] sm:$0xff]
    %v942 = vld [vmem:[%s1 + $0x1ca8] sm:$0xff]
    %v943 = vld [vmem:[%s1 + $0x1cb0] sm:$0xff]
    %v944 = vld [vmem:[%s1 + $0x1cb8] sm:$0xff]
    %v945 = vld [vmem:[%s1 + $0x1cc0] sm:$0xff]
    %v946 = vld [vmem:[%s1 + $0x1cc8] sm:$0xff]
    %v947 = vld [vmem:[%s1 + $0x1cd0] sm:$0xff]
    %v948 = vld [vmem:[%s1 + $0x1cd8] sm:$0xff]
    %v949 = vld [vmem:[%s1 + $0x1ce0] sm:$0xff]
    %v950 = vld [vmem:[%s1 + $0x1ce8] sm:$0xff]
    %v951 = vld [vmem:[%s1 + $0x1cf0] sm:$0xff]
    %v952 = vld [vmem:[%s1 + $0x1cf8] sm:$0xff]
    %v953 = vld [vmem:[%s1 + $0x1d00] sm:$0xff]
    %v954 = vld [vmem:[%s1 + $0x1d08] sm:$0xff]
    %v955 = vld [vmem:[%s1 + $0x1d10] sm:$0xff]
    %v956 = vld [vmem:[%s1 + $0x1d18] sm:$0xff]
    %v957 = vld [vmem:[%s1 + $0x1d20] sm:$0xff]
    %v958 = vld [vmem:[%s1 + $0x1d28] sm:$0xff]
    %v959 = vld [vmem:[%s1 + $0x1d30] sm:$0xff]
    %v960 = vld [vmem:[%s1 + $0x1d38] sm:$0xff]
    %v961 = vld [vmem:[%s1 + $0x1d40] sm:$0xff]
    %v962 = vld [vmem:[%s1 + $0x1d48] sm:$0xff]
    %v963 = vld [vmem:[%s1 + $0x1d50] sm:$0xff]
    %v964 = vld [vmem:[%s1 + $0x1d58] sm:$0xff]
    %v965 = vld [vmem:[%s1 + $0x1d60] sm:$0xff]
    %v966 = vld [vmem:[%s1 + $0x1d68] sm:$0xff]
    %v967 = vld [vmem:[%s1 + $0x1d70] sm:$0xff]
    %v968 = vld [vmem:[%s1 + $0x1d78] sm:$0xff]
    %v969 = vld [vmem:[%s1 + $0x1d80] sm:$0xff]
    %v970 = vld [vmem:[%s1 + $0x1d88] sm:$0xff]
    %v971 = vld [vmem:[%s1 + $0x1d90] sm:$0xff]
    %v972 = vld [vmem:[%s1 + $0x1d98] sm:$0xff]
    %v973 = vld [vmem:[%s1 + $0x1da0] sm:$0xff]
    %v974 = vld [vmem:[%s1 + $0x1da8] sm:$0xff]
    %v975 = vld [vmem:[%s1 + $0x1db0] sm:$0xff]
    %v976 = vld [vmem:[%s1 + $0x1db8] sm:$0xff]
    %v977 = vld [vmem:[%s1 + $0x1dc0] sm:$0xff]
    %v978 = vld [vmem:[%s1 + $0x1dc8] sm:$0xff]
    %v979 = vld [vmem:[%s1 + $0x1dd0] sm:$0xff]
    %v980 = vld [vmem:[%s1 + $0x1dd8] sm:$0xff]
    %v981 = vld [vmem:[%s1 + $0x1de0] sm:$0xff]
    %v982 = vld [vmem:[%s1 + $0x1de8] sm:$0xff]
    %v983 = vld [vmem:[%s1 + $0x1df0] sm:$0xff]
    %v984 = vld [vmem:[%s1 + $0x1df8] sm:$0xff]
    %v985 = vld [vmem:[%s1 + $0x1e00] sm:$0xff]
    %v986 = vld [vmem:[%s1 + $0x1e08] sm:$0xff]
    %v987 = vld [vmem:[%s1 + $0x1e10] sm:$0xff]
    %v988 = vld [vmem:[%s1 + $0x1e18] sm:$0xff]
    %v989 = vld [vmem:[%s1 + $0x1e20] sm:$0xff]
    %v990 = vld [vmem:[%s1 + $0x1e28] sm:$0xff]
    %v991 = vld [vmem:[%s1 + $0x1e30] sm:$0xff]
    %v992 = vld [vmem:[%s1 + $0x1e38] sm:$0xff]
    %v993 = vld [vmem:[%s1 + $0x1e40] sm:$0xff]
    %v994 = vld [vmem:[%s1 + $0x1e48] sm:$0xff]
    %v995 = vld [vmem:[%s1 + $0x1e50] sm:$0xff]
    %v996 = vld [vmem:[%s1 + $0x1e58] sm:$0xff]
    %v997 = vld [vmem:[%s1 + $0x1e60] sm:$0xff]
    %v998 = vld [vmem:[%s1 + $0x1e68] sm:$0xff]
    %v999 = vld [vmem:[%s1 + $0x1e70] sm:$0xff]
    %v1000 = vld [vmem:[%s1 + $0x1e78] sm:$0xff]
    %v1001 = vld [vmem:[%s1 + $0x1e80] sm:$0xff]
    %v1002 = vld [vmem:[%s1 + $0x1e88] sm:$0xff]
    %v1003 = vld [vmem:[%s1 + $0x1e90] sm:$0xff]
    %v1004 = vld [vmem:[%s1 + $0x1e98] sm:$0xff]
    %v1005 = vld [vmem:[%s1 + $0x1ea0] sm:$0xff]
    %v1006 = vld [vmem:[%s1 + $0x1ea8] sm:$0xff]
    %v1007 = vld [vmem:[%s1 + $0x1eb0] sm:$0xff]
    %v1008 = vld [vmem:[%s1 + $0x1eb8] sm:$0xff]
    %v1009 = vld [vmem:[%s1 + $0x1ec0] sm:$0xff]
    %v1010 = vld [vmem:[%s1 + $0x1ec8] sm:$0xff]
    %v1011 = vld [vmem:[%s1 + $0x1ed0] sm:$0xff]
    %v1012 = vld [vmem:[%s1 + $0x1ed8] sm:$0xff]
    %v1013 = vld [vmem:[%s1 + $0x1ee0] sm:$0xff]
    %v1014 = vld [vmem:[%s1 + $0x1ee8] sm:$0xff]
    %v1015 = vld [vmem:[%s1 + $0x1ef0] sm:$0xff]
    %v1016 = vld [vmem:[%s1 + $0x1ef8] sm:$0xff]
    %v1017 = vld [vmem:[%s1 + $0x1f00] sm:$0xff]
    %v1018 = vld [vmem:[%s1 + $0x1f08] sm:$0xff]
    %v1019 = vld [vmem:[%s1 + $0x1f10] sm:$0xff]
    %v1020 = vld [vmem:[%s1 + $0x1f18] sm:$0xff]
    %v1021 = vld [vmem:[%s1 + $0x1f20] sm:$0xff]
    %v1022 = vld [vmem:[%s1 + $0x1f28] sm:$0xff]
    %v1023 = vld [vmem:[%s1 + $0x1f30] sm:$0xff]
    %v1024 = vld [vmem:[%s1 + $0x1f38] sm:$0xff]
    %v1025 = vld [vmem:[%s2] sm:$0xf]
    %v1027 = vlaneseq
    %v1028 = vshrl.u32 %v1027, 7
    %v1029 = vsub.s32 0, %v1028
    %v1030 = vrot.slane %v1025, %v1029
    %v1031 = vlaneseq
    %v1032 = vshrl.u32 %v1031, 7
    %v1033 = vsub.s32 1, %v1032
    %v1034 = vrot.slane %v1025, %v1033
    %v1035 = vlaneseq
    %v1036 = vshrl.u32 %v1035, 7
    %v1037 = vsub.s32 2, %v1036
    %v1038 = vrot.slane %v1025, %v1037
    %v1039 = vlaneseq
    %v1040 = vshrl.u32 %v1039, 7
    %v1041 = vsub.s32 3, %v1040
    %v1042 = vrot.slane %v1025, %v1041
    %v1051 = vcombine.high %v21, %v21
    %v1053 = vunpack.c.l.s4 1983009808
    %v1054 = vunpack.c.0.s8 %v1053
    %v1055 = vlaneseq
    %v1056 = vshrl.u32 %v1055, 7
    %v1057 = vsub.s32 %v1054, %v1056
    %v1058 = vrot.slane %v21, %v1057
    %v1060 = vunpack.c.l.s4 1983009808
    %v1061 = vunpack.c.0.s8 %v1060
    %v1062 = vlaneseq
    %v1063 = vshrl.u32 %v1062, 7
    %v1064 = vsub.s32 %v1061, %v1063
    %v1065 = vrot.slane %v1051, %v1064
    %v1066 = vcombine.high %v1058, %v1058
    %v1067 = vcombine.high %v1065, %v1065
    %v1068 = vcombine.high %v22, %v22
    %v1070 = vunpack.c.l.s4 1983009808
    %v1071 = vunpack.c.0.s8 %v1070
    %v1072 = vlaneseq
    %v1073 = vshrl.u32 %v1072, 7
    %v1074 = vsub.s32 %v1071, %v1073
    %v1075 = vrot.slane %v22, %v1074
    %v1077 = vunpack.c.l.s4 1983009808
    %v1078 = vunpack.c.0.s8 %v1077
    %v1079 = vlaneseq
    %v1080 = vshrl.u32 %v1079, 7
    %v1081 = vsub.s32 %v1078, %v1080
    %v1082 = vrot.slane %v1068, %v1081
    %v1083 = vcombine.high %v1075, %v1075
    %v1084 = vcombine.high %v1082, %v1082
    %v1085 = vcombine.high %v23, %v23
    %v1087 = vunpack.c.l.s4 1983009808
    %v1088 = vunpack.c.0.s8 %v1087
    %v1089 = vlaneseq
    %v1090 = vshrl.u32 %v1089, 7
    %v1091 = vsub.s32 %v1088, %v1090
    %v1092 = vrot.slane %v23, %v1091
    %v1094 = vunpack.c.l.s4 1983009808
    %v1095 = vunpack.c.0.s8 %v1094
    %v1096 = vlaneseq
    %v1097 = vshrl.u32 %v1096, 7
    %v1098 = vsub.s32 %v1095, %v1097
    %v1099 = vrot.slane %v1085, %v1098
    %v1100 = vcombine.high %v1092, %v1092
    %v1101 = vcombine.high %v1099, %v1099
    %v1102 = vcombine.high %v24, %v24
    %v1104 = vunpack.c.l.s4 1983009808
    %v1105 = vunpack.c.0.s8 %v1104
    %v1106 = vlaneseq
    %v1107 = vshrl.u32 %v1106, 7
    %v1108 = vsub.s32 %v1105, %v1107
    %v1109 = vrot.slane %v24, %v1108
    %v1111 = vunpack.c.l.s4 1983009808
    %v1112 = vunpack.c.0.s8 %v1111
    %v1113 = vlaneseq
    %v1114 = vshrl.u32 %v1113, 7
    %v1115 = vsub.s32 %v1112, %v1114
    %v1116 = vrot.slane %v1102, %v1115
    %v1117 = vcombine.high %v1109, %v1109
    %v1118 = vcombine.high %v1116, %v1116
    %vm1134 = vcmask 654336
    %v1135 = vsel %vm1134, %v1118, 0
    %1137 = vmatprep.subr.mxu0 %v86
    %1138 = vmatpush1.msra.mxu0 %v85
    %1139 = vmatprep.subr.mxu0 %v82
    %1140 = vmatpush1.msra.mxu0 %v81
    %1141 = vmatprep.subr.mxu0 %v78
    %1142 = vmatpush1.msra.mxu0 %v77
    %1143 = vmatprep.subr.mxu0 %v74
    %1144 = vmatpush1.msra.mxu0 %v73
    %1145 = vmatprep.subr.mxu0 %v70
    %1146 = vmatpush1.msra.mxu0 %v69
    %1147 = vmatprep.subr.mxu0 %v66
    %1148 = vmatpush1.msra.mxu0 %v65
    %1149 = vmatprep.subr.mxu0 %v62
    %1150 = vmatpush1.msra.mxu0 %v61
    %1151 = vmatprep.subr.mxu0 %v58
    %1152 = vmatpush1.msra.mxu0 %v57
    %1153 = vmatprep.subr.mxu0 %v54
    %1154 = vmatpush1.msra.mxu0 %v53
    %1155 = vmatprep.subr.mxu0 %v50
    %1156 = vmatpush1.msra.mxu0 %v49
    %1157 = vmatprep.subr.mxu0 %v46
    %1158 = vmatpush1.msra.mxu0 %v45
    %1159 = vmatprep.subr.mxu0 %v42
    %1160 = vmatpush1.msra.mxu0 %v41
    %1161 = vmatprep.subr.mxu0 %v38
    %1162 = vmatpush1.msra.mxu0 %v37
    %1163 = vmatprep.subr.mxu0 %v34
    %1164 = vmatpush1.msra.mxu0 %v33
    %1165 = vmatprep.subr.mxu0 %v30
    %1166 = vmatpush1.msra.mxu0 %v29
    %1167 = vmatprep.subr.mxu0 %v26
    %1168 = vmatpush1.msra.mxu0 %v25
    %1169 = vmatprep.subr.mxu0 %v150
    %1170 = vmatpush2.msra.mxu0 %v149
    %1171 = vmatprep.subr.mxu0 %v146
    %1172 = vmatpush2.msra.mxu0 %v145
    %1173 = vmatprep.subr.mxu0 %v142
    %1174 = vmatpush2.msra.mxu0 %v141
    %1175 = vmatprep.subr.mxu0 %v138
    %1176 = vmatpush2.msra.mxu0 %v137
    %1177 = vmatprep.subr.mxu0 %v134
    %1178 = vmatpush2.msra.mxu0 %v133
    %1179 = vmatprep.subr.mxu0 %v130
    %1180 = vmatpush2.msra.mxu0 %v129
    %1181 = vmatprep.subr.mxu0 %v126
    %1182 = vmatpush2.msra.mxu0 %v125
    %1183 = vmatprep.subr.mxu0 %v122
    %1184 = vmatpush2.msra.mxu0 %v121
    %1185 = vmatprep.subr.mxu0 %v118
    %1186 = vmatpush2.msra.mxu0 %v117
    %1187 = vmatprep.subr.mxu0 %v114
    %1188 = vmatpush2.msra.mxu0 %v113
    %1189 = vmatprep.subr.mxu0 %v110
    %1190 = vmatpush2.msra.mxu0 %v109
    %1191 = vmatprep.subr.mxu0 %v106
    %1192 = vmatpush2.msra.mxu0 %v105
    %1193 = vmatprep.subr.mxu0 %v102
    %1194 = vmatpush2.msra.mxu0 %v101
    %1195 = vmatprep.subr.mxu0 %v98
    %1196 = vmatpush2.msra.mxu0 %v97
    %1197 = vmatprep.subr.mxu0 %v94
    %1198 = vmatpush2.msra.mxu0 %v93
    %1199 = vmatprep.subr.mxu0 %v90
    %1200 = vmatpush2.msra.mxu0 %v89
    %1201 = vmatprep.mubr.f32.mxu0 %v1066
    %1202 = vmatmul.mubr.f32.gmra.mxu0 %v1058
    %v1203 = vpop.f32.mrf.mxu0
    %v1204 = vadd.f32 %v1030, %v1203
    %v1205 = vpop.f32.mrf.mxu0
    %v1206 = vadd.f32 %v1034, %v1205
    %1207 = vdwg.mxu0
    %1208 = vmatprep.subr.mxu0 %v214
    %1209 = vmatpush1.msra.mxu0 %v213
    %1210 = vmatprep.subr.mxu0 %v210
    %1211 = vmatpush1.msra.mxu0 %v209
    %1212 = vmatprep.subr.mxu0 %v206
    %1213 = vmatpush1.msra.mxu0 %v205
    %1214 = vmatprep.subr.mxu0 %v202
    %1215 = vmatpush1.msra.mxu0 %v201
    %1216 = vmatprep.subr.mxu0 %v198
    %1217 = vmatpush1.msra.mxu0 %v197
    %1218 = vmatprep.subr.mxu0 %v194
    %1219 = vmatpush1.msra.mxu0 %v193
    %1220 = vmatprep.subr.mxu0 %v190
    %1221 = vmatpush1.msra.mxu0 %v189
    %1222 = vmatprep.subr.mxu0 %v186
    %1223 = vmatpush1.msra.mxu0 %v185
    %1224 = vmatprep.subr.mxu0 %v182
    %1225 = vmatpush1.msra.mxu0 %v181
    %1226 = vmatprep.subr.mxu0 %v178
    %1227 = vmatpush1.msra.mxu0 %v177
    %1228 = vmatprep.subr.mxu0 %v174
    %1229 = vmatpush1.msra.mxu0 %v173
    %1230 = vmatprep.subr.mxu0 %v170
    %1231 = vmatpush1.msra.mxu0 %v169
    %1232 = vmatprep.subr.mxu0 %v166
    %1233 = vmatpush1.msra.mxu0 %v165
    %1234 = vmatprep.subr.mxu0 %v162
    %1235 = vmatpush1.msra.mxu0 %v161
    %1236 = vmatprep.subr.mxu0 %v158
    %1237 = vmatpush1.msra.mxu0 %v157
    %1238 = vmatprep.subr.mxu0 %v154
    %1239 = vmatpush1.msra.mxu0 %v153
    %1240 = vmatprep.subr.mxu0 %v278
    %1241 = vmatpush2.msra.mxu0 %v277
    %1242 = vmatprep.subr.mxu0 %v274
    %1243 = vmatpush2.msra.mxu0 %v273
    %1244 = vmatprep.subr.mxu0 %v270
    %1245 = vmatpush2.msra.mxu0 %v269
    %1246 = vmatprep.subr.mxu0 %v266
    %1247 = vmatpush2.msra.mxu0 %v265
    %1248 = vmatprep.subr.mxu0 %v262
    %1249 = vmatpush2.msra.mxu0 %v261
    %1250 = vmatprep.subr.mxu0 %v258
    %1251 = vmatpush2.msra.mxu0 %v257
    %1252 = vmatprep.subr.mxu0 %v254
    %1253 = vmatpush2.msra.mxu0 %v253
    %1254 = vmatprep.subr.mxu0 %v250
    %1255 = vmatpush2.msra.mxu0 %v249
    %1256 = vmatprep.subr.mxu0 %v246
    %1257 = vmatpush2.msra.mxu0 %v245
    %1258 = vmatprep.subr.mxu0 %v242
    %1259 = vmatpush2.msra.mxu0 %v241
    %1260 = vmatprep.subr.mxu0 %v238
    %1261 = vmatpush2.msra.mxu0 %v237
    %1262 = vmatprep.subr.mxu0 %v234
    %1263 = vmatpush2.msra.mxu0 %v233
    %1264 = vmatprep.subr.mxu0 %v230
    %1265 = vmatpush2.msra.mxu0 %v229
    %1266 = vmatprep.subr.mxu0 %v226
    %1267 = vmatpush2.msra.mxu0 %v225
    %1268 = vmatprep.subr.mxu0 %v222
    %1269 = vmatpush2.msra.mxu0 %v221
    %1270 = vmatprep.subr.mxu0 %v218
    %1271 = vmatpush2.msra.mxu0 %v217
    %1272 = vmatprep.mubr.f32.mxu0 %v1067
    %1273 = vmatmul.mubr.f32.gmra.mxu0 %v1065
    %v1274 = vpop.f32.mrf.mxu0
    %v1275 = vadd.f32 %v1204, %v1274
    %v1276 = vpop.f32.mrf.mxu0
    %v1277 = vadd.f32 %v1206, %v1276
    %1278 = vdwg.mxu0
    %1279 = vmatprep.subr.mxu0 %v342
    %1280 = vmatpush1.msra.mxu0 %v341
    %1281 = vmatprep.subr.mxu0 %v338
    %1282 = vmatpush1.msra.mxu0 %v337
    %1283 = vmatprep.subr.mxu0 %v334
    %1284 = vmatpush1.msra.mxu0 %v333
    %1285 = vmatprep.subr.mxu0 %v330
    %1286 = vmatpush1.msra.mxu0 %v329
    %1287 = vmatprep.subr.mxu0 %v326
    %1288 = vmatpush1.msra.mxu0 %v325
    %1289 = vmatprep.subr.mxu0 %v322
    %1290 = vmatpush1.msra.mxu0 %v321
    %1291 = vmatprep.subr.mxu0 %v318
    %1292 = vmatpush1.msra.mxu0 %v317
    %1293 = vmatprep.subr.mxu0 %v314
    %1294 = vmatpush1.msra.mxu0 %v313
    %1295 = vmatprep.subr.mxu0 %v310
    %1296 = vmatpush1.msra.mxu0 %v309
    %1297 = vmatprep.subr.mxu0 %v306
    %1298 = vmatpush1.msra.mxu0 %v305
    %1299 = vmatprep.subr.mxu0 %v302
    %1300 = vmatpush1.msra.mxu0 %v301
    %1301 = vmatprep.subr.mxu0 %v298
    %1302 = vmatpush1.msra.mxu0 %v297
    %1303 = vmatprep.subr.mxu0 %v294
    %1304 = vmatpush1.msra.mxu0 %v293
    %1305 = vmatprep.subr.mxu0 %v290
    %1306 = vmatpush1.msra.mxu0 %v289
    %1307 = vmatprep.subr.mxu0 %v286
    %1308 = vmatpush1.msra.mxu0 %v285
    %1309 = vmatprep.subr.mxu0 %v282
    %1310 = vmatpush1.msra.mxu0 %v281
    %1311 = vmatprep.subr.mxu0 %v406
    %1312 = vmatpush2.msra.mxu0 %v405
    %1313 = vmatprep.subr.mxu0 %v402
    %1314 = vmatpush2.msra.mxu0 %v401
    %1315 = vmatprep.subr.mxu0 %v398
    %1316 = vmatpush2.msra.mxu0 %v397
    %1317 = vmatprep.subr.mxu0 %v394
    %1318 = vmatpush2.msra.mxu0 %v393
    %1319 = vmatprep.subr.mxu0 %v390
    %1320 = vmatpush2.msra.mxu0 %v389
    %1321 = vmatprep.subr.mxu0 %v386
    %1322 = vmatpush2.msra.mxu0 %v385
    %1323 = vmatprep.subr.mxu0 %v382
    %1324 = vmatpush2.msra.mxu0 %v381
    %1325 = vmatprep.subr.mxu0 %v378
    %1326 = vmatpush2.msra.mxu0 %v377
    %1327 = vmatprep.subr.mxu0 %v374
    %1328 = vmatpush2.msra.mxu0 %v373
    %1329 = vmatprep.subr.mxu0 %v370
    %1330 = vmatpush2.msra.mxu0 %v369
    %1331 = vmatprep.subr.mxu0 %v366
    %1332 = vmatpush2.msra.mxu0 %v365
    %1333 = vmatprep.subr.mxu0 %v362
    %1334 = vmatpush2.msra.mxu0 %v361
    %1335 = vmatprep.subr.mxu0 %v358
    %1336 = vmatpush2.msra.mxu0 %v357
    %1337 = vmatprep.subr.mxu0 %v354
    %1338 = vmatpush2.msra.mxu0 %v353
    %1339 = vmatprep.subr.mxu0 %v350
    %1340 = vmatpush2.msra.mxu0 %v349
    %1341 = vmatprep.subr.mxu0 %v346
    %1342 = vmatpush2.msra.mxu0 %v345
    %1343 = vmatprep.mubr.f32.mxu0 %v1083
    %1344 = vmatmul.mubr.f32.gmra.mxu0 %v1075
    %v1345 = vpop.f32.mrf.mxu0
    %v1346 = vadd.f32 %v1275, %v1345
    %v1347 = vpop.f32.mrf.mxu0
    %v1348 = vadd.f32 %v1277, %v1347
    %1349 = vdwg.mxu0
    %1350 = vmatprep.subr.mxu0 %v470
    %1351 = vmatpush1.msra.mxu0 %v469
    %1352 = vmatprep.subr.mxu0 %v466
    %1353 = vmatpush1.msra.mxu0 %v465
    %1354 = vmatprep.subr.mxu0 %v462
    %1355 = vmatpush1.msra.mxu0 %v461
    %1356 = vmatprep.subr.mxu0 %v458
    %1357 = vmatpush1.msra.mxu0 %v457
    %1358 = vmatprep.subr.mxu0 %v454
    %1359 = vmatpush1.msra.mxu0 %v453
    %1360 = vmatprep.subr.mxu0 %v450
    %1361 = vmatpush1.msra.mxu0 %v449
    %1362 = vmatprep.subr.mxu0 %v446
    %1363 = vmatpush1.msra.mxu0 %v445
    %1364 = vmatprep.subr.mxu0 %v442
    %1365 = vmatpush1.msra.mxu0 %v441
    %1366 = vmatprep.subr.mxu0 %v438
    %1367 = vmatpush1.msra.mxu0 %v437
    %1368 = vmatprep.subr.mxu0 %v434
    %1369 = vmatpush1.msra.mxu0 %v433
    %1370 = vmatprep.subr.mxu0 %v430
    %1371 = vmatpush1.msra.mxu0 %v429
    %1372 = vmatprep.subr.mxu0 %v426
    %1373 = vmatpush1.msra.mxu0 %v425
    %1374 = vmatprep.subr.mxu0 %v422
    %1375 = vmatpush1.msra.mxu0 %v421
    %1376 = vmatprep.subr.mxu0 %v418
    %1377 = vmatpush1.msra.mxu0 %v417
    %1378 = vmatprep.subr.mxu0 %v414
    %1379 = vmatpush1.msra.mxu0 %v413
    %1380 = vmatprep.subr.mxu0 %v410
    %1381 = vmatpush1.msra.mxu0 %v409
    %1382 = vmatprep.subr.mxu0 %v534
    %1383 = vmatpush2.msra.mxu0 %v533
    %1384 = vmatprep.subr.mxu0 %v530
    %1385 = vmatpush2.msra.mxu0 %v529
    %1386 = vmatprep.subr.mxu0 %v526
    %1387 = vmatpush2.msra.mxu0 %v525
    %1388 = vmatprep.subr.mxu0 %v522
    %1389 = vmatpush2.msra.mxu0 %v521
    %1390 = vmatprep.subr.mxu0 %v518
    %1391 = vmatpush2.msra.mxu0 %v517
    %1392 = vmatprep.subr.mxu0 %v514
    %1393 = vmatpush2.msra.mxu0 %v513
    %1394 = vmatprep.subr.mxu0 %v510
    %1395 = vmatpush2.msra.mxu0 %v509
    %1396 = vmatprep.subr.mxu0 %v506
    %1397 = vmatpush2.msra.mxu0 %v505
    %1398 = vmatprep.subr.mxu0 %v502
    %1399 = vmatpush2.msra.mxu0 %v501
    %1400 = vmatprep.subr.mxu0 %v498
    %1401 = vmatpush2.msra.mxu0 %v497
    %1402 = vmatprep.subr.mxu0 %v494
    %1403 = vmatpush2.msra.mxu0 %v493
    %1404 = vmatprep.subr.mxu0 %v490
    %1405 = vmatpush2.msra.mxu0 %v489
    %1406 = vmatprep.subr.mxu0 %v486
    %1407 = vmatpush2.msra.mxu0 %v485
    %1408 = vmatprep.subr.mxu0 %v482
    %1409 = vmatpush2.msra.mxu0 %v481
    %1410 = vmatprep.subr.mxu0 %v478
    %1411 = vmatpush2.msra.mxu0 %v477
    %1412 = vmatprep.subr.mxu0 %v474
    %1413 = vmatpush2.msra.mxu0 %v473
    %1414 = vmatprep.mubr.f32.mxu0 %v1084
    %1415 = vmatmul.mubr.f32.gmra.mxu0 %v1082
    %v1416 = vpop.f32.mrf.mxu0
    %v1417 = vadd.f32 %v1346, %v1416
    %v1418 = vpop.f32.mrf.mxu0
    %v1419 = vadd.f32 %v1348, %v1418
    %1420 = vdwg.mxu0
    %1421 = vmatprep.subr.mxu0 %v598
    %1422 = vmatpush1.msra.mxu0 %v597
    %1423 = vmatprep.subr.mxu0 %v594
    %1424 = vmatpush1.msra.mxu0 %v593
    %1425 = vmatprep.subr.mxu0 %v590
    %1426 = vmatpush1.msra.mxu0 %v589
    %1427 = vmatprep.subr.mxu0 %v586
    %1428 = vmatpush1.msra.mxu0 %v585
    %1429 = vmatprep.subr.mxu0 %v582
    %1430 = vmatpush1.msra.mxu0 %v581
    %1431 = vmatprep.subr.mxu0 %v578
    %1432 = vmatpush1.msra.mxu0 %v577
    %1433 = vmatprep.subr.mxu0 %v574
    %1434 = vmatpush1.msra.mxu0 %v573
    %1435 = vmatprep.subr.mxu0 %v570
    %1436 = vmatpush1.msra.mxu0 %v569
    %1437 = vmatprep.subr.mxu0 %v566
    %1438 = vmatpush1.msra.mxu0 %v565
    %1439 = vmatprep.subr.mxu0 %v562
    %1440 = vmatpush1.msra.mxu0 %v561
    %1441 = vmatprep.subr.mxu0 %v558
    %1442 = vmatpush1.msra.mxu0 %v557
    %1443 = vmatprep.subr.mxu0 %v554
    %1444 = vmatpush1.msra.mxu0 %v553
    %1445 = vmatprep.subr.mxu0 %v550
    %1446 = vmatpush1.msra.mxu0 %v549
    %1447 = vmatprep.subr.mxu0 %v546
    %1448 = vmatpush1.msra.mxu0 %v545
    %1449 = vmatprep.subr.mxu0 %v542
    %1450 = vmatpush1.msra.mxu0 %v541
    %1451 = vmatprep.subr.mxu0 %v538
    %1452 = vmatpush1.msra.mxu0 %v537
    %1453 = vmatprep.subr.mxu0 %v662
    %1454 = vmatpush2.msra.mxu0 %v661
    %1455 = vmatprep.subr.mxu0 %v658
    %1456 = vmatpush2.msra.mxu0 %v657
    %1457 = vmatprep.subr.mxu0 %v654
    %1458 = vmatpush2.msra.mxu0 %v653
    %1459 = vmatprep.subr.mxu0 %v650
    %1460 = vmatpush2.msra.mxu0 %v649
    %1461 = vmatprep.subr.mxu0 %v646
    %1462 = vmatpush2.msra.mxu0 %v645
    %1463 = vmatprep.subr.mxu0 %v642
    %1464 = vmatpush2.msra.mxu0 %v641
    %1465 = vmatprep.subr.mxu0 %v638
    %1466 = vmatpush2.msra.mxu0 %v637
    %1467 = vmatprep.subr.mxu0 %v634
    %1468 = vmatpush2.msra.mxu0 %v633
    %1469 = vmatprep.subr.mxu0 %v630
    %1470 = vmatpush2.msra.mxu0 %v629
    %1471 = vmatprep.subr.mxu0 %v626
    %1472 = vmatpush2.msra.mxu0 %v625
    %1473 = vmatprep.subr.mxu0 %v622
    %1474 = vmatpush2.msra.mxu0 %v621
    %1475 = vmatprep.subr.mxu0 %v618
    %1476 = vmatpush2.msra.mxu0 %v617
    %1477 = vmatprep.subr.mxu0 %v614
    %1478 = vmatpush2.msra.mxu0 %v613
    %1479 = vmatprep.subr.mxu0 %v610
    %1480 = vmatpush2.msra.mxu0 %v609
    %1481 = vmatprep.subr.mxu0 %v606
    %1482 = vmatpush2.msra.mxu0 %v605
    %1483 = vmatprep.subr.mxu0 %v602
    %1484 = vmatpush2.msra.mxu0 %v601
    %1485 = vmatprep.mubr.f32.mxu0 %v1100
    %1486 = vmatmul.mubr.f32.gmra.mxu0 %v1092
    %v1487 = vpop.f32.mrf.mxu0
    %v1488 = vadd.f32 %v1417, %v1487
    %v1489 = vpop.f32.mrf.mxu0
    %v1490 = vadd.f32 %v1419, %v1489
    %1491 = vdwg.mxu0
    %1492 = vmatprep.subr.mxu0 %v726
    %1493 = vmatpush1.msra.mxu0 %v725
    %1494 = vmatprep.subr.mxu0 %v722
    %1495 = vmatpush1.msra.mxu0 %v721
    %1496 = vmatprep.subr.mxu0 %v718
    %1497 = vmatpush1.msra.mxu0 %v717
    %1498 = vmatprep.subr.mxu0 %v714
    %1499 = vmatpush1.msra.mxu0 %v713
    %1500 = vmatprep.subr.mxu0 %v710
    %1501 = vmatpush1.msra.mxu0 %v709
    %1502 = vmatprep.subr.mxu0 %v706
    %1503 = vmatpush1.msra.mxu0 %v705
    %1504 = vmatprep.subr.mxu0 %v702
    %1505 = vmatpush1.msra.mxu0 %v701
    %1506 = vmatprep.subr.mxu0 %v698
    %1507 = vmatpush1.msra.mxu0 %v697
    %1508 = vmatprep.subr.mxu0 %v694
    %1509 = vmatpush1.msra.mxu0 %v693
    %1510 = vmatprep.subr.mxu0 %v690
    %1511 = vmatpush1.msra.mxu0 %v689
    %1512 = vmatprep.subr.mxu0 %v686
    %1513 = vmatpush1.msra.mxu0 %v685
    %1514 = vmatprep.subr.mxu0 %v682
    %1515 = vmatpush1.msra.mxu0 %v681
    %1516 = vmatprep.subr.mxu0 %v678
    %1517 = vmatpush1.msra.mxu0 %v677
    %1518 = vmatprep.subr.mxu0 %v674
    %1519 = vmatpush1.msra.mxu0 %v673
    %1520 = vmatprep.subr.mxu0 %v670
    %1521 = vmatpush1.msra.mxu0 %v669
    %1522 = vmatprep.subr.mxu0 %v666
    %1523 = vmatpush1.msra.mxu0 %v665
    %1524 = vmatprep.subr.mxu0 %v790
    %1525 = vmatpush2.msra.mxu0 %v789
    %1526 = vmatprep.subr.mxu0 %v786
    %1527 = vmatpush2.msra.mxu0 %v785
    %1528 = vmatprep.subr.mxu0 %v782
    %1529 = vmatpush2.msra.mxu0 %v781
    %1530 = vmatprep.subr.mxu0 %v778
    %1531 = vmatpush2.msra.mxu0 %v777
    %1532 = vmatprep.subr.mxu0 %v774
    %1533 = vmatpush2.msra.mxu0 %v773
    %1534 = vmatprep.subr.mxu0 %v770
    %1535 = vmatpush2.msra.mxu0 %v769
    %1536 = vmatprep.subr.mxu0 %v766
    %1537 = vmatpush2.msra.mxu0 %v765
    %1538 = vmatprep.subr.mxu0 %v762
    %1539 = vmatpush2.msra.mxu0 %v761
    %1540 = vmatprep.subr.mxu0 %v758
    %1541 = vmatpush2.msra.mxu0 %v757
    %1542 = vmatprep.subr.mxu0 %v754
    %1543 = vmatpush2.msra.mxu0 %v753
    %1544 = vmatprep.subr.mxu0 %v750
    %1545 = vmatpush2.msra.mxu0 %v749
    %1546 = vmatprep.subr.mxu0 %v746
    %1547 = vmatpush2.msra.mxu0 %v745
    %1548 = vmatprep.subr.mxu0 %v742
    %1549 = vmatpush2.msra.mxu0 %v741
    %1550 = vmatprep.subr.mxu0 %v738
    %1551 = vmatpush2.msra.mxu0 %v737
    %1552 = vmatprep.subr.mxu0 %v734
    %1553 = vmatpush2.msra.mxu0 %v733
    %1554 = vmatprep.subr.mxu0 %v730
    %1555 = vmatpush2.msra.mxu0 %v729
    %1556 = vmatprep.mubr.f32.mxu0 %v1101
    %1557 = vmatmul.mubr.f32.gmra.mxu0 %v1099
    %v1558 = vpop.f32.mrf.mxu0
    %v1559 = vadd.f32 %v1488, %v1558
    %v1560 = vpop.f32.mrf.mxu0
    %v1561 = vadd.f32 %v1490, %v1560
    %1562 = vdwg.mxu0
    %1563 = vmatprep.subr.mxu0 %v854
    %1564 = vmatpush1.msra.mxu0 %v853
    %1565 = vmatprep.subr.mxu0 %v850
    %1566 = vmatpush1.msra.mxu0 %v849
    %1567 = vmatprep.subr.mxu0 %v846
    %1568 = vmatpush1.msra.mxu0 %v845
    %1569 = vmatprep.subr.mxu0 %v842
    %1570 = vmatpush1.msra.mxu0 %v841
    %1571 = vmatprep.subr.mxu0 %v838
    %1572 = vmatpush1.msra.mxu0 %v837
    %1573 = vmatprep.subr.mxu0 %v834
    %1574 = vmatpush1.msra.mxu0 %v833
    %1575 = vmatprep.subr.mxu0 %v830
    %1576 = vmatpush1.msra.mxu0 %v829
    %1577 = vmatprep.subr.mxu0 %v826
    %1578 = vmatpush1.msra.mxu0 %v825
    %1579 = vmatprep.subr.mxu0 %v822
    %1580 = vmatpush1.msra.mxu0 %v821
    %1581 = vmatprep.subr.mxu0 %v818
    %1582 = vmatpush1.msra.mxu0 %v817
    %1583 = vmatprep.subr.mxu0 %v814
    %1584 = vmatpush1.msra.mxu0 %v813
    %1585 = vmatprep.subr.mxu0 %v810
    %1586 = vmatpush1.msra.mxu0 %v809
    %1587 = vmatprep.subr.mxu0 %v806
    %1588 = vmatpush1.msra.mxu0 %v805
    %1589 = vmatprep.subr.mxu0 %v802
    %1590 = vmatpush1.msra.mxu0 %v801
    %1591 = vmatprep.subr.mxu0 %v798
    %1592 = vmatpush1.msra.mxu0 %v797
    %1593 = vmatprep.subr.mxu0 %v794
    %1594 = vmatpush1.msra.mxu0 %v793
    %1595 = vmatprep.subr.mxu0 %v918
    %1596 = vmatpush2.msra.mxu0 %v917
    %1597 = vmatprep.subr.mxu0 %v914
    %1598 = vmatpush2.msra.mxu0 %v913
    %1599 = vmatprep.subr.mxu0 %v910
    %1600 = vmatpush2.msra.mxu0 %v909
    %1601 = vmatprep.subr.mxu0 %v906
    %1602 = vmatpush2.msra.mxu0 %v905
    %1603 = vmatprep.subr.mxu0 %v902
    %1604 = vmatpush2.msra.mxu0 %v901
    %1605 = vmatprep.subr.mxu0 %v898
    %1606 = vmatpush2.msra.mxu0 %v897
    %1607 = vmatprep.subr.mxu0 %v894
    %1608 = vmatpush2.msra.mxu0 %v893
    %1609 = vmatprep.subr.mxu0 %v890
    %1610 = vmatpush2.msra.mxu0 %v889
    %1611 = vmatprep.subr.mxu0 %v886
    %1612 = vmatpush2.msra.mxu0 %v885
    %1613 = vmatprep.subr.mxu0 %v882
    %1614 = vmatpush2.msra.mxu0 %v881
    %1615 = vmatprep.subr.mxu0 %v878
    %1616 = vmatpush2.msra.mxu0 %v877
    %1617 = vmatprep.subr.mxu0 %v874
    %1618 = vmatpush2.msra.mxu0 %v873
    %1619 = vmatprep.subr.mxu0 %v870
    %1620 = vmatpush2.msra.mxu0 %v869
    %1621 = vmatprep.subr.mxu0 %v866
    %1622 = vmatpush2.msra.mxu0 %v865
    %1623 = vmatprep.subr.mxu0 %v862
    %1624 = vmatpush2.msra.mxu0 %v861
    %1625 = vmatprep.subr.mxu0 %v858
    %1626 = vmatpush2.msra.mxu0 %v857
    %1627 = vmatprep.mubr.f32.mxu0 %v1117
    %1628 = vmatmul.mubr.f32.gmra.mxu0 %v1109
    %v1629 = vpop.f32.mrf.mxu0
    %v1630 = vadd.f32 %v1559, %v1629
    %v1631 = vpop.f32.mrf.mxu0
    %v1632 = vadd.f32 %v1561, %v1631
    %1633 = vdwg.mxu0
    %1634 = vmatprep.subr.mxu0 %v982
    %1635 = vmatpush1.msra.mxu0 %v981
    %1636 = vmatprep.subr.mxu0 %v978
    %1637 = vmatpush1.msra.mxu0 %v977
    %1638 = vmatprep.subr.mxu0 %v974
    %1639 = vmatpush1.msra.mxu0 %v973
    %1640 = vmatprep.subr.mxu0 %v970
    %1641 = vmatpush1.msra.mxu0 %v969
    %1642 = vmatprep.subr.mxu0 %v966
    %1643 = vmatpush1.msra.mxu0 %v965
    %1644 = vmatprep.subr.mxu0 %v962
    %1645 = vmatpush1.msra.mxu0 %v961
    %1646 = vmatprep.subr.mxu0 %v958
    %1647 = vmatpush1.msra.mxu0 %v957
    %1648 = vmatprep.subr.mxu0 %v954
    %1649 = vmatpush1.msra.mxu0 %v953
    %1650 = vmatprep.subr.mxu0 %v950
    %1651 = vmatpush1.msra.mxu0 %v949
    %1652 = vmatprep.subr.mxu0 %v946
    %1653 = vmatpush1.msra.mxu0 %v945
    %1654 = vmatprep.subr.mxu0 %v942
    %1655 = vmatpush1.msra.mxu0 %v941
    %1656 = vmatprep.subr.mxu0 %v938
    %1657 = vmatpush1.msra.mxu0 %v937
    %1658 = vmatprep.subr.mxu0 %v934
    %1659 = vmatpush1.msra.mxu0 %v933
    %1660 = vmatprep.subr.mxu0 %v930
    %1661 = vmatpush1.msra.mxu0 %v929
    %1662 = vmatprep.subr.mxu0 %v926
    %1663 = vmatpush1.msra.mxu0 %v925
    %1664 = vmatprep.subr.mxu0 %v922
    %1665 = vmatpush1.msra.mxu0 %v921
    %1666 = vmatprep.subr.mxu0 0.0
    %1667 = vmatpush2.msra.mxu0 0.0
    %1668 = vmatprep.subr.mxu0 0.0
    %1669 = vmatpush2.msra.mxu0 0.0
    %1670 = vmatprep.subr.mxu0 0.0
    %1671 = vmatpush2.msra.mxu0 0.0
    %1672 = vmatprep.subr.mxu0 0.0
    %1673 = vmatpush2.msra.mxu0 0.0
    %1674 = vmatprep.subr.mxu0 0.0
    %1675 = vmatpush2.msra.mxu0 0.0
    %1676 = vmatprep.subr.mxu0 0.0
    %1677 = vmatpush2.msra.mxu0 0.0
    %1678 = vmatprep.subr.mxu0 %v1022
    %1679 = vmatpush2.msra.mxu0 %v1021
    %1680 = vmatprep.subr.mxu0 %v1018
    %1681 = vmatpush2.msra.mxu0 %v1017
    %1682 = vmatprep.subr.mxu0 %v1014
    %1683 = vmatpush2.msra.mxu0 %v1013
    %1684 = vmatprep.subr.mxu0 %v1010
    %1685 = vmatpush2.msra.mxu0 %v1009
    %1686 = vmatprep.subr.mxu0 %v1006
    %1687 = vmatpush2.msra.mxu0 %v1005
    %1688 = vmatprep.subr.mxu0 %v1002
    %1689 = vmatpush2.msra.mxu0 %v1001
    %1690 = vmatprep.subr.mxu0 %v998
    %1691 = vmatpush2.msra.mxu0 %v997
    %1692 = vmatprep.subr.mxu0 %v994
    %1693 = vmatpush2.msra.mxu0 %v993
    %1694 = vmatprep.subr.mxu0 %v990
    %1695 = vmatpush2.msra.mxu0 %v989
    %1696 = vmatprep.subr.mxu0 %v986
    %1697 = vmatpush2.msra.mxu0 %v985
    %1698 = vmatprep.mubr.f32.mxu0 %v1135
    %1699 = vmatmul.mubr.f32.gmra.mxu0 %v1116
    %v1700 = vpop.f32.mrf.mxu0
    %v1701 = vadd.f32 %v1630, %v1700
    %v1702 = vpop.f32.mrf.mxu0
    %v1703 = vadd.f32 %v1632, %v1702
    %1704 = vdwg.mxu0
    %1705 = vmatprep.subr.mxu0 %v88
    %1706 = vmatpush1.msra.mxu0 %v87
    %1707 = vmatprep.subr.mxu0 %v84
    %1708 = vmatpush1.msra.mxu0 %v83
    %1709 = vmatprep.subr.mxu0 %v80
    %1710 = vmatpush1.msra.mxu0 %v79
    %1711 = vmatprep.subr.mxu0 %v76
    %1712 = vmatpush1.msra.mxu0 %v75
    %1713 = vmatprep.subr.mxu0 %v72
    %1714 = vmatpush1.msra.mxu0 %v71
    %1715 = vmatprep.subr.mxu0 %v68
    %1716 = vmatpush1.msra.mxu0 %v67
    %1717 = vmatprep.subr.mxu0 %v64
    %1718 = vmatpush1.msra.mxu0 %v63
    %1719 = vmatprep.subr.mxu0 %v60
    %1720 = vmatpush1.msra.mxu0 %v59
    %1721 = vmatprep.subr.mxu0 %v56
    %1722 = vmatpush1.msra.mxu0 %v55
    %1723 = vmatprep.subr.mxu0 %v52
    %1724 = vmatpush1.msra.mxu0 %v51
    %1725 = vmatprep.subr.mxu0 %v48
    %1726 = vmatpush1.msra.mxu0 %v47
    %1727 = vmatprep.subr.mxu0 %v44
    %1728 = vmatpush1.msra.mxu0 %v43
    %1729 = vmatprep.subr.mxu0 %v40
    %1730 = vmatpush1.msra.mxu0 %v39
    %1731 = vmatprep.subr.mxu0 %v36
    %1732 = vmatpush1.msra.mxu0 %v35
    %1733 = vmatprep.subr.mxu0 %v32
    %1734 = vmatpush1.msra.mxu0 %v31
    %1735 = vmatprep.subr.mxu0 %v28
    %1736 = vmatpush1.msra.mxu0 %v27
    %1737 = vmatprep.subr.mxu0 %v152
    %1738 = vmatpush2.msra.mxu0 %v151
    %1739 = vmatprep.subr.mxu0 %v148
    %1740 = vmatpush2.msra.mxu0 %v147
    %1741 = vmatprep.subr.mxu0 %v144
    %1742 = vmatpush2.msra.mxu0 %v143
    %1743 = vmatprep.subr.mxu0 %v140
    %1744 = vmatpush2.msra.mxu0 %v139
    %1745 = vmatprep.subr.mxu0 %v136
    %1746 = vmatpush2.msra.mxu0 %v135
    %1747 = vmatprep.subr.mxu0 %v132
    %1748 = vmatpush2.msra.mxu0 %v131
    %1749 = vmatprep.subr.mxu0 %v128
    %1750 = vmatpush2.msra.mxu0 %v127
    %1751 = vmatprep.subr.mxu0 %v124
    %1752 = vmatpush2.msra.mxu0 %v123
    %1753 = vmatprep.subr.mxu0 %v120
    %1754 = vmatpush2.msra.mxu0 %v119
    %1755 = vmatprep.subr.mxu0 %v116
    %1756 = vmatpush2.msra.mxu0 %v115
    %1757 = vmatprep.subr.mxu0 %v112
    %1758 = vmatpush2.msra.mxu0 %v111
    %1759 = vmatprep.subr.mxu0 %v108
    %1760 = vmatpush2.msra.mxu0 %v107
    %1761 = vmatprep.subr.mxu0 %v104
    %1762 = vmatpush2.msra.mxu0 %v103
    %1763 = vmatprep.subr.mxu0 %v100
    %1764 = vmatpush2.msra.mxu0 %v99
    %1765 = vmatprep.subr.mxu0 %v96
    %1766 = vmatpush2.msra.mxu0 %v95
    %1767 = vmatprep.subr.mxu0 %v92
    %1768 = vmatpush2.msra.mxu0 %v91
    %1769 = vmatprep.mubr.f32.mxu0 %v1066
    %1770 = vmatmul.mubr.f32.gmra.mxu0 %v1058
    %v1771 = vpop.f32.mrf.mxu0
    %v1772 = vadd.f32 %v1038, %v1771
    %v1773 = vpop.f32.mrf.mxu0
    %v1774 = vadd.f32 %v1042, %v1773
    %1775 = vdwg.mxu0
    %1776 = vmatprep.subr.mxu0 %v216
    %1777 = vmatpush1.msra.mxu0 %v215
    %1778 = vmatprep.subr.mxu0 %v212
    %1779 = vmatpush1.msra.mxu0 %v211
    %1780 = vmatprep.subr.mxu0 %v208
    %1781 = vmatpush1.msra.mxu0 %v207
    %1782 = vmatprep.subr.mxu0 %v204
    %1783 = vmatpush1.msra.mxu0 %v203
    %1784 = vmatprep.subr.mxu0 %v200
    %1785 = vmatpush1.msra.mxu0 %v199
    %1786 = vmatprep.subr.mxu0 %v196
    %1787 = vmatpush1.msra.mxu0 %v195
    %1788 = vmatprep.subr.mxu0 %v192
    %1789 = vmatpush1.msra.mxu0 %v191
    %1790 = vmatprep.subr.mxu0 %v188
    %1791 = vmatpush1.msra.mxu0 %v187
    %1792 = vmatprep.subr.mxu0 %v184
    %1793 = vmatpush1.msra.mxu0 %v183
    %1794 = vmatprep.subr.mxu0 %v180
    %1795 = vmatpush1.msra.mxu0 %v179
    %1796 = vmatprep.subr.mxu0 %v176
    %1797 = vmatpush1.msra.mxu0 %v175
    %1798 = vmatprep.subr.mxu0 %v172
    %1799 = vmatpush1.msra.mxu0 %v171
    %1800 = vmatprep.subr.mxu0 %v168
    %1801 = vmatpush1.msra.mxu0 %v167
    %1802 = vmatprep.subr.mxu0 %v164
    %1803 = vmatpush1.msra.mxu0 %v163
    %1804 = vmatprep.subr.mxu0 %v160
    %1805 = vmatpush1.msra.mxu0 %v159
    %1806 = vmatprep.subr.mxu0 %v156
    %1807 = vmatpush1.msra.mxu0 %v155
    %1808 = vmatprep.subr.mxu0 %v280
    %1809 = vmatpush2.msra.mxu0 %v279
    %1810 = vmatprep.subr.mxu0 %v276
    %1811 = vmatpush2.msra.mxu0 %v275
    %1812 = vmatprep.subr.mxu0 %v272
    %1813 = vmatpush2.msra.mxu0 %v271
    %1814 = vmatprep.subr.mxu0 %v268
    %1815 = vmatpush2.msra.mxu0 %v267
    %1816 = vmatprep.subr.mxu0 %v264
    %1817 = vmatpush2.msra.mxu0 %v263
    %1818 = vmatprep.subr.mxu0 %v260
    %1819 = vmatpush2.msra.mxu0 %v259
    %1820 = vmatprep.subr.mxu0 %v256
    %1821 = vmatpush2.msra.mxu0 %v255
    %1822 = vmatprep.subr.mxu0 %v252
    %1823 = vmatpush2.msra.mxu0 %v251
    %1824 = vmatprep.subr.mxu0 %v248
    %1825 = vmatpush2.msra.mxu0 %v247
    %1826 = vmatprep.subr.mxu0 %v244
    %1827 = vmatpush2.msra.mxu0 %v243
    %1828 = vmatprep.subr.mxu0 %v240
    %1829 = vmatpush2.msra.mxu0 %v239
    %1830 = vmatprep.subr.mxu0 %v236
    %1831 = vmatpush2.msra.mxu0 %v235
    %1832 = vmatprep.subr.mxu0 %v232
    %1833 = vmatpush2.msra.mxu0 %v231
    %1834 = vmatprep.subr.mxu0 %v228
    %1835 = vmatpush2.msra.mxu0 %v227
    %1836 = vmatprep.subr.mxu0 %v224
    %1837 = vmatpush2.msra.mxu0 %v223
    %1838 = vmatprep.subr.mxu0 %v220
    %1839 = vmatpush2.msra.mxu0 %v219
    %1840 = vmatprep.mubr.f32.mxu0 %v1067
    %1841 = vmatmul.mubr.f32.gmra.mxu0 %v1065
    %v1842 = vpop.f32.mrf.mxu0
    %v1843 = vadd.f32 %v1772, %v1842
    %v1844 = vpop.f32.mrf.mxu0
    %v1845 = vadd.f32 %v1774, %v1844
    %1846 = vdwg.mxu0
    %1847 = vmatprep.subr.mxu0 %v344
    %1848 = vmatpush1.msra.mxu0 %v343
    %1849 = vmatprep.subr.mxu0 %v340
    %1850 = vmatpush1.msra.mxu0 %v339
    %1851 = vmatprep.subr.mxu0 %v336
    %1852 = vmatpush1.msra.mxu0 %v335
    %1853 = vmatprep.subr.mxu0 %v332
    %1854 = vmatpush1.msra.mxu0 %v331
    %1855 = vmatprep.subr.mxu0 %v328
    %1856 = vmatpush1.msra.mxu0 %v327
    %1857 = vmatprep.subr.mxu0 %v324
    %1858 = vmatpush1.msra.mxu0 %v323
    %1859 = vmatprep.subr.mxu0 %v320
    %1860 = vmatpush1.msra.mxu0 %v319
    %1861 = vmatprep.subr.mxu0 %v316
    %1862 = vmatpush1.msra.mxu0 %v315
    %1863 = vmatprep.subr.mxu0 %v312
    %1864 = vmatpush1.msra.mxu0 %v311
    %1865 = vmatprep.subr.mxu0 %v308
    %1866 = vmatpush1.msra.mxu0 %v307
    %1867 = vmatprep.subr.mxu0 %v304
    %1868 = vmatpush1.msra.mxu0 %v303
    %1869 = vmatprep.subr.mxu0 %v300
    %1870 = vmatpush1.msra.mxu0 %v299
    %1871 = vmatprep.subr.mxu0 %v296
    %1872 = vmatpush1.msra.mxu0 %v295
    %1873 = vmatprep.subr.mxu0 %v292
    %1874 = vmatpush1.msra.mxu0 %v291
    %1875 = vmatprep.subr.mxu0 %v288
    %1876 = vmatpush1.msra.mxu0 %v287
    %1877 = vmatprep.subr.mxu0 %v284
    %1878 = vmatpush1.msra.mxu0 %v283
    %1879 = vmatprep.subr.mxu0 %v408
    %1880 = vmatpush2.msra.mxu0 %v407
    %1881 = vmatprep.subr.mxu0 %v404
    %1882 = vmatpush2.msra.mxu0 %v403
    %1883 = vmatprep.subr.mxu0 %v400
    %1884 = vmatpush2.msra.mxu0 %v399
    %1885 = vmatprep.subr.mxu0 %v396
    %1886 = vmatpush2.msra.mxu0 %v395
    %1887 = vmatprep.subr.mxu0 %v392
    %1888 = vmatpush2.msra.mxu0 %v391
    %1889 = vmatprep.subr.mxu0 %v388
    %1890 = vmatpush2.msra.mxu0 %v387
    %1891 = vmatprep.subr.mxu0 %v384
    %1892 = vmatpush2.msra.mxu0 %v383
    %1893 = vmatprep.subr.mxu0 %v380
    %1894 = vmatpush2.msra.mxu0 %v379
    %1895 = vmatprep.subr.mxu0 %v376
    %1896 = vmatpush2.msra.mxu0 %v375
    %1897 = vmatprep.subr.mxu0 %v372
    %1898 = vmatpush2.msra.mxu0 %v371
    %1899 = vmatprep.subr.mxu0 %v368
    %1900 = vmatpush2.msra.mxu0 %v367
    %1901 = vmatprep.subr.mxu0 %v364
    %1902 = vmatpush2.msra.mxu0 %v363
    %1903 = vmatprep.subr.mxu0 %v360
    %1904 = vmatpush2.msra.mxu0 %v359
    %1905 = vmatprep.subr.mxu0 %v356
    %1906 = vmatpush2.msra.mxu0 %v355
    %1907 = vmatprep.subr.mxu0 %v352
    %1908 = vmatpush2.msra.mxu0 %v351
    %1909 = vmatprep.subr.mxu0 %v348
    %1910 = vmatpush2.msra.mxu0 %v347
    %1911 = vmatprep.mubr.f32.mxu0 %v1083
    %1912 = vmatmul.mubr.f32.gmra.mxu0 %v1075
    %v1913 = vpop.f32.mrf.mxu0
    %v1914 = vadd.f32 %v1843, %v1913
    %v1915 = vpop.f32.mrf.mxu0
    %v1916 = vadd.f32 %v1845, %v1915
    %1917 = vdwg.mxu0
    %1918 = vmatprep.subr.mxu0 %v472
    %1919 = vmatpush1.msra.mxu0 %v471
    %1920 = vmatprep.subr.mxu0 %v468
    %1921 = vmatpush1.msra.mxu0 %v467
    %1922 = vmatprep.subr.mxu0 %v464
    %1923 = vmatpush1.msra.mxu0 %v463
    %1924 = vmatprep.subr.mxu0 %v460
    %1925 = vmatpush1.msra.mxu0 %v459
    %1926 = vmatprep.subr.mxu0 %v456
    %1927 = vmatpush1.msra.mxu0 %v455
    %1928 = vmatprep.subr.mxu0 %v452
    %1929 = vmatpush1.msra.mxu0 %v451
    %1930 = vmatprep.subr.mxu0 %v448
    %1931 = vmatpush1.msra.mxu0 %v447
    %1932 = vmatprep.subr.mxu0 %v444
    %1933 = vmatpush1.msra.mxu0 %v443
    %1934 = vmatprep.subr.mxu0 %v440
    %1935 = vmatpush1.msra.mxu0 %v439
    %1936 = vmatprep.subr.mxu0 %v436
    %1937 = vmatpush1.msra.mxu0 %v435
    %1938 = vmatprep.subr.mxu0 %v432
    %1939 = vmatpush1.msra.mxu0 %v431
    %1940 = vmatprep.subr.mxu0 %v428
    %1941 = vmatpush1.msra.mxu0 %v427
    %1942 = vmatprep.subr.mxu0 %v424
    %1943 = vmatpush1.msra.mxu0 %v423
    %1944 = vmatprep.subr.mxu0 %v420
    %1945 = vmatpush1.msra.mxu0 %v419
    %1946 = vmatprep.subr.mxu0 %v416
    %1947 = vmatpush1.msra.mxu0 %v415
    %1948 = vmatprep.subr.mxu0 %v412
    %1949 = vmatpush1.msra.mxu0 %v411
    %1950 = vmatprep.subr.mxu0 %v536
    %1951 = vmatpush2.msra.mxu0 %v535
    %1952 = vmatprep.subr.mxu0 %v532
    %1953 = vmatpush2.msra.mxu0 %v531
    %1954 = vmatprep.subr.mxu0 %v528
    %1955 = vmatpush2.msra.mxu0 %v527
    %1956 = vmatprep.subr.mxu0 %v524
    %1957 = vmatpush2.msra.mxu0 %v523
    %1958 = vmatprep.subr.mxu0 %v520
    %1959 = vmatpush2.msra.mxu0 %v519
    %1960 = vmatprep.subr.mxu0 %v516
    %1961 = vmatpush2.msra.mxu0 %v515
    %1962 = vmatprep.subr.mxu0 %v512
    %1963 = vmatpush2.msra.mxu0 %v511
    %1964 = vmatprep.subr.mxu0 %v508
    %1965 = vmatpush2.msra.mxu0 %v507
    %1966 = vmatprep.subr.mxu0 %v504
    %1967 = vmatpush2.msra.mxu0 %v503
    %1968 = vmatprep.subr.mxu0 %v500
    %1969 = vmatpush2.msra.mxu0 %v499
    %1970 = vmatprep.subr.mxu0 %v496
    %1971 = vmatpush2.msra.mxu0 %v495
    %1972 = vmatprep.subr.mxu0 %v492
    %1973 = vmatpush2.msra.mxu0 %v491
    %1974 = vmatprep.subr.mxu0 %v488
    %1975 = vmatpush2.msra.mxu0 %v487
    %1976 = vmatprep.subr.mxu0 %v484
    %1977 = vmatpush2.msra.mxu0 %v483
    %1978 = vmatprep.subr.mxu0 %v480
    %1979 = vmatpush2.msra.mxu0 %v479
    %1980 = vmatprep.subr.mxu0 %v476
    %1981 = vmatpush2.msra.mxu0 %v475
    %1982 = vmatprep.mubr.f32.mxu0 %v1084
    %1983 = vmatmul.mubr.f32.gmra.mxu0 %v1082
    %v1984 = vpop.f32.mrf.mxu0
    %v1985 = vadd.f32 %v1914, %v1984
    %v1986 = vpop.f32.mrf.mxu0
    %v1987 = vadd.f32 %v1916, %v1986
    %1988 = vdwg.mxu0
    %1989 = vmatprep.subr.mxu0 %v600
    %1990 = vmatpush1.msra.mxu0 %v599
    %1991 = vmatprep.subr.mxu0 %v596
    %1992 = vmatpush1.msra.mxu0 %v595
    %1993 = vmatprep.subr.mxu0 %v592
    %1994 = vmatpush1.msra.mxu0 %v591
    %1995 = vmatprep.subr.mxu0 %v588
    %1996 = vmatpush1.msra.mxu0 %v587
    %1997 = vmatprep.subr.mxu0 %v584
    %1998 = vmatpush1.msra.mxu0 %v583
    %1999 = vmatprep.subr.mxu0 %v580
    %2000 = vmatpush1.msra.mxu0 %v579
    %2001 = vmatprep.subr.mxu0 %v576
    %2002 = vmatpush1.msra.mxu0 %v575
    %2003 = vmatprep.subr.mxu0 %v572
    %2004 = vmatpush1.msra.mxu0 %v571
    %2005 = vmatprep.subr.mxu0 %v568
    %2006 = vmatpush1.msra.mxu0 %v567
    %2007 = vmatprep.subr.mxu0 %v564
    %2008 = vmatpush1.msra.mxu0 %v563
    %2009 = vmatprep.subr.mxu0 %v560
    %2010 = vmatpush1.msra.mxu0 %v559
    %2011 = vmatprep.subr.mxu0 %v556
    %2012 = vmatpush1.msra.mxu0 %v555
    %2013 = vmatprep.subr.mxu0 %v552
    %2014 = vmatpush1.msra.mxu0 %v551
    %2015 = vmatprep.subr.mxu0 %v548
    %2016 = vmatpush1.msra.mxu0 %v547
    %2017 = vmatprep.subr.mxu0 %v544
    %2018 = vmatpush1.msra.mxu0 %v543
    %2019 = vmatprep.subr.mxu0 %v540
    %2020 = vmatpush1.msra.mxu0 %v539
    %2021 = vmatprep.subr.mxu0 %v664
    %2022 = vmatpush2.msra.mxu0 %v663
    %2023 = vmatprep.subr.mxu0 %v660
    %2024 = vmatpush2.msra.mxu0 %v659
    %2025 = vmatprep.subr.mxu0 %v656
    %2026 = vmatpush2.msra.mxu0 %v655
    %2027 = vmatprep.subr.mxu0 %v652
    %2028 = vmatpush2.msra.mxu0 %v651
    %2029 = vmatprep.subr.mxu0 %v648
    %2030 = vmatpush2.msra.mxu0 %v647
    %2031 = vmatprep.subr.mxu0 %v644
    %2032 = vmatpush2.msra.mxu0 %v643
    %2033 = vmatprep.subr.mxu0 %v640
    %2034 = vmatpush2.msra.mxu0 %v639
    %2035 = vmatprep.subr.mxu0 %v636
    %2036 = vmatpush2.msra.mxu0 %v635
    %2037 = vmatprep.subr.mxu0 %v632
    %2038 = vmatpush2.msra.mxu0 %v631
    %2039 = vmatprep.subr.mxu0 %v628
    %2040 = vmatpush2.msra.mxu0 %v627
    %2041 = vmatprep.subr.mxu0 %v624
    %2042 = vmatpush2.msra.mxu0 %v623
    %2043 = vmatprep.subr.mxu0 %v620
    %2044 = vmatpush2.msra.mxu0 %v619
    %2045 = vmatprep.subr.mxu0 %v616
    %2046 = vmatpush2.msra.mxu0 %v615
    %2047 = vmatprep.subr.mxu0 %v612
    %2048 = vmatpush2.msra.mxu0 %v611
    %2049 = vmatprep.subr.mxu0 %v608
    %2050 = vmatpush2.msra.mxu0 %v607
    %2051 = vmatprep.subr.mxu0 %v604
    %2052 = vmatpush2.msra.mxu0 %v603
    %2053 = vmatprep.mubr.f32.mxu0 %v1100
    %2054 = vmatmul.mubr.f32.gmra.mxu0 %v1092
    %v2055 = vpop.f32.mrf.mxu0
    %v2056 = vadd.f32 %v1985, %v2055
    %v2057 = vpop.f32.mrf.mxu0
    %v2058 = vadd.f32 %v1987, %v2057
    %2059 = vdwg.mxu0
    %2060 = vmatprep.subr.mxu0 %v728
    %2061 = vmatpush1.msra.mxu0 %v727
    %2062 = vmatprep.subr.mxu0 %v724
    %2063 = vmatpush1.msra.mxu0 %v723
    %2064 = vmatprep.subr.mxu0 %v720
    %2065 = vmatpush1.msra.mxu0 %v719
    %2066 = vmatprep.subr.mxu0 %v716
    %2067 = vmatpush1.msra.mxu0 %v715
    %2068 = vmatprep.subr.mxu0 %v712
    %2069 = vmatpush1.msra.mxu0 %v711
    %2070 = vmatprep.subr.mxu0 %v708
    %2071 = vmatpush1.msra.mxu0 %v707
    %2072 = vmatprep.subr.mxu0 %v704
    %2073 = vmatpush1.msra.mxu0 %v703
    %2074 = vmatprep.subr.mxu0 %v700
    %2075 = vmatpush1.msra.mxu0 %v699
    %2076 = vmatprep.subr.mxu0 %v696
    %2077 = vmatpush1.msra.mxu0 %v695
    %2078 = vmatprep.subr.mxu0 %v692
    %2079 = vmatpush1.msra.mxu0 %v691
    %2080 = vmatprep.subr.mxu0 %v688
    %2081 = vmatpush1.msra.mxu0 %v687
    %2082 = vmatprep.subr.mxu0 %v684
    %2083 = vmatpush1.msra.mxu0 %v683
    %2084 = vmatprep.subr.mxu0 %v680
    %2085 = vmatpush1.msra.mxu0 %v679
    %2086 = vmatprep.subr.mxu0 %v676
    %2087 = vmatpush1.msra.mxu0 %v675
    %2088 = vmatprep.subr.mxu0 %v672
    %2089 = vmatpush1.msra.mxu0 %v671
    %2090 = vmatprep.subr.mxu0 %v668
    %2091 = vmatpush1.msra.mxu0 %v667
    %2092 = vmatprep.subr.mxu0 %v792
    %2093 = vmatpush2.msra.mxu0 %v791
    %2094 = vmatprep.subr.mxu0 %v788
    %2095 = vmatpush2.msra.mxu0 %v787
    %2096 = vmatprep.subr.mxu0 %v784
    %2097 = vmatpush2.msra.mxu0 %v783
    %2098 = vmatprep.subr.mxu0 %v780
    %2099 = vmatpush2.msra.mxu0 %v779
    %2100 = vmatprep.subr.mxu0 %v776
    %2101 = vmatpush2.msra.mxu0 %v775
    %2102 = vmatprep.subr.mxu0 %v772
    %2103 = vmatpush2.msra.mxu0 %v771
    %2104 = vmatprep.subr.mxu0 %v768
    %2105 = vmatpush2.msra.mxu0 %v767
    %2106 = vmatprep.subr.mxu0 %v764
    %2107 = vmatpush2.msra.mxu0 %v763
    %2108 = vmatprep.subr.mxu0 %v760
    %2109 = vmatpush2.msra.mxu0 %v759
    %2110 = vmatprep.subr.mxu0 %v756
    %2111 = vmatpush2.msra.mxu0 %v755
    %2112 = vmatprep.subr.mxu0 %v752
    %2113 = vmatpush2.msra.mxu0 %v751
    %2114 = vmatprep.subr.mxu0 %v748
    %2115 = vmatpush2.msra.mxu0 %v747
    %2116 = vmatprep.subr.mxu0 %v744
    %2117 = vmatpush2.msra.mxu0 %v743
    %2118 = vmatprep.subr.mxu0 %v740
    %2119 = vmatpush2.msra.mxu0 %v739
    %2120 = vmatprep.subr.mxu0 %v736
    %2121 = vmatpush2.msra.mxu0 %v735
    %2122 = vmatprep.subr.mxu0 %v732
    %2123 = vmatpush2.msra.mxu0 %v731
    %2124 = vmatprep.mubr.f32.mxu0 %v1101
    %2125 = vmatmul.mubr.f32.gmra.mxu0 %v1099
    %v2126 = vpop.f32.mrf.mxu0
    %v2127 = vadd.f32 %v2056, %v2126
    %v2128 = vpop.f32.mrf.mxu0
    %v2129 = vadd.f32 %v2058, %v2128
    %2130 = vdwg.mxu0
    %2131 = vmatprep.subr.mxu0 %v856
    %2132 = vmatpush1.msra.mxu0 %v855
    %2133 = vmatprep.subr.mxu0 %v852
    %2134 = vmatpush1.msra.mxu0 %v851
    %2135 = vmatprep.subr.mxu0 %v848
    %2136 = vmatpush1.msra.mxu0 %v847
    %2137 = vmatprep.subr.mxu0 %v844
    %2138 = vmatpush1.msra.mxu0 %v843
    %2139 = vmatprep.subr.mxu0 %v840
    %2140 = vmatpush1.msra.mxu0 %v839
    %2141 = vmatprep.subr.mxu0 %v836
    %2142 = vmatpush1.msra.mxu0 %v835
    %2143 = vmatprep.subr.mxu0 %v832
    %2144 = vmatpush1.msra.mxu0 %v831
    %2145 = vmatprep.subr.mxu0 %v828
    %2146 = vmatpush1.msra.mxu0 %v827
    %2147 = vmatprep.subr.mxu0 %v824
    %2148 = vmatpush1.msra.mxu0 %v823
    %2149 = vmatprep.subr.mxu0 %v820
    %2150 = vmatpush1.msra.mxu0 %v819
    %2151 = vmatprep.subr.mxu0 %v816
    %2152 = vmatpush1.msra.mxu0 %v815
    %2153 = vmatprep.subr.mxu0 %v812
    %2154 = vmatpush1.msra.mxu0 %v811
    %2155 = vmatprep.subr.mxu0 %v808
    %2156 = vmatpush1.msra.mxu0 %v807
    %2157 = vmatprep.subr.mxu0 %v804
    %2158 = vmatpush1.msra.mxu0 %v803
    %2159 = vmatprep.subr.mxu0 %v800
    %2160 = vmatpush1.msra.mxu0 %v799
    %2161 = vmatprep.subr.mxu0 %v796
    %2162 = vmatpush1.msra.mxu0 %v795
    %2163 = vmatprep.subr.mxu0 %v920
    %2164 = vmatpush2.msra.mxu0 %v919
    %2165 = vmatprep.subr.mxu0 %v916
    %2166 = vmatpush2.msra.mxu0 %v915
    %2167 = vmatprep.subr.mxu0 %v912
    %2168 = vmatpush2.msra.mxu0 %v911
    %2169 = vmatprep.subr.mxu0 %v908
    %2170 = vmatpush2.msra.mxu0 %v907
    %2171 = vmatprep.subr.mxu0 %v904
    %2172 = vmatpush2.msra.mxu0 %v903
    %2173 = vmatprep.subr.mxu0 %v900
    %2174 = vmatpush2.msra.mxu0 %v899
    %2175 = vmatprep.subr.mxu0 %v896
    %2176 = vmatpush2.msra.mxu0 %v895
    %2177 = vmatprep.subr.mxu0 %v892
    %2178 = vmatpush2.msra.mxu0 %v891
    %2179 = vmatprep.subr.mxu0 %v888
    %2180 = vmatpush2.msra.mxu0 %v887
    %2181 = vmatprep.subr.mxu0 %v884
    %2182 = vmatpush2.msra.mxu0 %v883
    %2183 = vmatprep.subr.mxu0 %v880
    %2184 = vmatpush2.msra.mxu0 %v879
    %2185 = vmatprep.subr.mxu0 %v876
    %2186 = vmatpush2.msra.mxu0 %v875
    %2187 = vmatprep.subr.mxu0 %v872
    %2188 = vmatpush2.msra.mxu0 %v871
    %2189 = vmatprep.subr.mxu0 %v868
    %2190 = vmatpush2.msra.mxu0 %v867
    %2191 = vmatprep.subr.mxu0 %v864
    %2192 = vmatpush2.msra.mxu0 %v863
    %2193 = vmatprep.subr.mxu0 %v860
    %2194 = vmatpush2.msra.mxu0 %v859
    %2195 = vmatprep.mubr.f32.mxu0 %v1117
    %2196 = vmatmul.mubr.f32.gmra.mxu0 %v1109
    %v2197 = vpop.f32.mrf.mxu0
    %v2198 = vadd.f32 %v2127, %v2197
    %v2199 = vpop.f32.mrf.mxu0
    %v2200 = vadd.f32 %v2129, %v2199
    %2201 = vdwg.mxu0
    %2202 = vmatprep.subr.mxu0 %v984
    %2203 = vmatpush1.msra.mxu0 %v983
    %2204 = vmatprep.subr.mxu0 %v980
    %2205 = vmatpush1.msra.mxu0 %v979
    %2206 = vmatprep.subr.mxu0 %v976
    %2207 = vmatpush1.msra.mxu0 %v975
    %2208 = vmatprep.subr.mxu0 %v972
    %2209 = vmatpush1.msra.mxu0 %v971
    %2210 = vmatprep.subr.mxu0 %v968
    %2211 = vmatpush1.msra.mxu0 %v967
    %2212 = vmatprep.subr.mxu0 %v964
    %2213 = vmatpush1.msra.mxu0 %v963
    %2214 = vmatprep.subr.mxu0 %v960
    %2215 = vmatpush1.msra.mxu0 %v959
    %2216 = vmatprep.subr.mxu0 %v956
    %2217 = vmatpush1.msra.mxu0 %v955
    %2218 = vmatprep.subr.mxu0 %v952
    %2219 = vmatpush1.msra.mxu0 %v951
    %2220 = vmatprep.subr.mxu0 %v948
    %2221 = vmatpush1.msra.mxu0 %v947
    %2222 = vmatprep.subr.mxu0 %v944
    %2223 = vmatpush1.msra.mxu0 %v943
    %2224 = vmatprep.subr.mxu0 %v940
    %2225 = vmatpush1.msra.mxu0 %v939
    %2226 = vmatprep.subr.mxu0 %v936
    %2227 = vmatpush1.msra.mxu0 %v935
    %2228 = vmatprep.subr.mxu0 %v932
    %2229 = vmatpush1.msra.mxu0 %v931
    %2230 = vmatprep.subr.mxu0 %v928
    %2231 = vmatpush1.msra.mxu0 %v927
    %2232 = vmatprep.subr.mxu0 %v924
    %2233 = vmatpush1.msra.mxu0 %v923
    %2234 = vmatprep.subr.mxu0 0.0
    %2235 = vmatpush2.msra.mxu0 0.0
    %2236 = vmatprep.subr.mxu0 0.0
    %2237 = vmatpush2.msra.mxu0 0.0
    %2238 = vmatprep.subr.mxu0 0.0
    %2239 = vmatpush2.msra.mxu0 0.0
    %2240 = vmatprep.subr.mxu0 0.0
    %2241 = vmatpush2.msra.mxu0 0.0
    %2242 = vmatprep.subr.mxu0 0.0
    %2243 = vmatpush2.msra.mxu0 0.0
    %2244 = vmatprep.subr.mxu0 0.0
    %2245 = vmatpush2.msra.mxu0 0.0
    %2246 = vmatprep.subr.mxu0 %v1024
    %2247 = vmatpush2.msra.mxu0 %v1023
    %2248 = vmatprep.subr.mxu0 %v1020
    %2249 = vmatpush2.msra.mxu0 %v1019
    %2250 = vmatprep.subr.mxu0 %v1016
    %2251 = vmatpush2.msra.mxu0 %v1015
    %2252 = vmatprep.subr.mxu0 %v1012
    %2253 = vmatpush2.msra.mxu0 %v1011
    %2254 = vmatprep.subr.mxu0 %v1008
    %2255 = vmatpush2.msra.mxu0 %v1007
    %2256 = vmatprep.subr.mxu0 %v1004
    %2257 = vmatpush2.msra.mxu0 %v1003
    %2258 = vmatprep.subr.mxu0 %v1000
    %2259 = vmatpush2.msra.mxu0 %v999
    %2260 = vmatprep.subr.mxu0 %v996
    %2261 = vmatpush2.msra.mxu0 %v995
    %2262 = vmatprep.subr.mxu0 %v992
    %2263 = vmatpush2.msra.mxu0 %v991
    %2264 = vmatprep.subr.mxu0 %v988
    %2265 = vmatpush2.msra.mxu0 %v987
    %2266 = vmatprep.mubr.f32.mxu0 %v1135
    %2267 = vmatmul.mubr.f32.gmra.mxu0 %v1116
    %v2268 = vpop.f32.mrf.mxu0
    %v2269 = vadd.f32 %v2198, %v2268
    %v2270 = vpop.f32.mrf.mxu0
    %v2271 = vadd.f32 %v2200, %v2270
    %2272 = vdwg.mxu0
    %v2273 = vmax.f32 %v1701, 0.0
    %v2274 = vmax.f32 %v1703, 0.0
    %v2275 = vmax.f32 %v2269, 0.0
    %v2276 = vmax.f32 %v2271, 0.0
    %v2277 = vld [vmem:[%s3] sm:$0xff]
    %v2278 = vld [vmem:[%s3 + $0x8] sm:$0xff]
    %v2279 = vld [vmem:[%s3 + $0x10] sm:$0xff]
    %v2280 = vld [vmem:[%s3 + $0x18] sm:$0xff]
    %v2281 = vld [vmem:[%s3 + $0x20] sm:$0xff]
    %v2282 = vld [vmem:[%s3 + $0x28] sm:$0xff]
    %v2283 = vld [vmem:[%s3 + $0x30] sm:$0xff]
    %v2284 = vld [vmem:[%s3 + $0x38] sm:$0xff]
    %v2285 = vld [vmem:[%s3 + $0x40] sm:$0xff]
    %v2286 = vld [vmem:[%s3 + $0x48] sm:$0xff]
    %v2287 = vld [vmem:[%s3 + $0x50] sm:$0xff]
    %v2288 = vld [vmem:[%s3 + $0x58] sm:$0xff]
    %v2289 = vld [vmem:[%s3 + $0x60] sm:$0xff]
    %v2290 = vld [vmem:[%s3 + $0x68] sm:$0xff]
    %v2291 = vld [vmem:[%s3 + $0x70] sm:$0xff]
    %v2292 = vld [vmem:[%s3 + $0x78] sm:$0xff]
    %v2293 = vld [vmem:[%s3 + $0x80] sm:$0xff]
    %v2294 = vld [vmem:[%s3 + $0x88] sm:$0xff]
    %v2295 = vld [vmem:[%s3 + $0x90] sm:$0xff]
    %v2296 = vld [vmem:[%s3 + $0x98] sm:$0xff]
    %v2297 = vld [vmem:[%s3 + $0xa0] sm:$0xff]
    %v2298 = vld [vmem:[%s3 + $0xa8] sm:$0xff]
    %v2299 = vld [vmem:[%s3 + $0xb0] sm:$0xff]
    %v2300 = vld [vmem:[%s3 + $0xb8] sm:$0xff]
    %v2301 = vld [vmem:[%s3 + $0xc0] sm:$0xff]
    %v2302 = vld [vmem:[%s3 + $0xc8] sm:$0xff]
    %v2303 = vld [vmem:[%s3 + $0xd0] sm:$0xff]
    %v2304 = vld [vmem:[%s3 + $0xd8] sm:$0xff]
    %v2305 = vld [vmem:[%s3 + $0xe0] sm:$0xff]
    %v2306 = vld [vmem:[%s3 + $0xe8] sm:$0xff]
    %v2307 = vld [vmem:[%s3 + $0xf0] sm:$0xff]
    %v2308 = vld [vmem:[%s3 + $0xf8] sm:$0xff]
    %v2309 = vld [vmem:[%s3 + $0x100] sm:$0xff]
    %v2310 = vld [vmem:[%s3 + $0x108] sm:$0xff]
    %v2311 = vld [vmem:[%s3 + $0x110] sm:$0xff]
    %v2312 = vld [vmem:[%s3 + $0x118] sm:$0xff]
    %v2313 = vld [vmem:[%s3 + $0x120] sm:$0xff]
    %v2314 = vld [vmem:[%s3 + $0x128] sm:$0xff]
    %v2315 = vld [vmem:[%s3 + $0x130] sm:$0xff]
    %v2316 = vld [vmem:[%s3 + $0x138] sm:$0xff]
    %v2317 = vld [vmem:[%s3 + $0x140] sm:$0xff]
    %v2318 = vld [vmem:[%s3 + $0x148] sm:$0xff]
    %v2319 = vld [vmem:[%s3 + $0x150] sm:$0xff]
    %v2320 = vld [vmem:[%s3 + $0x158] sm:$0xff]
    %v2321 = vld [vmem:[%s3 + $0x160] sm:$0xff]
    %v2322 = vld [vmem:[%s3 + $0x168] sm:$0xff]
    %v2323 = vld [vmem:[%s3 + $0x170] sm:$0xff]
    %v2324 = vld [vmem:[%s3 + $0x178] sm:$0xff]
    %v2325 = vld [vmem:[%s3 + $0x180] sm:$0xff]
    %v2326 = vld [vmem:[%s3 + $0x188] sm:$0xff]
    %v2327 = vld [vmem:[%s3 + $0x190] sm:$0xff]
    %v2328 = vld [vmem:[%s3 + $0x198] sm:$0xff]
    %v2329 = vld [vmem:[%s3 + $0x1a0] sm:$0xff]
    %v2330 = vld [vmem:[%s3 + $0x1a8] sm:$0xff]
    %v2331 = vld [vmem:[%s3 + $0x1b0] sm:$0xff]
    %v2332 = vld [vmem:[%s3 + $0x1b8] sm:$0xff]
    %v2333 = vld [vmem:[%s3 + $0x1c0] sm:$0xff]
    %v2334 = vld [vmem:[%s3 + $0x1c8] sm:$0xff]
    %v2335 = vld [vmem:[%s3 + $0x1d0] sm:$0xff]
    %v2336 = vld [vmem:[%s3 + $0x1d8] sm:$0xff]
    %v2337 = vld [vmem:[%s3 + $0x1e0] sm:$0xff]
    %v2338 = vld [vmem:[%s3 + $0x1e8] sm:$0xff]
    %v2339 = vld [vmem:[%s3 + $0x1f0] sm:$0xf]
    %v2340 = vld [vmem:[%s4] sm:$0x1]
    %v2342 = vlaneseq
    %v2343 = vshrl.u32 %v2342, 7
    %v2344 = vsub.s32 0, %v2343
    %v2345 = vrot.slane %v2340, %v2344
    %vm2347 = vcmask 949248
    %v2349 = vsel %vm2347, %v2276, 0
    %vm2351 = vcmask 1043456
    %v2353 = vsel %vm2351, %v2339, 0
    %2355 = vmatprep.subr.mxu0 0.0
    %2356 = vmatpush1.msra.mxu0 %v2292
    %2357 = vmatprep.subr.mxu0 0.0
    %2358 = vmatpush1.msra.mxu0 %v2291
    %2359 = vmatprep.subr.mxu0 0.0
    %2360 = vmatpush1.msra.mxu0 %v2290
    %2361 = vmatprep.subr.mxu0 0.0
    %2362 = vmatpush1.msra.mxu0 %v2289
    %2363 = vmatprep.subr.mxu0 0.0
    %2364 = vmatpush1.msra.mxu0 %v2288
    %2365 = vmatprep.subr.mxu0 0.0
    %2366 = vmatpush1.msra.mxu0 %v2287
    %2367 = vmatprep.subr.mxu0 0.0
    %2368 = vmatpush1.msra.mxu0 %v2286
    %2369 = vmatprep.subr.mxu0 0.0
    %2370 = vmatpush1.msra.mxu0 %v2285
    %2371 = vmatprep.subr.mxu0 0.0
    %2372 = vmatpush1.msra.mxu0 %v2284
    %2373 = vmatprep.subr.mxu0 0.0
    %2374 = vmatpush1.msra.mxu0 %v2283
    %2375 = vmatprep.subr.mxu0 0.0
    %2376 = vmatpush1.msra.mxu0 %v2282
    %2377 = vmatprep.subr.mxu0 0.0
    %2378 = vmatpush1.msra.mxu0 %v2281
    %2379 = vmatprep.subr.mxu0 0.0
    %2380 = vmatpush1.msra.mxu0 %v2280
    %2381 = vmatprep.subr.mxu0 0.0
    %2382 = vmatpush1.msra.mxu0 %v2279
    %2383 = vmatprep.subr.mxu0 0.0
    %2384 = vmatpush1.msra.mxu0 %v2278
    %2385 = vmatprep.subr.mxu0 0.0
    %2386 = vmatpush1.msra.mxu0 %v2277
    %2387 = vmatprep.subr.mxu0 0.0
    %2388 = vmatpush2.msra.mxu0 %v2308
    %2389 = vmatprep.subr.mxu0 0.0
    %2390 = vmatpush2.msra.mxu0 %v2307
    %2391 = vmatprep.subr.mxu0 0.0
    %2392 = vmatpush2.msra.mxu0 %v2306
    %2393 = vmatprep.subr.mxu0 0.0
    %2394 = vmatpush2.msra.mxu0 %v2305
    %2395 = vmatprep.subr.mxu0 0.0
    %2396 = vmatpush2.msra.mxu0 %v2304
    %2397 = vmatprep.subr.mxu0 0.0
    %2398 = vmatpush2.msra.mxu0 %v2303
    %2399 = vmatprep.subr.mxu0 0.0
    %2400 = vmatpush2.msra.mxu0 %v2302
    %2401 = vmatprep.subr.mxu0 0.0
    %2402 = vmatpush2.msra.mxu0 %v2301
    %2403 = vmatprep.subr.mxu0 0.0
    %2404 = vmatpush2.msra.mxu0 %v2300
    %2405 = vmatprep.subr.mxu0 0.0
    %2406 = vmatpush2.msra.mxu0 %v2299
    %2407 = vmatprep.subr.mxu0 0.0
    %2408 = vmatpush2.msra.mxu0 %v2298
    %2409 = vmatprep.subr.mxu0 0.0
    %2410 = vmatpush2.msra.mxu0 %v2297
    %2411 = vmatprep.subr.mxu0 0.0
    %2412 = vmatpush2.msra.mxu0 %v2296
    %2413 = vmatprep.subr.mxu0 0.0
    %2414 = vmatpush2.msra.mxu0 %v2295
    %2415 = vmatprep.subr.mxu0 0.0
    %2416 = vmatpush2.msra.mxu0 %v2294
    %2417 = vmatprep.subr.mxu0 0.0
    %2418 = vmatpush2.msra.mxu0 %v2293
    %2419 = vmatprep.mubr.f32.mxu0 %v2274
    %2420 = vmatmul.mubr.f32.gmra.mxu0 %v2273
    %v2421 = vpop.f32.mrf.mxu0
    %v2422 = vadd.f32 %v2345, %v2421
    %v2423 = vpop.f32.mrf.mxu0
    %2424 = vdwg.mxu0
    %2425 = vmatprep.subr.mxu0 0.0
    %2426 = vmatpush1.msra.mxu0 %v2324
    %2427 = vmatprep.subr.mxu0 0.0
    %2428 = vmatpush1.msra.mxu0 %v2323
    %2429 = vmatprep.subr.mxu0 0.0
    %2430 = vmatpush1.msra.mxu0 %v2322
    %2431 = vmatprep.subr.mxu0 0.0
    %2432 = vmatpush1.msra.mxu0 %v2321
    %2433 = vmatprep.subr.mxu0 0.0
    %2434 = vmatpush1.msra.mxu0 %v2320
    %2435 = vmatprep.subr.mxu0 0.0
    %2436 = vmatpush1.msra.mxu0 %v2319
    %2437 = vmatprep.subr.mxu0 0.0
    %2438 = vmatpush1.msra.mxu0 %v2318
    %2439 = vmatprep.subr.mxu0 0.0
    %2440 = vmatpush1.msra.mxu0 %v2317
    %2441 = vmatprep.subr.mxu0 0.0
    %2442 = vmatpush1.msra.mxu0 %v2316
    %2443 = vmatprep.subr.mxu0 0.0
    %2444 = vmatpush1.msra.mxu0 %v2315
    %2445 = vmatprep.subr.mxu0 0.0
    %2446 = vmatpush1.msra.mxu0 %v2314
    %2447 = vmatprep.subr.mxu0 0.0
    %2448 = vmatpush1.msra.mxu0 %v2313
    %2449 = vmatprep.subr.mxu0 0.0
    %2450 = vmatpush1.msra.mxu0 %v2312
    %2451 = vmatprep.subr.mxu0 0.0
    %2452 = vmatpush1.msra.mxu0 %v2311
    %2453 = vmatprep.subr.mxu0 0.0
    %2454 = vmatpush1.msra.mxu0 %v2310
    %2455 = vmatprep.subr.mxu0 0.0
    %2456 = vmatpush1.msra.mxu0 %v2309
    %2457 = vmatprep.subr.mxu0 0.0
    %2458 = vmatpush2.msra.mxu0 0.0
    %2459 = vmatprep.subr.mxu0 0.0
    %2460 = vmatpush2.msra.mxu0 %v2353
    %2461 = vmatprep.subr.mxu0 0.0
    %2462 = vmatpush2.msra.mxu0 %v2338
    %2463 = vmatprep.subr.mxu0 0.0
    %2464 = vmatpush2.msra.mxu0 %v2337
    %2465 = vmatprep.subr.mxu0 0.0
    %2466 = vmatpush2.msra.mxu0 %v2336
    %2467 = vmatprep.subr.mxu0 0.0
    %2468 = vmatpush2.msra.mxu0 %v2335
    %2469 = vmatprep.subr.mxu0 0.0
    %2470 = vmatpush2.msra.mxu0 %v2334
    %2471 = vmatprep.subr.mxu0 0.0
    %2472 = vmatpush2.msra.mxu0 %v2333
    %2473 = vmatprep.subr.mxu0 0.0
    %2474 = vmatpush2.msra.mxu0 %v2332
    %2475 = vmatprep.subr.mxu0 0.0
    %2476 = vmatpush2.msra.mxu0 %v2331
    %2477 = vmatprep.subr.mxu0 0.0
    %2478 = vmatpush2.msra.mxu0 %v2330
    %2479 = vmatprep.subr.mxu0 0.0
    %2480 = vmatpush2.msra.mxu0 %v2329
    %2481 = vmatprep.subr.mxu0 0.0
    %2482 = vmatpush2.msra.mxu0 %v2328
    %2483 = vmatprep.subr.mxu0 0.0
    %2484 = vmatpush2.msra.mxu0 %v2327
    %2485 = vmatprep.subr.mxu0 0.0
    %2486 = vmatpush2.msra.mxu0 %v2326
    %2487 = vmatprep.subr.mxu0 0.0
    %2488 = vmatpush2.msra.mxu0 %v2325
    %2489 = vmatprep.mubr.f32.mxu0 %v2349
    %2490 = vmatmul.mubr.f32.gmra.mxu0 %v2275
    %v2491 = vpop.f32.mrf.mxu0
    %v2492 = vadd.f32 %v2422, %v2491
    %v2493 = vpop.f32.mrf.mxu0
    %2494 = vdwg.mxu0
    %vm2495 = vcmask 74752
    %v2496 = vsel %vm2495, %v2492, -inf
    %2497 = vmax.xlane.f32.xlu0 %v2496
    %v2498 = vpop.xlane.xlu0 %2497
    %v2499 = vsub.f32 %v2492, %v2498
    %v2500 = vmul.f32 %v2499, 1.442695
    %v2501 = vpow.pop %v2500
    %v2502 = vsel %vm2495, %v2501, 0.0
    %2503 = vadd.xlane.f32.xlu0 %v2502
    %v2504 = vpop.xlane.xlu0 %2503
    %v2505 = vlog2.pop %v2504
    %v2506 = vmul.f32 %v2505, 0.6931472
    %v2507 = vadd.f32 %v2498, %v2506
    %v2508 = vsub.f32 %v2492, %v2507
    %2509 = vst.msk [vmem:[#allocation2] sm:$0x3] %vm2495, %v2508
    // Predicated region
    $region22: #{digit_forward.5} parent=1 // pred_check
      _
    $region23: #{digit_forward.5} parent=1 // pred_check_branch
      %2511 = sbr.rel (0) target = $region25
    $region24: #{digit_forward.5} parent=1 // pred_region
      %s2513 = ssub.s32 32, 32
      %2514 = vsyncadd [#allocation3], %s2513
      %s2516 = sshll.u32 [#allocation2], 4
      %s2517 = int_to_ptr.vmem [resolvable:$true] %s2516
      %2519 = dma.vmem_to_hbm [thread:$0]  %s2517, 32, %s5, [#allocation3]
    $region25: #{digit_forward.5} parent=1 // pred_fallthru
      _
    // Predicated region
    $region26: #{digit_forward.5} parent=1 // pred_check
      _
    $region27: #{digit_forward.5} parent=1 // pred_check_branch
      %2521 = sbr.rel (0) target = $region29
    $region28: #{digit_forward.5} parent=1 // pred_region
      %2522 = dma.done [#allocation3], 32
    $region29: #{digit_forward.5} parent=1 // pred_fallthru
      _
    %2523 = vsyncpa [#allocation3], 1

</llo_original>
